<compile_context>
chip_gen: v5e
topology: v5e:2x2
jax: 0.10.0
libtpu: 0.0.40
codegen_flags: <defaults>
</compile_context>

<pallas_src>
import functools

import jax
import jax.numpy as jnp
from jax import lax
from jax.experimental import pallas as pl
from jax.experimental.pallas import tpu as pltpu


# ---------------------------------------------------------------------------
# Fused Pallas kernel: bilinear 2x upsample + 4 x (3x3 'same' conv [+BN][+ReLU])
# ---------------------------------------------------------------------------
def _fused_block_kernel(x_ref, b_ref, mask_ref,
                        wup_ref, wc1_ref, wc2_ref,
                        sup_ref, bup_ref, c1b_ref, s1_ref, b1_ref, s2_ref, b2_ref,
                        o_ref,
                        buf_a, buf_b, col_ref,
                        *, C, Wp, M, BASE):
    """One batch image end-to-end; all intermediates stay in VMEM.

    Flat activation layout (buffers of shape (C, L)):
      position BASE + i*Wp + v  <->  pixel (i, v-1) for v in 1..W2;
      v == 0 and v == Wp-1 are the left/right zero-pad columns; everything outside
      [BASE, BASE+M) is a zero guard band (top/bottom pad rows plus slack so the 9
      shifted 3x3 tap windows stay in bounds).
    """
    mask = mask_ref[...]                        # (1, M) f32: 0 on pad cols, 1 on data

    # Guard / pad regions must read as exact zeros ('same' padding).
    buf_a[...] = jnp.zeros_like(buf_a)
    buf_b[...] = jnp.zeros_like(buf_b)

    # --- Bilinear 2x upsample (align_corners=True): one MXU matmul straight into the
    #     zero-padded flat layout (the operator's pad columns are exact zeros). ---
    up = jnp.dot(x_ref[0], b_ref[...], preferred_element_type=jnp.float32)   # (C, M)
    buf_a[:, BASE:BASE + M] = up.astype(jnp.bfloat16)

    def conv3x3(src_ref, w, scale, bias, relu):
        # im2col: stack the 9 shifted views along the contraction axis (VMEM -> VMEM),
        # then contract once on the MXU with f32 accumulation.
        for t in range(9):
            di, dj = t // 3, t % 3
            s = BASE + (di - 1) * Wp + (dj - 1)          # static, in-bounds by layout
            col_ref[t * C:(t + 1) * C, :] = src_ref[:, s:s + M]
        y = jnp.dot(w, col_ref[...], preferred_element_type=jnp.float32)     # (Cout, M)
        if scale is not None:
            y = y * scale
        y = y + bias
        if relu:
            y = jnp.maximum(y, 0.0)
        return y

    # up-block conv + folded BN + ReLU                       (buf_a -> buf_b)
    y = conv3x3(buf_a, wup_ref[...], sup_ref[...], bup_ref[...], relu=True)
    buf_b[:, BASE:BASE + M] = (y * mask).astype(jnp.bfloat16)

    # conv1, first application: conv bias only               (buf_b -> buf_a)
    y = conv3x3(buf_b, wc1_ref[...], None, c1b_ref[...], relu=False)
    buf_a[:, BASE:BASE + M] = (y * mask).astype(jnp.bfloat16)

    # conv1, second application + folded bn1 + ReLU          (buf_a -> buf_b)
    y = conv3x3(buf_a, wc1_ref[...], s1_ref[...], b1_ref[...], relu=True)
    buf_b[:, BASE:BASE + M] = (y * mask).astype(jnp.bfloat16)

    # conv2 + folded bn2 + ReLU -> kernel output             (buf_b -> o_ref)
    y = conv3x3(buf_b, wc2_ref[...], s2_ref[...], b2_ref[...], relu=True)
    o_ref[0] = y.astype(o_ref.dtype)


# ---------------------------------------------------------------------------
# Wrapper
# ---------------------------------------------------------------------------
def _interp_matrix(n_in, n_out):
    """(n_out, n_in) bilinear interpolation matrix, align_corners=True (f32)."""
    dst = jnp.arange(n_out, dtype=jnp.float32)
    src = dst * (n_in - 1) / (n_out - 1)
    lo = jnp.clip(jnp.floor(src), 0, n_in - 2).astype(jnp.int32)
    frac = src - lo.astype(jnp.float32)
    return (jax.nn.one_hot(lo, n_in, dtype=jnp.float32) * (1.0 - frac)[:, None]
            + jax.nn.one_hot(lo + 1, n_in, dtype=jnp.float32) * frac[:, None])


def _conv_w2d(w_oihw):
    """(O, I, 3, 3) -> (O, 9*I) bf16; contraction index = (kh*3 + kw)*I + c."""
    o, i = w_oihw.shape[0], w_oihw.shape[1]
    return jnp.transpose(w_oihw, (0, 2, 3, 1)).reshape(o, 9 * i).astype(jnp.bfloat16)


def upsample_block_fused(params, x_nchw):
    """Equivalent of upsample.forward (activation = ReLU), fused into one kernel."""
    N, C, H, W = x_nchw.shape
    OC = params["c2_w"].shape[0]
    H2, W2 = 2 * H, 2 * W
    Wp = W2 + 2                              # padded row width (1 pad col each side)
    M = H2 * Wp                              # flat activation block length per channel
    BASE = max(128, ((Wp + 1 + 127) // 128) * 128)   # 128-aligned guard before block
    L = BASE + M + BASE                      # guard band after the block as well

    # --- trace-time constants (shape-only; constant-folded by XLA) ---------------
    wh = _interp_matrix(H, H2)                                   # (H2, H)
    ww = _interp_matrix(W, W2)                                   # (W2, W)
    wwt_pad = jnp.zeros((W, Wp), jnp.float32).at[:, 1:W2 + 1].set(ww.T)
    # Upsample-and-pad operator: B[i*W + j, r*Wp + v] = Wh[r, i] * WwT_pad[j, v]
    bmat = jnp.einsum("ri,jv->ijrv", wh, wwt_pad).reshape(H * W, M).astype(jnp.bfloat16)
    v_idx = jnp.arange(M, dtype=jnp.int32) % Wp
    mask = ((v_idx != 0) & (v_idx != Wp - 1)).astype(jnp.float32).reshape(1, M)

    x_flat = x_nchw.astype(jnp.bfloat16).reshape(N, C, H * W)
    w_up = _conv_w2d(params["up_w"])
    w_c1 = _conv_w2d(params["c1_w"])
    w_c2 = _conv_w2d(params["c2_w"])

    def col2(v):
        return v.reshape(-1, 1).astype(jnp.float32)

    kernel = functools.partial(_fused_block_kernel, C=C, Wp=Wp, M=M, BASE=BASE)
    out = pl.pallas_call(
        kernel,
        out_shape=jax.ShapeDtypeStruct((N, OC, M), jnp.float32),
        grid=(N,),
        in_specs=[
            pl.BlockSpec((1, C, H * W), lambda n: (n, 0, 0)),     # x (flattened spatial)
            pl.BlockSpec((H * W, M), lambda n: (0, 0)),           # upsample-and-pad op
            pl.BlockSpec((1, M), lambda n: (0, 0)),               # pad-column mask
            pl.BlockSpec((C, 9 * C), lambda n: (0, 0)),           # up-conv weights
            pl.BlockSpec((C, 9 * C), lambda n: (0, 0)),           # conv1 weights
            pl.BlockSpec((OC, 9 * C), lambda n: (0, 0)),          # conv2 weights
            pl.BlockSpec((C, 1), lambda n: (0, 0)),               # up  scale (BN folded)
            pl.BlockSpec((C, 1), lambda n: (0, 0)),               # up  bias
            pl.BlockSpec((C, 1), lambda n: (0, 0)),               # conv1 bias
            pl.BlockSpec((C, 1), lambda n: (0, 0)),               # bn1 scale
            pl.BlockSpec((C, 1), lambda n: (0, 0)),               # bn1 bias
            pl.BlockSpec((OC, 1), lambda n: (0, 0)),              # bn2 scale
            pl.BlockSpec((OC, 1), lambda n: (0, 0)),              # bn2 bias
        ],
        out_specs=pl.BlockSpec((1, OC, M), lambda n: (n, 0, 0)),
        scratch_shapes=[
            pltpu.VMEM((C, L), jnp.bfloat16),                     # ping activation buf
            pltpu.VMEM((C, L), jnp.bfloat16),                     # pong activation buf
            pltpu.VMEM((9 * C, M), jnp.bfloat16),                 # im2col operand
        ],
        compiler_params=pltpu.CompilerParams(dimension_semantics=("parallel",)),
    )(x_flat, bmat, mask, w_up, w_c1, w_c2,
      col2(params["up_scale"]), col2(params["up_bias"]), col2(params["c1_b"]),
      col2(params["bn1_scale"]), col2(params["bn1_bias"]),
      col2(params["bn2_scale"]), col2(params["bn2_bias"]))

    # Only the final layer needs the pad-column slice back to (N, OC, H2, W2).
    return out.reshape(N, OC, H2, Wp)[:, :, :, 1:W2 + 1]


upsample_forward = jax.jit(upsample_block_fused)


# ---------------------------------------------------------------------------
# Deterministic synthetic parameters (eval-mode BN folded into the conv epilogue)
# ---------------------------------------------------------------------------
def _bn_fold(gamma, beta, mean, var, conv_bias, eps=1e-5):
    scale = gamma / jnp.sqrt(var + eps)
    bias = beta - mean * scale + conv_bias * scale
    return scale, bias


def init_params(key, in_c, out_c):
    ks = jax.random.split(key, 6)

    def conv(k, cin, cout):
        kw, kb = jax.random.split(k)
        w = jax.random.normal(kw, (cout, cin, 3, 3), jnp.float32) * (9 * cin) ** -0.5
        b = 0.05 * jax.random.normal(kb, (cout,), jnp.float32)
        return w, b

    def bn(k, c):
        k1, k2, k3, k4 = jax.random.split(k, 4)
        gamma = 1.0 + 0.1 * jax.random.normal(k1, (c,), jnp.float32)
        beta = 0.1 * jax.random.normal(k2, (c,), jnp.float32)
        mean = 0.1 * jax.random.normal(k3, (c,), jnp.float32)
        var = 0.5 + jax.random.uniform(k4, (c,), jnp.float32)
        return gamma, beta, mean, var

    up_w, up_b = conv(ks[0], in_c, in_c)
    up_scale, up_bias = _bn_fold(*bn(ks[1], in_c), up_b)
    c1_w, c1_b = conv(ks[2], in_c, in_c)
    bn1_scale, bn1_bias = _bn_fold(*bn(ks[3], in_c), c1_b)
    c2_w, c2_b = conv(ks[4], in_c, out_c)
    bn2_scale, bn2_bias = _bn_fold(*bn(ks[5], out_c), c2_b)

    return {
        "up_w": up_w, "up_scale": up_scale, "up_bias": up_bias,
        "c1_w": c1_w, "c1_b": c1_b, "bn1_scale": bn1_scale, "bn1_bias": bn1_bias,
        "c2_w": c2_w, "bn2_scale": bn2_scale, "bn2_bias": bn2_bias,
    }


# ---------------------------------------------------------------------------
# Pure-JAX f32 reference (same math: folded BN, conv1 applied twice, ReLU)
# ---------------------------------------------------------------------------
def reference_forward(params, x):
    N, C, H, W = x.shape
    wh = _interp_matrix(H, 2 * H)
    ww = _interp_matrix(W, 2 * W)
    up = jnp.einsum("rh,nchw,vw->ncrv", wh, x.astype(jnp.float32), ww)

    def conv(z, w):
        return lax.conv_general_dilated(z, w, (1, 1), "SAME",
                                        dimension_numbers=("NCHW", "OIHW", "NCHW"))

    def affine(z, s, b):
        return z * s[None, :, None, None] + b[None, :, None, None]

    y = jax.nn.relu(affine(conv(up, params["up_w"]), params["up_scale"], params["up_bias"]))
    y = conv(y, params["c1_w"]) + params["c1_b"][None, :, None, None]
    y = jax.nn.relu(affine(conv(y, params["c1_w"]), params["bn1_scale"], params["bn1_bias"]))
    y = jax.nn.relu(affine(conv(y, params["c2_w"]), params["bn2_scale"], params["bn2_bias"]))
    return y


# ---------------------------------------------------------------------------
if __name__ == "__main__":
    key = jax.random.PRNGKey(0)
    k_param, k_in = jax.random.split(key)

    in_c, out_c = 4, 8
    params = init_params(k_param, in_c, out_c)

    # Small NCHW input (batch=2, channels=in_c, spatial=16x16).
    x = jax.random.normal(k_in, (2, in_c, 16, 16), jnp.float32)

    out = jax.block_until_ready(upsample_forward(params, x))
    assert out.shape == (2, out_c, 32, 32), out.shape
    assert bool(jnp.all(jnp.isfinite(out)))

    # Tolerance-check the fused bf16 kernel against the f32 XLA reference.
    ref = jax.block_until_ready(jax.jit(reference_forward)(params, x))
    err = float(jnp.max(jnp.abs(out - ref)) / (jnp.max(jnp.abs(ref)) + 1e-6))
    assert err < 0.1, f"fused kernel diverges from f32 reference: rel-max err {err:.4f}"
    print("KERNEL_OK")
</pallas_src>

<mosaic_0001>
module attributes {stable_mosaic.version = 11 : i64} {
  func.func @_fused_block_kernel(%arg0: i32, %arg1: memref<1x4x256xbf16, #tpu.memory_space<vmem>>, %arg2: memref<256x1088xbf16, #tpu.memory_space<vmem>>, %arg3: memref<1x1088xf32, #tpu.memory_space<vmem>>, %arg4: memref<4x36xbf16, #tpu.memory_space<vmem>>, %arg5: memref<4x36xbf16, #tpu.memory_space<vmem>>, %arg6: memref<8x36xbf16, #tpu.memory_space<vmem>>, %arg7: memref<4x1xf32, #tpu.memory_space<vmem>>, %arg8: memref<4x1xf32, #tpu.memory_space<vmem>>, %arg9: memref<4x1xf32, #tpu.memory_space<vmem>>, %arg10: memref<4x1xf32, #tpu.memory_space<vmem>>, %arg11: memref<4x1xf32, #tpu.memory_space<vmem>>, %arg12: memref<8x1xf32, #tpu.memory_space<vmem>>, %arg13: memref<8x1xf32, #tpu.memory_space<vmem>>, %arg14: memref<1x8x1088xf32, #tpu.memory_space<vmem>>, %arg15: memref<4x1344xbf16, #tpu.memory_space<vmem>>, %arg16: memref<4x1344xbf16, #tpu.memory_space<vmem>>, %arg17: memref<36x1088xbf16, #tpu.memory_space<vmem>>) attributes {dimension_semantics = [#tpu.dimension_semantics<parallel>], iteration_bounds = array<i64: 2>, scalar_prefetch = 0 : i64, scratch_operands = 3 : i64, tpu.core_type = #tpu.core_type<tc>, window_params = [{transform_indices = @transform_0, window_bounds = array<i64: 1, 4, 256>}, {pipeline_mode = #tpu.pipeline_mode<synchronous>, transform_indices = @transform_1, window_bounds = array<i64: 256, 1088>}, {pipeline_mode = #tpu.pipeline_mode<synchronous>, transform_indices = @transform_2, window_bounds = array<i64: 1, 1088>}, {pipeline_mode = #tpu.pipeline_mode<synchronous>, transform_indices = @transform_3, window_bounds = array<i64: 4, 36>}, {pipeline_mode = #tpu.pipeline_mode<synchronous>, transform_indices = @transform_4, window_bounds = array<i64: 4, 36>}, {pipeline_mode = #tpu.pipeline_mode<synchronous>, transform_indices = @transform_5, window_bounds = array<i64: 8, 36>}, {pipeline_mode = #tpu.pipeline_mode<synchronous>, transform_indices = @transform_6, window_bounds = array<i64: 4, 1>}, {pipeline_mode = #tpu.pipeline_mode<synchronous>, transform_indices = @transform_7, window_bounds = array<i64: 4, 1>}, {pipeline_mode = #tpu.pipeline_mode<synchronous>, transform_indices = @transform_8, window_bounds = array<i64: 4, 1>}, {pipeline_mode = #tpu.pipeline_mode<synchronous>, transform_indices = @transform_9, window_bounds = array<i64: 4, 1>}, {pipeline_mode = #tpu.pipeline_mode<synchronous>, transform_indices = @transform_10, window_bounds = array<i64: 4, 1>}, {pipeline_mode = #tpu.pipeline_mode<synchronous>, transform_indices = @transform_11, window_bounds = array<i64: 8, 1>}, {pipeline_mode = #tpu.pipeline_mode<synchronous>, transform_indices = @transform_12, window_bounds = array<i64: 8, 1>}, {transform_indices = @transform_13, window_bounds = array<i64: 1, 8, 1088>}]} {
    %c0 = arith.constant 0 : index
    %c0_0 = arith.constant 0 : index
    %0 = vector.load %arg3[%c0, %c0_0] : memref<1x1088xf32, #tpu.memory_space<vmem>>, vector<1x1088xf32>
    %cst = arith.constant 0.000000e+00 : bf16
    %1 = vector.broadcast %cst : bf16 to vector<4x1344xbf16>
    %c0_1 = arith.constant 0 : index
    %c0_2 = arith.constant 0 : index
    %2 = vector.load %arg15[%c0_1, %c0_2] : memref<4x1344xbf16, #tpu.memory_space<vmem>>, vector<4x1344xbf16>
    tpu.vector_store %arg15[%c0_1, %c0_2], %1 {strides = array<i32>} : memref<4x1344xbf16, #tpu.memory_space<vmem>>, vector<4x1344xbf16>,
    %cst_3 = arith.constant 0.000000e+00 : bf16
    %3 = vector.broadcast %cst_3 : bf16 to vector<4x1344xbf16>
    %c0_4 = arith.constant 0 : index
    %c0_5 = arith.constant 0 : index
    %4 = vector.load %arg16[%c0_4, %c0_5] : memref<4x1344xbf16, #tpu.memory_space<vmem>>, vector<4x1344xbf16>
    tpu.vector_store %arg16[%c0_4, %c0_5], %3 {strides = array<i32>} : memref<4x1344xbf16, #tpu.memory_space<vmem>>, vector<4x1344xbf16>,
    %c0_6 = arith.constant 0 : index
    %c0_7 = arith.constant 0 : index
    %c0_8 = arith.constant 0 : index
    %5 = vector.load %arg1[%c0_6, %c0_7, %c0_8] : memref<1x4x256xbf16, #tpu.memory_space<vmem>>, vector<1x4x256xbf16>
    %6 = vector.shape_cast %5 : vector<1x4x256xbf16> to vector<4x256xbf16>
    %c0_9 = arith.constant 0 : index
    %c0_10 = arith.constant 0 : index
    %7 = vector.load %arg2[%c0_9, %c0_10] : memref<256x1088xbf16, #tpu.memory_space<vmem>>, vector<256x1088xbf16>
    %cst_11 = arith.constant dense<0.000000e+00> : vector<4x1088xf32>
    %8 = tpu.matmul %6, %7, %cst_11 {dimension_numbers = #tpu.dot_dimension_numbers<[1], [0], [0], [1], [0, 0, 1, 1], [], []>} : vector<4x256xbf16>, vector<256x1088xbf16>, vector<4x1088xf32> -> vector<4x1088xf32>
    %9 = arith.truncf %8 : vector<4x1088xf32> to vector<4x1088xbf16>
    %c0_12 = arith.constant 0 : index
    %c128 = arith.constant 128 : index
    %10 = vector.load %arg15[%c0_12, %c128] : memref<4x1344xbf16, #tpu.memory_space<vmem>>, vector<4x1088xbf16>
    tpu.vector_store %arg15[%c0_12, %c128], %9 {strides = array<i32>} : memref<4x1344xbf16, #tpu.memory_space<vmem>>, vector<4x1088xbf16>,
    %c0_13 = arith.constant 0 : index
    %c0_14 = arith.constant 0 : index
    %11 = vector.load %arg4[%c0_13, %c0_14] : memref<4x36xbf16, #tpu.memory_space<vmem>>, vector<4x36xbf16>
    %c0_15 = arith.constant 0 : index
    %c0_16 = arith.constant 0 : index
    %12 = vector.load %arg7[%c0_15, %c0_16] : memref<4x1xf32, #tpu.memory_space<vmem>>, vector<4x1xf32>
    %c0_17 = arith.constant 0 : index
    %c0_18 = arith.constant 0 : index
    %13 = vector.load %arg8[%c0_17, %c0_18] : memref<4x1xf32, #tpu.memory_space<vmem>>, vector<4x1xf32>
    %c0_19 = arith.constant 0 : index
    %c93 = arith.constant 93 : index
    %14 = vector.load %arg15[%c0_19, %c93] : memref<4x1344xbf16, #tpu.memory_space<vmem>>, vector<4x1088xbf16>
    %c0_20 = arith.constant 0 : index
    %c0_21 = arith.constant 0 : index
    %15 = vector.load %arg17[%c0_20, %c0_21] : memref<36x1088xbf16, #tpu.memory_space<vmem>>, vector<4x1088xbf16>
    tpu.vector_store %arg17[%c0_20, %c0_21], %14 {strides = array<i32>} : memref<36x1088xbf16, #tpu.memory_space<vmem>>, vector<4x1088xbf16>,
    %c0_22 = arith.constant 0 : index
    %c94 = arith.constant 94 : index
    %16 = vector.load %arg15[%c0_22, %c94] : memref<4x1344xbf16, #tpu.memory_space<vmem>>, vector<4x1088xbf16>
    %c4 = arith.constant 4 : index
    %c0_23 = arith.constant 0 : index
    %17 = vector.load %arg17[%c4, %c0_23] : memref<36x1088xbf16, #tpu.memory_space<vmem>>, vector<4x1088xbf16>
    tpu.vector_store %arg17[%c4, %c0_23], %16 {strides = array<i32>} : memref<36x1088xbf16, #tpu.memory_space<vmem>>, vector<4x1088xbf16>,
    %c0_24 = arith.constant 0 : index
    %c95 = arith.constant 95 : index
    %18 = vector.load %arg15[%c0_24, %c95] : memref<4x1344xbf16, #tpu.memory_space<vmem>>, vector<4x1088xbf16>
    %c8 = arith.constant 8 : index
    %c0_25 = arith.constant 0 : index
    %19 = vector.load %arg17[%c8, %c0_25] : memref<36x1088xbf16, #tpu.memory_space<vmem>>, vector<4x1088xbf16>
    tpu.vector_store %arg17[%c8, %c0_25], %18 {strides = array<i32>} : memref<36x1088xbf16, #tpu.memory_space<vmem>>, vector<4x1088xbf16>,
    %c0_26 = arith.constant 0 : index
    %c127 = arith.constant 127 : index
    %20 = vector.load %arg15[%c0_26, %c127] : memref<4x1344xbf16, #tpu.memory_space<vmem>>, vector<4x1088xbf16>
    %c12 = arith.constant 12 : index
    %c0_27 = arith.constant 0 : index
    %21 = vector.load %arg17[%c12, %c0_27] : memref<36x1088xbf16, #tpu.memory_space<vmem>>, vector<4x1088xbf16>
    tpu.vector_store %arg17[%c12, %c0_27], %20 {strides = array<i32>} : memref<36x1088xbf16, #tpu.memory_space<vmem>>, vector<4x1088xbf16>,
    %c0_28 = arith.constant 0 : index
    %c128_29 = arith.constant 128 : index
    %22 = vector.load %arg15[%c0_28, %c128_29] : memref<4x1344xbf16, #tpu.memory_space<vmem>>, vector<4x1088xbf16>
    %c16 = arith.constant 16 : index
    %c0_30 = arith.constant 0 : index
    %23 = vector.load %arg17[%c16, %c0_30] : memref<36x1088xbf16, #tpu.memory_space<vmem>>, vector<4x1088xbf16>
    tpu.vector_store %arg17[%c16, %c0_30], %22 {strides = array<i32>} : memref<36x1088xbf16, #tpu.memory_space<vmem>>, vector<4x1088xbf16>,
    %c0_31 = arith.constant 0 : index
    %c129 = arith.constant 129 : index
    %24 = vector.load %arg15[%c0_31, %c129] : memref<4x1344xbf16, #tpu.memory_space<vmem>>, vector<4x1088xbf16>
    %c20 = arith.constant 20 : index
    %c0_32 = arith.constant 0 : index
    %25 = vector.load %arg17[%c20, %c0_32] : memref<36x1088xbf16, #tpu.memory_space<vmem>>, vector<4x1088xbf16>
    tpu.vector_store %arg17[%c20, %c0_32], %24 {strides = array<i32>} : memref<36x1088xbf16, #tpu.memory_space<vmem>>, vector<4x1088xbf16>,
    %c0_33 = arith.constant 0 : index
    %c161 = arith.constant 161 : index
    %26 = vector.load %arg15[%c0_33, %c161] : memref<4x1344xbf16, #tpu.memory_space<vmem>>, vector<4x1088xbf16>
    %c24 = arith.constant 24 : index
    %c0_34 = arith.constant 0 : index
    %27 = vector.load %arg17[%c24, %c0_34] : memref<36x1088xbf16, #tpu.memory_space<vmem>>, vector<4x1088xbf16>
    tpu.vector_store %arg17[%c24, %c0_34], %26 {strides = array<i32>} : memref<36x1088xbf16, #tpu.memory_space<vmem>>, vector<4x1088xbf16>,
    %c0_35 = arith.constant 0 : index
    %c162 = arith.constant 162 : index
    %28 = vector.load %arg15[%c0_35, %c162] : memref<4x1344xbf16, #tpu.memory_space<vmem>>, vector<4x1088xbf16>
    %c28 = arith.constant 28 : index
    %c0_36 = arith.constant 0 : index
    %29 = vector.load %arg17[%c28, %c0_36] : memref<36x1088xbf16, #tpu.memory_space<vmem>>, vector<4x1088xbf16>
    tpu.vector_store %arg17[%c28, %c0_36], %28 {strides = array<i32>} : memref<36x1088xbf16, #tpu.memory_space<vmem>>, vector<4x1088xbf16>,
    %c0_37 = arith.constant 0 : index
    %c163 = arith.constant 163 : index
    %30 = vector.load %arg15[%c0_37, %c163] : memref<4x1344xbf16, #tpu.memory_space<vmem>>, vector<4x1088xbf16>
    %c32 = arith.constant 32 : index
    %c0_38 = arith.constant 0 : index
    %31 = vector.load %arg17[%c32, %c0_38] : memref<36x1088xbf16, #tpu.memory_space<vmem>>, vector<4x1088xbf16>
    tpu.vector_store %arg17[%c32, %c0_38], %30 {strides = array<i32>} : memref<36x1088xbf16, #tpu.memory_space<vmem>>, vector<4x1088xbf16>,
    %c0_39 = arith.constant 0 : index
    %c0_40 = arith.constant 0 : index
    %32 = vector.load %arg17[%c0_39, %c0_40] : memref<36x1088xbf16, #tpu.memory_space<vmem>>, vector<36x1088xbf16>
    %cst_41 = arith.constant dense<0.000000e+00> : vector<4x1088xf32>
    %33 = tpu.matmul %11, %32, %cst_41 {dimension_numbers = #tpu.dot_dimension_numbers<[1], [0], [0], [1], [0, 0, 1, 1], [], []>} : vector<4x36xbf16>, vector<36x1088xbf16>, vector<4x1088xf32> -> vector<4x1088xf32>
    %34 = vector.broadcast %12 : vector<4x1xf32> to vector<4x1088xf32>
    %35 = arith.mulf %33, %34 : vector<4x1088xf32>
    %36 = vector.broadcast %13 : vector<4x1xf32> to vector<4x1088xf32>
    %37 = arith.addf %35, %36 : vector<4x1088xf32>
    %cst_42 = arith.constant 0.000000e+00 : f32
    %38 = vector.broadcast %cst_42 : f32 to vector<4x1088xf32>
    %39 = arith.maximumf %37, %38 : vector<4x1088xf32>
    %40 = vector.broadcast %0 : vector<1x1088xf32> to vector<4x1088xf32>
    %41 = arith.mulf %39, %40 : vector<4x1088xf32>
    %42 = arith.truncf %41 : vector<4x1088xf32> to vector<4x1088xbf16>
    %c0_43 = arith.constant 0 : index
    %c128_44 = arith.constant 128 : index
    %43 = vector.load %arg16[%c0_43, %c128_44] : memref<4x1344xbf16, #tpu.memory_space<vmem>>, vector<4x1088xbf16>
    tpu.vector_store %arg16[%c0_43, %c128_44], %42 {strides = array<i32>} : memref<4x1344xbf16, #tpu.memory_space<vmem>>, vector<4x1088xbf16>,
    %c0_45 = arith.constant 0 : index
    %c0_46 = arith.constant 0 : index
    %44 = vector.load %arg5[%c0_45, %c0_46] : memref<4x36xbf16, #tpu.memory_space<vmem>>, vector<4x36xbf16>
    %c0_47 = arith.constant 0 : index
    %c0_48 = arith.constant 0 : index
    %45 = vector.load %arg9[%c0_47, %c0_48] : memref<4x1xf32, #tpu.memory_space<vmem>>, vector<4x1xf32>
    %c0_49 = arith.constant 0 : index
    %c93_50 = arith.constant 93 : index
    %46 = vector.load %arg16[%c0_49, %c93_50] : memref<4x1344xbf16, #tpu.memory_space<vmem>>, vector<4x1088xbf16>
    %c0_51 = arith.constant 0 : index
    %c0_52 = arith.constant 0 : index
    %47 = vector.load %arg17[%c0_51, %c0_52] : memref<36x1088xbf16, #tpu.memory_space<vmem>>, vector<4x1088xbf16>
    tpu.vector_store %arg17[%c0_51, %c0_52], %46 {strides = array<i32>} : memref<36x1088xbf16, #tpu.memory_space<vmem>>, vector<4x1088xbf16>,
    %c0_53 = arith.constant 0 : index
    %c94_54 = arith.constant 94 : index
    %48 = vector.load %arg16[%c0_53, %c94_54] : memref<4x1344xbf16, #tpu.memory_space<vmem>>, vector<4x1088xbf16>
    %c4_55 = arith.constant 4 : index
    %c0_56 = arith.constant 0 : index
    %49 = vector.load %arg17[%c4_55, %c0_56] : memref<36x1088xbf16, #tpu.memory_space<vmem>>, vector<4x1088xbf16>
    tpu.vector_store %arg17[%c4_55, %c0_56], %48 {strides = array<i32>} : memref<36x1088xbf16, #tpu.memory_space<vmem>>, vector<4x1088xbf16>,
    %c0_57 = arith.constant 0 : index
    %c95_58 = arith.constant 95 : index
    %50 = vector.load %arg16[%c0_57, %c95_58] : memref<4x1344xbf16, #tpu.memory_space<vmem>>, vector<4x1088xbf16>
    %c8_59 = arith.constant 8 : index
    %c0_60 = arith.constant 0 : index
    %51 = vector.load %arg17[%c8_59, %c0_60] : memref<36x1088xbf16, #tpu.memory_space<vmem>>, vector<4x1088xbf16>
    tpu.vector_store %arg17[%c8_59, %c0_60], %50 {strides = array<i32>} : memref<36x1088xbf16, #tpu.memory_space<vmem>>, vector<4x1088xbf16>,
    %c0_61 = arith.constant 0 : index
    %c127_62 = arith.constant 127 : index
    %52 = vector.load %arg16[%c0_61, %c127_62] : memref<4x1344xbf16, #tpu.memory_space<vmem>>, vector<4x1088xbf16>
    %c12_63 = arith.constant 12 : index
    %c0_64 = arith.constant 0 : index
    %53 = vector.load %arg17[%c12_63, %c0_64] : memref<36x1088xbf16, #tpu.memory_space<vmem>>, vector<4x1088xbf16>
    tpu.vector_store %arg17[%c12_63, %c0_64], %52 {strides = array<i32>} : memref<36x1088xbf16, #tpu.memory_space<vmem>>, vector<4x1088xbf16>,
    %c0_65 = arith.constant 0 : index
    %c128_66 = arith.constant 128 : index
    %54 = vector.load %arg16[%c0_65, %c128_66] : memref<4x1344xbf16, #tpu.memory_space<vmem>>, vector<4x1088xbf16>
    %c16_67 = arith.constant 16 : index
    %c0_68 = arith.constant 0 : index
    %55 = vector.load %arg17[%c16_67, %c0_68] : memref<36x1088xbf16, #tpu.memory_space<vmem>>, vector<4x1088xbf16>
    tpu.vector_store %arg17[%c16_67, %c0_68], %54 {strides = array<i32>} : memref<36x1088xbf16, #tpu.memory_space<vmem>>, vector<4x1088xbf16>,
    %c0_69 = arith.constant 0 : index
    %c129_70 = arith.constant 129 : index
    %56 = vector.load %arg16[%c0_69, %c129_70] : memref<4x1344xbf16, #tpu.memory_space<vmem>>, vector<4x1088xbf16>
    %c20_71 = arith.constant 20 : index
    %c0_72 = arith.constant 0 : index
    %57 = vector.load %arg17[%c20_71, %c0_72] : memref<36x1088xbf16, #tpu.memory_space<vmem>>, vector<4x1088xbf16>
    tpu.vector_store %arg17[%c20_71, %c0_72], %56 {strides = array<i32>} : memref<36x1088xbf16, #tpu.memory_space<vmem>>, vector<4x1088xbf16>,
    %c0_73 = arith.constant 0 : index
    %c161_74 = arith.constant 161 : index
    %58 = vector.load %arg16[%c0_73, %c161_74] : memref<4x1344xbf16, #tpu.memory_space<vmem>>, vector<4x1088xbf16>
    %c24_75 = arith.constant 24 : index
    %c0_76 = arith.constant 0 : index
    %59 = vector.load %arg17[%c24_75, %c0_76] : memref<36x1088xbf16, #tpu.memory_space<vmem>>, vector<4x1088xbf16>
    tpu.vector_store %arg17[%c24_75, %c0_76], %58 {strides = array<i32>} : memref<36x1088xbf16, #tpu.memory_space<vmem>>, vector<4x1088xbf16>,
    %c0_77 = arith.constant 0 : index
    %c162_78 = arith.constant 162 : index
    %60 = vector.load %arg16[%c0_77, %c162_78] : memref<4x1344xbf16, #tpu.memory_space<vmem>>, vector<4x1088xbf16>
    %c28_79 = arith.constant 28 : index
    %c0_80 = arith.constant 0 : index
    %61 = vector.load %arg17[%c28_79, %c0_80] : memref<36x1088xbf16, #tpu.memory_space<vmem>>, vector<4x1088xbf16>
    tpu.vector_store %arg17[%c28_79, %c0_80], %60 {strides = array<i32>} : memref<36x1088xbf16, #tpu.memory_space<vmem>>, vector<4x1088xbf16>,
    %c0_81 = arith.constant 0 : index
    %c163_82 = arith.constant 163 : index
    %62 = vector.load %arg16[%c0_81, %c163_82] : memref<4x1344xbf16, #tpu.memory_space<vmem>>, vector<4x1088xbf16>
    %c32_83 = arith.constant 32 : index
    %c0_84 = arith.constant 0 : index
    %63 = vector.load %arg17[%c32_83, %c0_84] : memref<36x1088xbf16, #tpu.memory_space<vmem>>, vector<4x1088xbf16>
    tpu.vector_store %arg17[%c32_83, %c0_84], %62 {strides = array<i32>} : memref<36x1088xbf16, #tpu.memory_space<vmem>>, vector<4x1088xbf16>,
    %c0_85 = arith.constant 0 : index
    %c0_86 = arith.constant 0 : index
    %64 = vector.load %arg17[%c0_85, %c0_86] : memref<36x1088xbf16, #tpu.memory_space<vmem>>, vector<36x1088xbf16>
    %cst_87 = arith.constant dense<0.000000e+00> : vector<4x1088xf32>
    %65 = tpu.matmul %44, %64, %cst_87 {dimension_numbers = #tpu.dot_dimension_numbers<[1], [0], [0], [1], [0, 0, 1, 1], [], []>} : vector<4x36xbf16>, vector<36x1088xbf16>, vector<4x1088xf32> -> vector<4x1088xf32>
    %66 = vector.broadcast %45 : vector<4x1xf32> to vector<4x1088xf32>
    %67 = arith.addf %65, %66 : vector<4x1088xf32>
    %68 = vector.broadcast %0 : vector<1x1088xf32> to vector<4x1088xf32>
    %69 = arith.mulf %67, %68 : vector<4x1088xf32>
    %70 = arith.truncf %69 : vector<4x1088xf32> to vector<4x1088xbf16>
    %c0_88 = arith.constant 0 : index
    %c128_89 = arith.constant 128 : index
    %71 = vector.load %arg15[%c0_88, %c128_89] : memref<4x1344xbf16, #tpu.memory_space<vmem>>, vector<4x1088xbf16>
    tpu.vector_store %arg15[%c0_88, %c128_89], %70 {strides = array<i32>} : memref<4x1344xbf16, #tpu.memory_space<vmem>>, vector<4x1088xbf16>,
    %c0_90 = arith.constant 0 : index
    %c0_91 = arith.constant 0 : index
    %72 = vector.load %arg5[%c0_90, %c0_91] : memref<4x36xbf16, #tpu.memory_space<vmem>>, vector<4x36xbf16>
    %c0_92 = arith.constant 0 : index
    %c0_93 = arith.constant 0 : index
    %73 = vector.load %arg10[%c0_92, %c0_93] : memref<4x1xf32, #tpu.memory_space<vmem>>, vector<4x1xf32>
    %c0_94 = arith.constant 0 : index
    %c0_95 = arith.constant 0 : index
    %74 = vector.load %arg11[%c0_94, %c0_95] : memref<4x1xf32, #tpu.memory_space<vmem>>, vector<4x1xf32>
    %c0_96 = arith.constant 0 : index
    %c93_97 = arith.constant 93 : index
    %75 = vector.load %arg15[%c0_96, %c93_97] : memref<4x1344xbf16, #tpu.memory_space<vmem>>, vector<4x1088xbf16>
    %c0_98 = arith.constant 0 : index
    %c0_99 = arith.constant 0 : index
    %76 = vector.load %arg17[%c0_98, %c0_99] : memref<36x1088xbf16, #tpu.memory_space<vmem>>, vector<4x1088xbf16>
    tpu.vector_store %arg17[%c0_98, %c0_99], %75 {strides = array<i32>} : memref<36x1088xbf16, #tpu.memory_space<vmem>>, vector<4x1088xbf16>,
    %c0_100 = arith.constant 0 : index
    %c94_101 = arith.constant 94 : index
    %77 = vector.load %arg15[%c0_100, %c94_101] : memref<4x1344xbf16, #tpu.memory_space<vmem>>, vector<4x1088xbf16>
    %c4_102 = arith.constant 4 : index
    %c0_103 = arith.constant 0 : index
    %78 = vector.load %arg17[%c4_102, %c0_103] : memref<36x1088xbf16, #tpu.memory_space<vmem>>, vector<4x1088xbf16>
    tpu.vector_store %arg17[%c4_102, %c0_103], %77 {strides = array<i32>} : memref<36x1088xbf16, #tpu.memory_space<vmem>>, vector<4x1088xbf16>,
    %c0_104 = arith.constant 0 : index
    %c95_105 = arith.constant 95 : index
    %79 = vector.load %arg15[%c0_104, %c95_105] : memref<4x1344xbf16, #tpu.memory_space<vmem>>, vector<4x1088xbf16>
    %c8_106 = arith.constant 8 : index
    %c0_107 = arith.constant 0 : index
    %80 = vector.load %arg17[%c8_106, %c0_107] : memref<36x1088xbf16, #tpu.memory_space<vmem>>, vector<4x1088xbf16>
    tpu.vector_store %arg17[%c8_106, %c0_107], %79 {strides = array<i32>} : memref<36x1088xbf16, #tpu.memory_space<vmem>>, vector<4x1088xbf16>,
    %c0_108 = arith.constant 0 : index
    %c127_109 = arith.constant 127 : index
    %81 = vector.load %arg15[%c0_108, %c127_109] : memref<4x1344xbf16, #tpu.memory_space<vmem>>, vector<4x1088xbf16>
    %c12_110 = arith.constant 12 : index
    %c0_111 = arith.constant 0 : index
    %82 = vector.load %arg17[%c12_110, %c0_111] : memref<36x1088xbf16, #tpu.memory_space<vmem>>, vector<4x1088xbf16>
    tpu.vector_store %arg17[%c12_110, %c0_111], %81 {strides = array<i32>} : memref<36x1088xbf16, #tpu.memory_space<vmem>>, vector<4x1088xbf16>,
    %c0_112 = arith.constant 0 : index
    %c128_113 = arith.constant 128 : index
    %83 = vector.load %arg15[%c0_112, %c128_113] : memref<4x1344xbf16, #tpu.memory_space<vmem>>, vector<4x1088xbf16>
    %c16_114 = arith.constant 16 : index
    %c0_115 = arith.constant 0 : index
    %84 = vector.load %arg17[%c16_114, %c0_115] : memref<36x1088xbf16, #tpu.memory_space<vmem>>, vector<4x1088xbf16>
    tpu.vector_store %arg17[%c16_114, %c0_115], %83 {strides = array<i32>} : memref<36x1088xbf16, #tpu.memory_space<vmem>>, vector<4x1088xbf16>,
    %c0_116 = arith.constant 0 : index
    %c129_117 = arith.constant 129 : index
    %85 = vector.load %arg15[%c0_116, %c129_117] : memref<4x1344xbf16, #tpu.memory_space<vmem>>, vector<4x1088xbf16>
    %c20_118 = arith.constant 20 : index
    %c0_119 = arith.constant 0 : index
    %86 = vector.load %arg17[%c20_118, %c0_119] : memref<36x1088xbf16, #tpu.memory_space<vmem>>, vector<4x1088xbf16>
    tpu.vector_store %arg17[%c20_118, %c0_119], %85 {strides = array<i32>} : memref<36x1088xbf16, #tpu.memory_space<vmem>>, vector<4x1088xbf16>,
    %c0_120 = arith.constant 0 : index
    %c161_121 = arith.constant 161 : index
    %87 = vector.load %arg15[%c0_120, %c161_121] : memref<4x1344xbf16, #tpu.memory_space<vmem>>, vector<4x1088xbf16>
    %c24_122 = arith.constant 24 : index
    %c0_123 = arith.constant 0 : index
    %88 = vector.load %arg17[%c24_122, %c0_123] : memref<36x1088xbf16, #tpu.memory_space<vmem>>, vector<4x1088xbf16>
    tpu.vector_store %arg17[%c24_122, %c0_123], %87 {strides = array<i32>} : memref<36x1088xbf16, #tpu.memory_space<vmem>>, vector<4x1088xbf16>,
    %c0_124 = arith.constant 0 : index
    %c162_125 = arith.constant 162 : index
    %89 = vector.load %arg15[%c0_124, %c162_125] : memref<4x1344xbf16, #tpu.memory_space<vmem>>, vector<4x1088xbf16>
    %c28_126 = arith.constant 28 : index
    %c0_127 = arith.constant 0 : index
    %90 = vector.load %arg17[%c28_126, %c0_127] : memref<36x1088xbf16, #tpu.memory_space<vmem>>, vector<4x1088xbf16>
    tpu.vector_store %arg17[%c28_126, %c0_127], %89 {strides = array<i32>} : memref<36x1088xbf16, #tpu.memory_space<vmem>>, vector<4x1088xbf16>,
    %c0_128 = arith.constant 0 : index
    %c163_129 = arith.constant 163 : index
    %91 = vector.load %arg15[%c0_128, %c163_129] : memref<4x1344xbf16, #tpu.memory_space<vmem>>, vector<4x1088xbf16>
    %c32_130 = arith.constant 32 : index
    %c0_131 = arith.constant 0 : index
    %92 = vector.load %arg17[%c32_130, %c0_131] : memref<36x1088xbf16, #tpu.memory_space<vmem>>, vector<4x1088xbf16>
    tpu.vector_store %arg17[%c32_130, %c0_131], %91 {strides = array<i32>} : memref<36x1088xbf16, #tpu.memory_space<vmem>>, vector<4x1088xbf16>,
    %c0_132 = arith.constant 0 : index
    %c0_133 = arith.constant 0 : index
    %93 = vector.load %arg17[%c0_132, %c0_133] : memref<36x1088xbf16, #tpu.memory_space<vmem>>, vector<36x1088xbf16>
    %cst_134 = arith.constant dense<0.000000e+00> : vector<4x1088xf32>
    %94 = tpu.matmul %72, %93, %cst_134 {dimension_numbers = #tpu.dot_dimension_numbers<[1], [0], [0], [1], [0, 0, 1, 1], [], []>} : vector<4x36xbf16>, vector<36x1088xbf16>, vector<4x1088xf32> -> vector<4x1088xf32>
    %95 = vector.broadcast %73 : vector<4x1xf32> to vector<4x1088xf32>
    %96 = arith.mulf %94, %95 : vector<4x1088xf32>
    %97 = vector.broadcast %74 : vector<4x1xf32> to vector<4x1088xf32>
    %98 = arith.addf %96, %97 : vector<4x1088xf32>
    %cst_135 = arith.constant 0.000000e+00 : f32
    %99 = vector.broadcast %cst_135 : f32 to vector<4x1088xf32>
    %100 = arith.maximumf %98, %99 : vector<4x1088xf32>
    %101 = vector.broadcast %0 : vector<1x1088xf32> to vector<4x1088xf32>
    %102 = arith.mulf %100, %101 : vector<4x1088xf32>
    %103 = arith.truncf %102 : vector<4x1088xf32> to vector<4x1088xbf16>
    %c0_136 = arith.constant 0 : index
    %c128_137 = arith.constant 128 : index
    %104 = vector.load %arg16[%c0_136, %c128_137] : memref<4x1344xbf16, #tpu.memory_space<vmem>>, vector<4x1088xbf16>
    tpu.vector_store %arg16[%c0_136, %c128_137], %103 {strides = array<i32>} : memref<4x1344xbf16, #tpu.memory_space<vmem>>, vector<4x1088xbf16>,
    %c0_138 = arith.constant 0 : index
    %c0_139 = arith.constant 0 : index
    %105 = vector.load %arg6[%c0_138, %c0_139] : memref<8x36xbf16, #tpu.memory_space<vmem>>, vector<8x36xbf16>
    %c0_140 = arith.constant 0 : index
    %c0_141 = arith.constant 0 : index
    %106 = vector.load %arg12[%c0_140, %c0_141] : memref<8x1xf32, #tpu.memory_space<vmem>>, vector<8x1xf32>
    %c0_142 = arith.constant 0 : index
    %c0_143 = arith.constant 0 : index
    %107 = vector.load %arg13[%c0_142, %c0_143] : memref<8x1xf32, #tpu.memory_space<vmem>>, vector<8x1xf32>
    %c0_144 = arith.constant 0 : index
    %c93_145 = arith.constant 93 : index
    %108 = vector.load %arg16[%c0_144, %c93_145] : memref<4x1344xbf16, #tpu.memory_space<vmem>>, vector<4x1088xbf16>
    %c0_146 = arith.constant 0 : index
    %c0_147 = arith.constant 0 : index
    %109 = vector.load %arg17[%c0_146, %c0_147] : memref<36x1088xbf16, #tpu.memory_space<vmem>>, vector<4x1088xbf16>
    tpu.vector_store %arg17[%c0_146, %c0_147], %108 {strides = array<i32>} : memref<36x1088xbf16, #tpu.memory_space<vmem>>, vector<4x1088xbf16>,
    %c0_148 = arith.constant 0 : index
    %c94_149 = arith.constant 94 : index
    %110 = vector.load %arg16[%c0_148, %c94_149] : memref<4x1344xbf16, #tpu.memory_space<vmem>>, vector<4x1088xbf16>
    %c4_150 = arith.constant 4 : index
    %c0_151 = arith.constant 0 : index
    %111 = vector.load %arg17[%c4_150, %c0_151] : memref<36x1088xbf16, #tpu.memory_space<vmem>>, vector<4x1088xbf16>
    tpu.vector_store %arg17[%c4_150, %c0_151], %110 {strides = array<i32>} : memref<36x1088xbf16, #tpu.memory_space<vmem>>, vector<4x1088xbf16>,
    %c0_152 = arith.constant 0 : index
    %c95_153 = arith.constant 95 : index
    %112 = vector.load %arg16[%c0_152, %c95_153] : memref<4x1344xbf16, #tpu.memory_space<vmem>>, vector<4x1088xbf16>
    %c8_154 = arith.constant 8 : index
    %c0_155 = arith.constant 0 : index
    %113 = vector.load %arg17[%c8_154, %c0_155] : memref<36x1088xbf16, #tpu.memory_space<vmem>>, vector<4x1088xbf16>
    tpu.vector_store %arg17[%c8_154, %c0_155], %112 {strides = array<i32>} : memref<36x1088xbf16, #tpu.memory_space<vmem>>, vector<4x1088xbf16>,
    %c0_156 = arith.constant 0 : index
    %c127_157 = arith.constant 127 : index
    %114 = vector.load %arg16[%c0_156, %c127_157] : memref<4x1344xbf16, #tpu.memory_space<vmem>>, vector<4x1088xbf16>
    %c12_158 = arith.constant 12 : index
    %c0_159 = arith.constant 0 : index
    %115 = vector.load %arg17[%c12_158, %c0_159] : memref<36x1088xbf16, #tpu.memory_space<vmem>>, vector<4x1088xbf16>
    tpu.vector_store %arg17[%c12_158, %c0_159], %114 {strides = array<i32>} : memref<36x1088xbf16, #tpu.memory_space<vmem>>, vector<4x1088xbf16>,
    %c0_160 = arith.constant 0 : index
    %c128_161 = arith.constant 128 : index
    %116 = vector.load %arg16[%c0_160, %c128_161] : memref<4x1344xbf16, #tpu.memory_space<vmem>>, vector<4x1088xbf16>
    %c16_162 = arith.constant 16 : index
    %c0_163 = arith.constant 0 : index
    %117 = vector.load %arg17[%c16_162, %c0_163] : memref<36x1088xbf16, #tpu.memory_space<vmem>>, vector<4x1088xbf16>
    tpu.vector_store %arg17[%c16_162, %c0_163], %116 {strides = array<i32>} : memref<36x1088xbf16, #tpu.memory_space<vmem>>, vector<4x1088xbf16>,
    %c0_164 = arith.constant 0 : index
    %c129_165 = arith.constant 129 : index
    %118 = vector.load %arg16[%c0_164, %c129_165] : memref<4x1344xbf16, #tpu.memory_space<vmem>>, vector<4x1088xbf16>
    %c20_166 = arith.constant 20 : index
    %c0_167 = arith.constant 0 : index
    %119 = vector.load %arg17[%c20_166, %c0_167] : memref<36x1088xbf16, #tpu.memory_space<vmem>>, vector<4x1088xbf16>
    tpu.vector_store %arg17[%c20_166, %c0_167], %118 {strides = array<i32>} : memref<36x1088xbf16, #tpu.memory_space<vmem>>, vector<4x1088xbf16>,
    %c0_168 = arith.constant 0 : index
    %c161_169 = arith.constant 161 : index
    %120 = vector.load %arg16[%c0_168, %c161_169] : memref<4x1344xbf16, #tpu.memory_space<vmem>>, vector<4x1088xbf16>
    %c24_170 = arith.constant 24 : index
    %c0_171 = arith.constant 0 : index
    %121 = vector.load %arg17[%c24_170, %c0_171] : memref<36x1088xbf16, #tpu.memory_space<vmem>>, vector<4x1088xbf16>
    tpu.vector_store %arg17[%c24_170, %c0_171], %120 {strides = array<i32>} : memref<36x1088xbf16, #tpu.memory_space<vmem>>, vector<4x1088xbf16>,
    %c0_172 = arith.constant 0 : index
    %c162_173 = arith.constant 162 : index
    %122 = vector.load %arg16[%c0_172, %c162_173] : memref<4x1344xbf16, #tpu.memory_space<vmem>>, vector<4x1088xbf16>
    %c28_174 = arith.constant 28 : index
    %c0_175 = arith.constant 0 : index
    %123 = vector.load %arg17[%c28_174, %c0_175] : memref<36x1088xbf16, #tpu.memory_space<vmem>>, vector<4x1088xbf16>
    tpu.vector_store %arg17[%c28_174, %c0_175], %122 {strides = array<i32>} : memref<36x1088xbf16, #tpu.memory_space<vmem>>, vector<4x1088xbf16>,
    %c0_176 = arith.constant 0 : index
    %c163_177 = arith.constant 163 : index
    %124 = vector.load %arg16[%c0_176, %c163_177] : memref<4x1344xbf16, #tpu.memory_space<vmem>>, vector<4x1088xbf16>
    %c32_178 = arith.constant 32 : index
    %c0_179 = arith.constant 0 : index
    %125 = vector.load %arg17[%c32_178, %c0_179] : memref<36x1088xbf16, #tpu.memory_space<vmem>>, vector<4x1088xbf16>
    tpu.vector_store %arg17[%c32_178, %c0_179], %124 {strides = array<i32>} : memref<36x1088xbf16, #tpu.memory_space<vmem>>, vector<4x1088xbf16>,
    %c0_180 = arith.constant 0 : index
    %c0_181 = arith.constant 0 : index
    %126 = vector.load %arg17[%c0_180, %c0_181] : memref<36x1088xbf16, #tpu.memory_space<vmem>>, vector<36x1088xbf16>
    %cst_182 = arith.constant dense<0.000000e+00> : vector<8x1088xf32>
    %127 = tpu.matmul %105, %126, %cst_182 {dimension_numbers = #tpu.dot_dimension_numbers<[1], [0], [0], [1], [0, 0, 1, 1], [], []>} : vector<8x36xbf16>, vector<36x1088xbf16>, vector<8x1088xf32> -> vector<8x1088xf32>
    %128 = vector.broadcast %106 : vector<8x1xf32> to vector<8x1088xf32>
    %129 = arith.mulf %127, %128 : vector<8x1088xf32>
    %130 = vector.broadcast %107 : vector<8x1xf32> to vector<8x1088xf32>
    %131 = arith.addf %129, %130 : vector<8x1088xf32>
    %cst_183 = arith.constant 0.000000e+00 : f32
    %132 = vector.broadcast %cst_183 : f32 to vector<8x1088xf32>
    %133 = arith.maximumf %131, %132 : vector<8x1088xf32>
    %c0_184 = arith.constant 0 : index
    %c0_185 = arith.constant 0 : index
    %c0_186 = arith.constant 0 : index
    %134 = vector.load %arg14[%c0_184, %c0_185, %c0_186] : memref<1x8x1088xf32, #tpu.memory_space<vmem>>, vector<1x8x1088xf32>
    %135 = vector.shape_cast %134 : vector<1x8x1088xf32> to vector<8x1088xf32>
    %136 = vector.shape_cast %133 : vector<8x1088xf32> to vector<1x8x1088xf32>
    tpu.vector_store %arg14[%c0_184, %c0_185, %c0_186], %136 {strides = array<i32>} : memref<1x8x1088xf32, #tpu.memory_space<vmem>>, vector<1x8x1088xf32>,
    return
  }
  func.func @transform_0(%arg0: i32) -> (i32, i32, i32) {
    %c0_i32 = arith.constant 0 : i32
    %c0_i32_0 = arith.constant 0 : i32
    %c0_i32_1 = arith.constant 0 : i32
    return %arg0, %c0_i32, %c0_i32_0 : i32, i32, i32
  }
  func.func @transform_1(%arg0: i32) -> (i32, i32) {
    %c0_i32 = arith.constant 0 : i32
    %c0_i32_0 = arith.constant 0 : i32
    %c0_i32_1 = arith.constant 0 : i32
    return %c0_i32, %c0_i32_0 : i32, i32
  }
  func.func @transform_2(%arg0: i32) -> (i32, i32) {
    %c0_i32 = arith.constant 0 : i32
    %c0_i32_0 = arith.constant 0 : i32
    %c0_i32_1 = arith.constant 0 : i32
    return %c0_i32, %c0_i32_0 : i32, i32
  }
  func.func @transform_3(%arg0: i32) -> (i32, i32) {
    %c0_i32 = arith.constant 0 : i32
    %c0_i32_0 = arith.constant 0 : i32
    %c0_i32_1 = arith.constant 0 : i32
    return %c0_i32, %c0_i32_0 : i32, i32
  }
  func.func @transform_4(%arg0: i32) -> (i32, i32) {
    %c0_i32 = arith.constant 0 : i32
    %c0_i32_0 = arith.constant 0 : i32
    %c0_i32_1 = arith.constant 0 : i32
    return %c0_i32, %c0_i32_0 : i32, i32
  }
  func.func @transform_5(%arg0: i32) -> (i32, i32) {
    %c0_i32 = arith.constant 0 : i32
    %c0_i32_0 = arith.constant 0 : i32
    %c0_i32_1 = arith.constant 0 : i32
    return %c0_i32, %c0_i32_0 : i32, i32
  }
  func.func @transform_6(%arg0: i32) -> (i32, i32) {
    %c0_i32 = arith.constant 0 : i32
    %c0_i32_0 = arith.constant 0 : i32
    %c0_i32_1 = arith.constant 0 : i32
    return %c0_i32, %c0_i32_0 : i32, i32
  }
  func.func @transform_7(%arg0: i32) -> (i32, i32) {
    %c0_i32 = arith.constant 0 : i32
    %c0_i32_0 = arith.constant 0 : i32
    %c0_i32_1 = arith.constant 0 : i32
    return %c0_i32, %c0_i32_0 : i32, i32
  }
  func.func @transform_8(%arg0: i32) -> (i32, i32) {
    %c0_i32 = arith.constant 0 : i32
    %c0_i32_0 = arith.constant 0 : i32
    %c0_i32_1 = arith.constant 0 : i32
    return %c0_i32, %c0_i32_0 : i32, i32
  }
  func.func @transform_9(%arg0: i32) -> (i32, i32) {
    %c0_i32 = arith.constant 0 : i32
    %c0_i32_0 = arith.constant 0 : i32
    %c0_i32_1 = arith.constant 0 : i32
    return %c0_i32, %c0_i32_0 : i32, i32
  }
  func.func @transform_10(%arg0: i32) -> (i32, i32) {
    %c0_i32 = arith.constant 0 : i32
    %c0_i32_0 = arith.constant 0 : i32
    %c0_i32_1 = arith.constant 0 : i32
    return %c0_i32, %c0_i32_0 : i32, i32
  }
  func.func @transform_11(%arg0: i32) -> (i32, i32) {
    %c0_i32 = arith.constant 0 : i32
    %c0_i32_0 = arith.constant 0 : i32
    %c0_i32_1 = arith.constant 0 : i32
    return %c0_i32, %c0_i32_0 : i32, i32
  }
  func.func @transform_12(%arg0: i32) -> (i32, i32) {
    %c0_i32 = arith.constant 0 : i32
    %c0_i32_0 = arith.constant 0 : i32
    %c0_i32_1 = arith.constant 0 : i32
    return %c0_i32, %c0_i32_0 : i32, i32
  }
  func.func @transform_13(%arg0: i32) -> (i32, i32, i32) {
    %c0_i32 = arith.constant 0 : i32
    %c0_i32_0 = arith.constant 0 : i32
    %c0_i32_1 = arith.constant 0 : i32
    return %arg0, %c0_i32, %c0_i32_0 : i32, i32, i32
  }
}

</mosaic_0001>

<llo_original>
// kernel: upsample_block_fused.1
$region0: #{upsample_block_fused.1}
  #allocation0 [shape = 'u32[]', space=smem, size = 0x4, offset = 0x4, fixed_abs, tag = 'smem constant byte address 0x4 - core index']
  #allocation1 [shape = 'u32[72,128]{1,0:T(1,128)}', space=vmem, size = 0x9000, scoped, tag = 'internal scratch']
  #allocation2 [shape = 'bf16[4,1344]{1,0:T(4,128)(2,1)}', space=vmem, size = 0x2c00, scoped, tag = 'scratch operand']
  #allocation3 [shape = 'bf16[4,1344]{1,0:T(4,128)(2,1)}', space=vmem, size = 0x2c00, scoped, tag = 'scratch operand']
  #allocation4 [shape = 'bf16[36,1088]{1,0:T(8,128)(2,1)}', space=vmem, size = 0x16800, scoped, tag = 'scratch operand']
  %s0 = inlined_call_operand.vmem [shape: bf16[2,4,256], index: 0, kind: input, shape index: {}]
  %s1 = inlined_call_operand.vmem [shape: bf16[256,1088], index: 1, kind: input, shape index: {}]
  %s2 = inlined_call_operand.vmem [shape: f32[1,1088], index: 2, kind: input, shape index: {}]
  %s3 = inlined_call_operand.vmem [shape: bf16[4,36], index: 3, kind: input, shape index: {}]
  %s4 = inlined_call_operand.vmem [shape: bf16[4,36], index: 4, kind: input, shape index: {}]
  %s5 = inlined_call_operand.vmem [shape: bf16[8,36], index: 5, kind: input, shape index: {}]
  %s6 = inlined_call_operand.vmem [shape: f32[4,1], index: 6, kind: input, shape index: {}]
  %s7 = inlined_call_operand.vmem [shape: f32[4,1], index: 7, kind: input, shape index: {}]
  %s8 = inlined_call_operand.vmem [shape: f32[4,1], index: 8, kind: input, shape index: {}]
  %s9 = inlined_call_operand.vmem [shape: f32[4,1], index: 9, kind: input, shape index: {}]
  %s10 = inlined_call_operand.vmem [shape: f32[4,1], index: 10, kind: input, shape index: {}]
  %s11 = inlined_call_operand.vmem [shape: f32[8,1], index: 11, kind: input, shape index: {}]
  %s12 = inlined_call_operand.vmem [shape: f32[8,1], index: 12, kind: input, shape index: {}]
  %s13 = inlined_call_operand.vmem [shape: f32[2,8,1088], index: 13, kind: output, shape index: {}]
  %s14 = sld [smem:[#allocation0]]
  $region85: #{upsample_block_fused.1} parent=0
    _
  %s16 = ssub.s32 1, %s14
  %s17 = scalar_select 0, %s16, %s14
  loop: start=0, step=1, limit=4
  $region2: #{upsample_block_fused.1} parent=0 // loop_pre_header
    _
  $region3: #{upsample_block_fused.1} parent=0 // loop_header
    %s19 = sphi 0, %s23
    %p20 = scmp.ge.s32.totalorder %s19, 4
    %s29 = sphi 0, %s31
    %s32 = sphi 0, %s29
    %s33 = sphi 0, %s32
    %s49 = sphi 0, %s33
    %s53 = sphi 0, %s53
    %s55 = sphi 0, %s53
    %s56 = sphi 0, %s55
    %s70 = sphi 0, %s56
    %s74 = sphi 0, %s74
    %s76 = sphi 0, %s74
    %s77 = sphi 0, %s76
    %s91 = sphi 0, %s77
    %s95 = sphi 0, %s95
    %s97 = sphi 0, %s95
    %s98 = sphi 0, %s97
    %s112 = sphi 0, %s98
    %s116 = sphi 0, %s116
    %s118 = sphi 0, %s116
    %s119 = sphi 0, %s118
    %s133 = sphi 0, %s119
    %s137 = sphi 0, %s137
    %s139 = sphi 0, %s137
    %s140 = sphi 0, %s139
    %s154 = sphi 0, %s140
    %s158 = sphi 0, %s158
    %s160 = sphi 0, %s158
    %s161 = sphi 0, %s160
    %s175 = sphi 0, %s161
    %s179 = sphi 0, %s179
    %s181 = sphi 0, %s179
    %s182 = sphi 0, %s181
    %s196 = sphi 0, %s182
    %s200 = sphi 0, %s200
    %s202 = sphi 0, %s200
    %s203 = sphi 0, %s202
    %s217 = sphi 0, %s203
    %s221 = sphi 0, %s221
    %s223 = sphi 0, %s221
    %s224 = sphi 0, %s223
    %s238 = sphi 0, %s224
    %s242 = sphi 0, %s242
    %s244 = sphi 0, %s242
    %s245 = sphi 0, %s244
    %s259 = sphi 0, %s245
    %s263 = sphi 0, %s263
    %s265 = sphi 0, %s263
    %s266 = sphi 0, %s265
    %s280 = sphi 0, %s266
    %s284 = sphi 0, %s284
    %s286 = sphi 0, %s284
    %s287 = sphi 0, %s286
    %s301 = sphi 0, %s287
    %s307 = sphi 0, %s309
    %s310 = sphi 0, %s307
    %s311 = sphi 0, %s310
    %s327 = sphi 0, %s311
  $region4: #{upsample_block_fused.1} parent=0 // loop_header_branch
    %22 = sbr.rel (%p20) target = $region8
  $region5: #{upsample_block_fused.1} parent=0 // loop_body
    %s24 = ssub.s32 %s19, 1
    %s25 = ssub.s32 %s19, 2
    %s26 = sadd.s32 %s19, 1
    %s27 = ssub.s32 %s19, %s26
    %p28 = scmp.eq.s32.totalorder %s27, 0
    %s30 = sadd.s32 %s29, 1
    %s31 = scalar_select %p28, %s29, %s30
    %p34 = pneg %p28
    %p35 = scmp.eq.s32.totalorder %s19, 1
    %p36 = por %p34, %p35
    %p37 = scmp.ne.s32.totalorder %s29, %s32
    %p38 = scmp.eq.s32.totalorder %s19, 0
    %p39 = por %p37, %p38
    %p40 = scmp.ne.s32.totalorder %s29, %s32
    %p41 = scmp.eq.s32.totalorder %s24, 1
    %p42 = por %p40, %p41
    %p43 = scmp.ne.s32.totalorder %s32, %s33
    %p44 = scmp.eq.s32.totalorder %s24, 0
    %p45 = por %p43, %p44
    %p46 = scmp.ne.s32.totalorder %s32, %s33
    %p47 = scmp.eq.s32.totalorder %s25, 1
    %p48 = por %p46, %p47
    %p50 = scmp.ne.s32.totalorder %s33, %s49
    %p51 = scmp.eq.s32.totalorder %s25, 0
    %p52 = por %p50, %p51
    %s54 = sadd.s32 %s53, 1
    %p57 = scmp.eq.s32.totalorder %s19, 1
    %p58 = scmp.ne.s32.totalorder %s53, %s55
    %p59 = scmp.eq.s32.totalorder %s19, 0
    %p60 = por %p58, %p59
    %p61 = scmp.ne.s32.totalorder %s53, %s55
    %p62 = scmp.eq.s32.totalorder %s24, 1
    %p63 = por %p61, %p62
    %p64 = scmp.ne.s32.totalorder %s55, %s56
    %p65 = scmp.eq.s32.totalorder %s24, 0
    %p66 = por %p64, %p65
    %p67 = scmp.ne.s32.totalorder %s55, %s56
    %p68 = scmp.eq.s32.totalorder %s25, 1
    %p69 = por %p67, %p68
    %p71 = scmp.ne.s32.totalorder %s56, %s70
    %p72 = scmp.eq.s32.totalorder %s25, 0
    %p73 = por %p71, %p72
    %s75 = sadd.s32 %s74, 1
    %p78 = scmp.eq.s32.totalorder %s19, 1
    %p79 = scmp.ne.s32.totalorder %s74, %s76
    %p80 = scmp.eq.s32.totalorder %s19, 0
    %p81 = por %p79, %p80
    %p82 = scmp.ne.s32.totalorder %s74, %s76
    %p83 = scmp.eq.s32.totalorder %s24, 1
    %p84 = por %p82, %p83
    %p85 = scmp.ne.s32.totalorder %s76, %s77
    %p86 = scmp.eq.s32.totalorder %s24, 0
    %p87 = por %p85, %p86
    %p88 = scmp.ne.s32.totalorder %s76, %s77
    %p89 = scmp.eq.s32.totalorder %s25, 1
    %p90 = por %p88, %p89
    %p92 = scmp.ne.s32.totalorder %s77, %s91
    %p93 = scmp.eq.s32.totalorder %s25, 0
    %p94 = por %p92, %p93
    %s96 = sadd.s32 %s95, 1
    %p99 = scmp.eq.s32.totalorder %s19, 1
    %p100 = scmp.ne.s32.totalorder %s95, %s97
    %p101 = scmp.eq.s32.totalorder %s19, 0
    %p102 = por %p100, %p101
    %p103 = scmp.ne.s32.totalorder %s95, %s97
    %p104 = scmp.eq.s32.totalorder %s24, 1
    %p105 = por %p103, %p104
    %p106 = scmp.ne.s32.totalorder %s97, %s98
    %p107 = scmp.eq.s32.totalorder %s24, 0
    %p108 = por %p106, %p107
    %p109 = scmp.ne.s32.totalorder %s97, %s98
    %p110 = scmp.eq.s32.totalorder %s25, 1
    %p111 = por %p109, %p110
    %p113 = scmp.ne.s32.totalorder %s98, %s112
    %p114 = scmp.eq.s32.totalorder %s25, 0
    %p115 = por %p113, %p114
    %s117 = sadd.s32 %s116, 1
    %p120 = scmp.eq.s32.totalorder %s19, 1
    %p121 = scmp.ne.s32.totalorder %s116, %s118
    %p122 = scmp.eq.s32.totalorder %s19, 0
    %p123 = por %p121, %p122
    %p124 = scmp.ne.s32.totalorder %s116, %s118
    %p125 = scmp.eq.s32.totalorder %s24, 1
    %p126 = por %p124, %p125
    %p127 = scmp.ne.s32.totalorder %s118, %s119
    %p128 = scmp.eq.s32.totalorder %s24, 0
    %p129 = por %p127, %p128
    %p130 = scmp.ne.s32.totalorder %s118, %s119
    %p131 = scmp.eq.s32.totalorder %s25, 1
    %p132 = por %p130, %p131
    %p134 = scmp.ne.s32.totalorder %s119, %s133
    %p135 = scmp.eq.s32.totalorder %s25, 0
    %p136 = por %p134, %p135
    %s138 = sadd.s32 %s137, 1
    %p141 = scmp.eq.s32.totalorder %s19, 1
    %p142 = scmp.ne.s32.totalorder %s137, %s139
    %p143 = scmp.eq.s32.totalorder %s19, 0
    %p144 = por %p142, %p143
    %p145 = scmp.ne.s32.totalorder %s137, %s139
    %p146 = scmp.eq.s32.totalorder %s24, 1
    %p147 = por %p145, %p146
    %p148 = scmp.ne.s32.totalorder %s139, %s140
    %p149 = scmp.eq.s32.totalorder %s24, 0
    %p150 = por %p148, %p149
    %p151 = scmp.ne.s32.totalorder %s139, %s140
    %p152 = scmp.eq.s32.totalorder %s25, 1
    %p153 = por %p151, %p152
    %p155 = scmp.ne.s32.totalorder %s140, %s154
    %p156 = scmp.eq.s32.totalorder %s25, 0
    %p157 = por %p155, %p156
    %s159 = sadd.s32 %s158, 1
    %p162 = scmp.eq.s32.totalorder %s19, 1
    %p163 = scmp.ne.s32.totalorder %s158, %s160
    %p164 = scmp.eq.s32.totalorder %s19, 0
    %p165 = por %p163, %p164
    %p166 = scmp.ne.s32.totalorder %s158, %s160
    %p167 = scmp.eq.s32.totalorder %s24, 1
    %p168 = por %p166, %p167
    %p169 = scmp.ne.s32.totalorder %s160, %s161
    %p170 = scmp.eq.s32.totalorder %s24, 0
    %p171 = por %p169, %p170
    %p172 = scmp.ne.s32.totalorder %s160, %s161
    %p173 = scmp.eq.s32.totalorder %s25, 1
    %p174 = por %p172, %p173
    %p176 = scmp.ne.s32.totalorder %s161, %s175
    %p177 = scmp.eq.s32.totalorder %s25, 0
    %p178 = por %p176, %p177
    %s180 = sadd.s32 %s179, 1
    %p183 = scmp.eq.s32.totalorder %s19, 1
    %p184 = scmp.ne.s32.totalorder %s179, %s181
    %p185 = scmp.eq.s32.totalorder %s19, 0
    %p186 = por %p184, %p185
    %p187 = scmp.ne.s32.totalorder %s179, %s181
    %p188 = scmp.eq.s32.totalorder %s24, 1
    %p189 = por %p187, %p188
    %p190 = scmp.ne.s32.totalorder %s181, %s182
    %p191 = scmp.eq.s32.totalorder %s24, 0
    %p192 = por %p190, %p191
    %p193 = scmp.ne.s32.totalorder %s181, %s182
    %p194 = scmp.eq.s32.totalorder %s25, 1
    %p195 = por %p193, %p194
    %p197 = scmp.ne.s32.totalorder %s182, %s196
    %p198 = scmp.eq.s32.totalorder %s25, 0
    %p199 = por %p197, %p198
    %s201 = sadd.s32 %s200, 1
    %p204 = scmp.eq.s32.totalorder %s19, 1
    %p205 = scmp.ne.s32.totalorder %s200, %s202
    %p206 = scmp.eq.s32.totalorder %s19, 0
    %p207 = por %p205, %p206
    %p208 = scmp.ne.s32.totalorder %s200, %s202
    %p209 = scmp.eq.s32.totalorder %s24, 1
    %p210 = por %p208, %p209
    %p211 = scmp.ne.s32.totalorder %s202, %s203
    %p212 = scmp.eq.s32.totalorder %s24, 0
    %p213 = por %p211, %p212
    %p214 = scmp.ne.s32.totalorder %s202, %s203
    %p215 = scmp.eq.s32.totalorder %s25, 1
    %p216 = por %p214, %p215
    %p218 = scmp.ne.s32.totalorder %s203, %s217
    %p219 = scmp.eq.s32.totalorder %s25, 0
    %p220 = por %p218, %p219
    %s222 = sadd.s32 %s221, 1
    %p225 = scmp.eq.s32.totalorder %s19, 1
    %p226 = scmp.ne.s32.totalorder %s221, %s223
    %p227 = scmp.eq.s32.totalorder %s19, 0
    %p228 = por %p226, %p227
    %p229 = scmp.ne.s32.totalorder %s221, %s223
    %p230 = scmp.eq.s32.totalorder %s24, 1
    %p231 = por %p229, %p230
    %p232 = scmp.ne.s32.totalorder %s223, %s224
    %p233 = scmp.eq.s32.totalorder %s24, 0
    %p234 = por %p232, %p233
    %p235 = scmp.ne.s32.totalorder %s223, %s224
    %p236 = scmp.eq.s32.totalorder %s25, 1
    %p237 = por %p235, %p236
    %p239 = scmp.ne.s32.totalorder %s224, %s238
    %p240 = scmp.eq.s32.totalorder %s25, 0
    %p241 = por %p239, %p240
    %s243 = sadd.s32 %s242, 1
    %p246 = scmp.eq.s32.totalorder %s19, 1
    %p247 = scmp.ne.s32.totalorder %s242, %s244
    %p248 = scmp.eq.s32.totalorder %s19, 0
    %p249 = por %p247, %p248
    %p250 = scmp.ne.s32.totalorder %s242, %s244
    %p251 = scmp.eq.s32.totalorder %s24, 1
    %p252 = por %p250, %p251
    %p253 = scmp.ne.s32.totalorder %s244, %s245
    %p254 = scmp.eq.s32.totalorder %s24, 0
    %p255 = por %p253, %p254
    %p256 = scmp.ne.s32.totalorder %s244, %s245
    %p257 = scmp.eq.s32.totalorder %s25, 1
    %p258 = por %p256, %p257
    %p260 = scmp.ne.s32.totalorder %s245, %s259
    %p261 = scmp.eq.s32.totalorder %s25, 0
    %p262 = por %p260, %p261
    %s264 = sadd.s32 %s263, 1
    %p267 = scmp.eq.s32.totalorder %s19, 1
    %p268 = scmp.ne.s32.totalorder %s263, %s265
    %p269 = scmp.eq.s32.totalorder %s19, 0
    %p270 = por %p268, %p269
    %p271 = scmp.ne.s32.totalorder %s263, %s265
    %p272 = scmp.eq.s32.totalorder %s24, 1
    %p273 = por %p271, %p272
    %p274 = scmp.ne.s32.totalorder %s265, %s266
    %p275 = scmp.eq.s32.totalorder %s24, 0
    %p276 = por %p274, %p275
    %p277 = scmp.ne.s32.totalorder %s265, %s266
    %p278 = scmp.eq.s32.totalorder %s25, 1
    %p279 = por %p277, %p278
    %p281 = scmp.ne.s32.totalorder %s266, %s280
    %p282 = scmp.eq.s32.totalorder %s25, 0
    %p283 = por %p281, %p282
    %s285 = sadd.s32 %s284, 1
    %p288 = scmp.eq.s32.totalorder %s19, 1
    %p289 = scmp.ne.s32.totalorder %s284, %s286
    %p290 = scmp.eq.s32.totalorder %s19, 0
    %p291 = por %p289, %p290
    %p292 = scmp.ne.s32.totalorder %s284, %s286
    %p293 = scmp.eq.s32.totalorder %s24, 1
    %p294 = por %p292, %p293
    %p295 = scmp.ne.s32.totalorder %s286, %s287
    %p296 = scmp.eq.s32.totalorder %s24, 0
    %p297 = por %p295, %p296
    %p298 = scmp.ne.s32.totalorder %s286, %s287
    %p299 = scmp.eq.s32.totalorder %s25, 1
    %p300 = por %p298, %p299
    %p302 = scmp.ne.s32.totalorder %s287, %s301
    %p303 = scmp.eq.s32.totalorder %s25, 0
    %p304 = por %p302, %p303
    %s305 = ssub.s32 %s19, %s26
    %p306 = scmp.eq.s32.totalorder %s305, 0
    %s308 = sadd.s32 %s307, 1
    %s309 = scalar_select %p306, %s307, %s308
    %p312 = pneg %p306
    %p313 = scmp.eq.s32.totalorder %s19, 1
    %p314 = por %p312, %p313
    %p315 = scmp.ne.s32.totalorder %s307, %s310
    %p316 = scmp.eq.s32.totalorder %s19, 0
    %p317 = por %p315, %p316
    %p318 = scmp.ne.s32.totalorder %s307, %s310
    %p319 = scmp.eq.s32.totalorder %s24, 1
    %p320 = por %p318, %p319
    %p321 = scmp.ne.s32.totalorder %s310, %s311
    %p322 = scmp.eq.s32.totalorder %s24, 0
    %p323 = por %p321, %p322
    %p324 = scmp.ne.s32.totalorder %s310, %s311
    %p325 = scmp.eq.s32.totalorder %s25, 1
    %p326 = por %p324, %p325
    %p328 = scmp.ne.s32.totalorder %s311, %s327
    %p329 = scmp.eq.s32.totalorder %s25, 0
    %p330 = por %p328, %p329
    %p331 = scmp.le.s32.totalorder 1, %s19
    %p332 = scmp.lt.s32.totalorder %s19, 3
    %p333 = pnand %p331, %p332
    %p334 = pneg %p333
    // Predicated region
    $region9: #{upsample_block_fused.1} parent=5 // pred_check
      _
    $region10: #{upsample_block_fused.1} parent=5 // pred_check_branch
      %336 = sbr.rel (%p333) target = $region12
    $region11: #{upsample_block_fused.1} parent=5 // pred_region
      %s337 = ssub.s32 %s19, 1
      // Predicated region
      $region13: #{upsample_block_fused.1} parent=11 // pred_check
        %p338 = pneg %p66
      $region14: #{upsample_block_fused.1} parent=11 // pred_check_branch
        %340 = sbr.rel (%p338) target = $region16
      $region15: #{upsample_block_fused.1} parent=11 // pred_region
        _
      $region16: #{upsample_block_fused.1} parent=11 // pred_fallthru
        _
      // Predicated region
      $region17: #{upsample_block_fused.1} parent=11 // pred_check
        %p341 = pneg %p87
      $region18: #{upsample_block_fused.1} parent=11 // pred_check_branch
        %343 = sbr.rel (%p341) target = $region20
      $region19: #{upsample_block_fused.1} parent=11 // pred_region
        _
      $region20: #{upsample_block_fused.1} parent=11 // pred_fallthru
        _
      // Predicated region
      $region21: #{upsample_block_fused.1} parent=11 // pred_check
        %p344 = pneg %p108
      $region22: #{upsample_block_fused.1} parent=11 // pred_check_branch
        %346 = sbr.rel (%p344) target = $region24
      $region23: #{upsample_block_fused.1} parent=11 // pred_region
        _
      $region24: #{upsample_block_fused.1} parent=11 // pred_fallthru
        _
      // Predicated region
      $region25: #{upsample_block_fused.1} parent=11 // pred_check
        %p347 = pneg %p129
      $region26: #{upsample_block_fused.1} parent=11 // pred_check_branch
        %349 = sbr.rel (%p347) target = $region28
      $region27: #{upsample_block_fused.1} parent=11 // pred_region
        _
      $region28: #{upsample_block_fused.1} parent=11 // pred_fallthru
        _
      // Predicated region
      $region29: #{upsample_block_fused.1} parent=11 // pred_check
        %p350 = pneg %p150
      $region30: #{upsample_block_fused.1} parent=11 // pred_check_branch
        %352 = sbr.rel (%p350) target = $region32
      $region31: #{upsample_block_fused.1} parent=11 // pred_region
        _
      $region32: #{upsample_block_fused.1} parent=11 // pred_fallthru
        _
      // Predicated region
      $region33: #{upsample_block_fused.1} parent=11 // pred_check
        %p353 = pneg %p171
      $region34: #{upsample_block_fused.1} parent=11 // pred_check_branch
        %355 = sbr.rel (%p353) target = $region36
      $region35: #{upsample_block_fused.1} parent=11 // pred_region
        _
      $region36: #{upsample_block_fused.1} parent=11 // pred_fallthru
        _
      // Predicated region
      $region37: #{upsample_block_fused.1} parent=11 // pred_check
        %p356 = pneg %p192
      $region38: #{upsample_block_fused.1} parent=11 // pred_check_branch
        %358 = sbr.rel (%p356) target = $region40
      $region39: #{upsample_block_fused.1} parent=11 // pred_region
        _
      $region40: #{upsample_block_fused.1} parent=11 // pred_fallthru
        _
      // Predicated region
      $region41: #{upsample_block_fused.1} parent=11 // pred_check
        %p359 = pneg %p213
      $region42: #{upsample_block_fused.1} parent=11 // pred_check_branch
        %361 = sbr.rel (%p359) target = $region44
      $region43: #{upsample_block_fused.1} parent=11 // pred_region
        _
      $region44: #{upsample_block_fused.1} parent=11 // pred_fallthru
        _
      // Predicated region
      $region45: #{upsample_block_fused.1} parent=11 // pred_check
        %p362 = pneg %p234
      $region46: #{upsample_block_fused.1} parent=11 // pred_check_branch
        %364 = sbr.rel (%p362) target = $region48
      $region47: #{upsample_block_fused.1} parent=11 // pred_region
        _
      $region48: #{upsample_block_fused.1} parent=11 // pred_fallthru
        _
      // Predicated region
      $region49: #{upsample_block_fused.1} parent=11 // pred_check
        %p365 = pneg %p255
      $region50: #{upsample_block_fused.1} parent=11 // pred_check_branch
        %367 = sbr.rel (%p365) target = $region52
      $region51: #{upsample_block_fused.1} parent=11 // pred_region
        _
      $region52: #{upsample_block_fused.1} parent=11 // pred_fallthru
        _
      // Predicated region
      $region53: #{upsample_block_fused.1} parent=11 // pred_check
        %p368 = pneg %p276
      $region54: #{upsample_block_fused.1} parent=11 // pred_check_branch
        %370 = sbr.rel (%p368) target = $region56
      $region55: #{upsample_block_fused.1} parent=11 // pred_region
        _
      $region56: #{upsample_block_fused.1} parent=11 // pred_fallthru
        _
      // Predicated region
      $region57: #{upsample_block_fused.1} parent=11 // pred_check
        %p371 = pneg %p297
      $region58: #{upsample_block_fused.1} parent=11 // pred_check_branch
        %373 = sbr.rel (%p371) target = $region60
      $region59: #{upsample_block_fused.1} parent=11 // pred_region
        _
      $region60: #{upsample_block_fused.1} parent=11 // pred_fallthru
        _
    $region12: #{upsample_block_fused.1} parent=5 // pred_fallthru
      _
    %p374 = scmp.lt.s32.totalorder %s19, 2
    // Predicated region
    $region61: #{upsample_block_fused.1} parent=5 // pred_check
      %p375 = pneg %p374
    $region62: #{upsample_block_fused.1} parent=5 // pred_check_branch
      %377 = sbr.rel (%p375) target = $region64
    $region63: #{upsample_block_fused.1} parent=5 // pred_region
      // Predicated region
      $region65: #{upsample_block_fused.1} parent=63 // pred_check
        %p378 = pneg %p39
      $region66: #{upsample_block_fused.1} parent=63 // pred_check_branch
        %380 = sbr.rel (%p378) target = $region68
      $region67: #{upsample_block_fused.1} parent=63 // pred_region
        %p381 = scmp.lt.s32.totalorder %s19, 1
        %s382 = scalar_select %p381, %s19, 1
        %s383 = smul.addr %s382, 2
        %s384 = smul.addr %s383, 2
        %s385 = scalar_lea.vmem %s0, %s384
      $region68: #{upsample_block_fused.1} parent=63 // pred_fallthru
        _
    $region64: #{upsample_block_fused.1} parent=5 // pred_fallthru
      _
    %p386 = scmp.le.s32.totalorder 1, %s19
    %p387 = scmp.lt.s32.totalorder %s19, 3
    %p388 = pnand %p386, %p387
    %p389 = pneg %p388
    // Predicated region
    $region69: #{upsample_block_fused.1} parent=5 // pred_check
      _
    $region70: #{upsample_block_fused.1} parent=5 // pred_check_branch
      %391 = sbr.rel (%p388) target = $region72
    $region71: #{upsample_block_fused.1} parent=5 // pred_region
      %s392 = ssub.s32 %s19, 1
      %p393 = scmp.lt.s32.totalorder %s24, 1
      %s394 = scalar_select %p393, %s24, 1
      %s395 = smul.addr %s394, 2
      %s396 = smul.addr %s395, 2
      %s397 = scalar_lea.vmem %s0, %s396
      %p398 = pneg %p45
      %p399 = pneg %p42
      %p400 = pneg %p66
      %p401 = pneg %p63
      %p402 = pneg %p87
      %p403 = pneg %p84
      %p404 = pneg %p108
      %p405 = pneg %p105
      %p406 = pneg %p129
      %p407 = pneg %p126
      %p408 = pneg %p150
      %p409 = pneg %p147
      %p410 = pneg %p171
      %p411 = pneg %p168
      %p412 = pneg %p192
      %p413 = pneg %p189
      %p414 = pneg %p213
      %p415 = pneg %p210
      %p416 = pneg %p234
      %p417 = pneg %p231
      %p418 = pneg %p255
      %p419 = pneg %p252
      %p420 = pneg %p276
      %p421 = pneg %p273
      %p422 = pneg %p297
      %p423 = pneg %p294
      %p424 = pneg %p323
      %p425 = pneg %p320
      %p426 = scmp.lt.s32.totalorder %s24, 1
      %s427 = scalar_select %p426, %s24, 1
      %s428 = smul.addr %s427, 9
      %s429 = smul.addr %s428, 8
      %s430 = scalar_lea.vmem %s13, %s429
      %p431 = scmp.lt.s32.totalorder %s24, 1
      %s432 = scalar_select %p431, %s24, 1
      %s433 = smul.addr %s432, 2
      %s434 = smul.addr %s433, 2
      %s435 = scalar_lea.vmem %s0, %s434
      %p436 = scmp.lt.s32.totalorder %s24, 1
      %s437 = scalar_select %p436, %s24, 1
      %s438 = smul.addr %s437, 9
      %s439 = smul.addr %s438, 8
      %s440 = scalar_lea.vmem %s13, %s439
      %v442 = vld [vmem:[%s2] sm:$0xff]
      %v443 = vld [vmem:[%s2 + $0x8] sm:$0x1]
      %444 = vst [vmem:[#allocation2] sm:$0xff] 0
      %445 = vst [vmem:[#allocation2 + $0x8] sm:$0xff] 0
      %vm446 = vcmask 1041408
      %vm447 = vcmask 1043458
      %vm448 = vmor %vm447, %vm446
      %vm449 = vcmask 521220
      %vm450 = vmor %vm449, %vm448
      %451 = vst.msk [vmem:[#allocation2 + $0x10] sm:$0x3f] %vm450, 0
      %452 = vst [vmem:[#allocation3] sm:$0xff] 0
      %453 = vst [vmem:[#allocation3 + $0x8] sm:$0xff] 0
      %454 = vst.msk [vmem:[#allocation3 + $0x10] sm:$0x3f] %vm450, 0
      %v455 = vld [vmem:[%s435] sm:$0xf]
      %v456 = vld [vmem:[%s1] sm:$0xff]
      %v457 = vld [vmem:[%s1 + $0x8] sm:$0xff]
      %v458 = vld [vmem:[%s1 + $0x10] sm:$0xff]
      %v459 = vld [vmem:[%s1 + $0x18] sm:$0xff]
      %v460 = vld [vmem:[%s1 + $0x20] sm:$0xf]
      %v461 = vld [vmem:[%s1 + $0x24] sm:$0xff]
      %v462 = vld [vmem:[%s1 + $0x2c] sm:$0xff]
      %v463 = vld [vmem:[%s1 + $0x34] sm:$0xff]
      %v464 = vld [vmem:[%s1 + $0x3c] sm:$0xff]
      %v465 = vld [vmem:[%s1 + $0x44] sm:$0xf]
      %v466 = vld [vmem:[%s1 + $0x48] sm:$0xff]
      %v467 = vld [vmem:[%s1 + $0x50] sm:$0xff]
      %v468 = vld [vmem:[%s1 + $0x58] sm:$0xff]
      %v469 = vld [vmem:[%s1 + $0x60] sm:$0xff]
      %v470 = vld [vmem:[%s1 + $0x68] sm:$0xf]
      %v471 = vld [vmem:[%s1 + $0x6c] sm:$0xff]
      %v472 = vld [vmem:[%s1 + $0x74] sm:$0xff]
      %v473 = vld [vmem:[%s1 + $0x7c] sm:$0xff]
      %v474 = vld [vmem:[%s1 + $0x84] sm:$0xff]
      %v475 = vld [vmem:[%s1 + $0x8c] sm:$0xf]
      %v476 = vld [vmem:[%s1 + $0x90] sm:$0xff]
      %v477 = vld [vmem:[%s1 + $0x98] sm:$0xff]
      %v478 = vld [vmem:[%s1 + $0xa0] sm:$0xff]
      %v479 = vld [vmem:[%s1 + $0xa8] sm:$0xff]
      %v480 = vld [vmem:[%s1 + $0xb0] sm:$0xf]
      %v481 = vld [vmem:[%s1 + $0xb4] sm:$0xff]
      %v482 = vld [vmem:[%s1 + $0xbc] sm:$0xff]
      %v483 = vld [vmem:[%s1 + $0xc4] sm:$0xff]
      %v484 = vld [vmem:[%s1 + $0xcc] sm:$0xff]
      %v485 = vld [vmem:[%s1 + $0xd4] sm:$0xf]
      %v486 = vld [vmem:[%s1 + $0xd8] sm:$0xff]
      %v487 = vld [vmem:[%s1 + $0xe0] sm:$0xff]
      %v488 = vld [vmem:[%s1 + $0xe8] sm:$0xff]
      %v489 = vld [vmem:[%s1 + $0xf0] sm:$0xff]
      %v490 = vld [vmem:[%s1 + $0xf8] sm:$0xf]
      %v491 = vld [vmem:[%s1 + $0xfc] sm:$0xff]
      %v492 = vld [vmem:[%s1 + $0x104] sm:$0xff]
      %v493 = vld [vmem:[%s1 + $0x10c] sm:$0xff]
      %v494 = vld [vmem:[%s1 + $0x114] sm:$0xff]
      %v495 = vld [vmem:[%s1 + $0x11c] sm:$0xf]
      %v496 = vld [vmem:[%s1 + $0x120] sm:$0xff]
      %v497 = vld [vmem:[%s1 + $0x128] sm:$0xff]
      %v498 = vld [vmem:[%s1 + $0x130] sm:$0xff]
      %v499 = vld [vmem:[%s1 + $0x138] sm:$0xff]
      %v500 = vld [vmem:[%s1 + $0x140] sm:$0xf]
      %v501 = vld [vmem:[%s1 + $0x144] sm:$0xff]
      %v502 = vld [vmem:[%s1 + $0x14c] sm:$0xff]
      %v503 = vld [vmem:[%s1 + $0x154] sm:$0xff]
      %v504 = vld [vmem:[%s1 + $0x15c] sm:$0xff]
      %v505 = vld [vmem:[%s1 + $0x164] sm:$0xf]
      %v506 = vld [vmem:[%s1 + $0x168] sm:$0xff]
      %v507 = vld [vmem:[%s1 + $0x170] sm:$0xff]
      %v508 = vld [vmem:[%s1 + $0x178] sm:$0xff]
      %v509 = vld [vmem:[%s1 + $0x180] sm:$0xff]
      %v510 = vld [vmem:[%s1 + $0x188] sm:$0xf]
      %v511 = vld [vmem:[%s1 + $0x18c] sm:$0xff]
      %v512 = vld [vmem:[%s1 + $0x194] sm:$0xff]
      %v513 = vld [vmem:[%s1 + $0x19c] sm:$0xff]
      %v514 = vld [vmem:[%s1 + $0x1a4] sm:$0xff]
      %v515 = vld [vmem:[%s1 + $0x1ac] sm:$0xf]
      %v516 = vld [vmem:[%s1 + $0x1b0] sm:$0xff]
      %v517 = vld [vmem:[%s1 + $0x1b8] sm:$0xff]
      %v518 = vld [vmem:[%s1 + $0x1c0] sm:$0xff]
      %v519 = vld [vmem:[%s1 + $0x1c8] sm:$0xff]
      %v520 = vld [vmem:[%s1 + $0x1d0] sm:$0xf]
      %v521 = vld [vmem:[%s1 + $0x1d4] sm:$0xff]
      %v522 = vld [vmem:[%s1 + $0x1dc] sm:$0xff]
      %v523 = vld [vmem:[%s1 + $0x1e4] sm:$0xff]
      %v524 = vld [vmem:[%s1 + $0x1ec] sm:$0xff]
      %v525 = vld [vmem:[%s1 + $0x1f4] sm:$0xf]
      %v526 = vld [vmem:[%s1 + $0x1f8] sm:$0xff]
      %v527 = vld [vmem:[%s1 + $0x200] sm:$0xff]
      %v528 = vld [vmem:[%s1 + $0x208] sm:$0xff]
      %v529 = vld [vmem:[%s1 + $0x210] sm:$0xff]
      %v530 = vld [vmem:[%s1 + $0x218] sm:$0xf]
      %v531 = vld [vmem:[%s1 + $0x21c] sm:$0xff]
      %v532 = vld [vmem:[%s1 + $0x224] sm:$0xff]
      %v533 = vld [vmem:[%s1 + $0x22c] sm:$0xff]
      %v534 = vld [vmem:[%s1 + $0x234] sm:$0xff]
      %v535 = vld [vmem:[%s1 + $0x23c] sm:$0xf]
      %v536 = vld [vmem:[%s1 + $0x240] sm:$0xff]
      %v537 = vld [vmem:[%s1 + $0x248] sm:$0xff]
      %v538 = vld [vmem:[%s1 + $0x250] sm:$0xff]
      %v539 = vld [vmem:[%s1 + $0x258] sm:$0xff]
      %v540 = vld [vmem:[%s1 + $0x260] sm:$0xf]
      %v541 = vld [vmem:[%s1 + $0x264] sm:$0xff]
      %v542 = vld [vmem:[%s1 + $0x26c] sm:$0xff]
      %v543 = vld [vmem:[%s1 + $0x274] sm:$0xff]
      %v544 = vld [vmem:[%s1 + $0x27c] sm:$0xff]
      %v545 = vld [vmem:[%s1 + $0x284] sm:$0xf]
      %v546 = vld [vmem:[%s1 + $0x288] sm:$0xff]
      %v547 = vld [vmem:[%s1 + $0x290] sm:$0xff]
      %v548 = vld [vmem:[%s1 + $0x298] sm:$0xff]
      %v549 = vld [vmem:[%s1 + $0x2a0] sm:$0xff]
      %v550 = vld [vmem:[%s1 + $0x2a8] sm:$0xf]
      %v551 = vld [vmem:[%s1 + $0x2ac] sm:$0xff]
      %v552 = vld [vmem:[%s1 + $0x2b4] sm:$0xff]
      %v553 = vld [vmem:[%s1 + $0x2bc] sm:$0xff]
      %v554 = vld [vmem:[%s1 + $0x2c4] sm:$0xff]
      %v555 = vld [vmem:[%s1 + $0x2cc] sm:$0xf]
      %v556 = vld [vmem:[%s1 + $0x2d0] sm:$0xff]
      %v557 = vld [vmem:[%s1 + $0x2d8] sm:$0xff]
      %v558 = vld [vmem:[%s1 + $0x2e0] sm:$0xff]
      %v559 = vld [vmem:[%s1 + $0x2e8] sm:$0xff]
      %v560 = vld [vmem:[%s1 + $0x2f0] sm:$0xf]
      %v561 = vld [vmem:[%s1 + $0x2f4] sm:$0xff]
      %v562 = vld [vmem:[%s1 + $0x2fc] sm:$0xff]
      %v563 = vld [vmem:[%s1 + $0x304] sm:$0xff]
      %v564 = vld [vmem:[%s1 + $0x30c] sm:$0xff]
      %v565 = vld [vmem:[%s1 + $0x314] sm:$0xf]
      %v566 = vld [vmem:[%s1 + $0x318] sm:$0xff]
      %v567 = vld [vmem:[%s1 + $0x320] sm:$0xff]
      %v568 = vld [vmem:[%s1 + $0x328] sm:$0xff]
      %v569 = vld [vmem:[%s1 + $0x330] sm:$0xff]
      %v570 = vld [vmem:[%s1 + $0x338] sm:$0xf]
      %v571 = vld [vmem:[%s1 + $0x33c] sm:$0xff]
      %v572 = vld [vmem:[%s1 + $0x344] sm:$0xff]
      %v573 = vld [vmem:[%s1 + $0x34c] sm:$0xff]
      %v574 = vld [vmem:[%s1 + $0x354] sm:$0xff]
      %v575 = vld [vmem:[%s1 + $0x35c] sm:$0xf]
      %v576 = vld [vmem:[%s1 + $0x360] sm:$0xff]
      %v577 = vld [vmem:[%s1 + $0x368] sm:$0xff]
      %v578 = vld [vmem:[%s1 + $0x370] sm:$0xff]
      %v579 = vld [vmem:[%s1 + $0x378] sm:$0xff]
      %v580 = vld [vmem:[%s1 + $0x380] sm:$0xf]
      %v581 = vld [vmem:[%s1 + $0x384] sm:$0xff]
      %v582 = vld [vmem:[%s1 + $0x38c] sm:$0xff]
      %v583 = vld [vmem:[%s1 + $0x394] sm:$0xff]
      %v584 = vld [vmem:[%s1 + $0x39c] sm:$0xff]
      %v585 = vld [vmem:[%s1 + $0x3a4] sm:$0xf]
      %v586 = vld [vmem:[%s1 + $0x3a8] sm:$0xff]
      %v587 = vld [vmem:[%s1 + $0x3b0] sm:$0xff]
      %v588 = vld [vmem:[%s1 + $0x3b8] sm:$0xff]
      %v589 = vld [vmem:[%s1 + $0x3c0] sm:$0xff]
      %v590 = vld [vmem:[%s1 + $0x3c8] sm:$0xf]
      %v591 = vld [vmem:[%s1 + $0x3cc] sm:$0xff]
      %v592 = vld [vmem:[%s1 + $0x3d4] sm:$0xff]
      %v593 = vld [vmem:[%s1 + $0x3dc] sm:$0xff]
      %v594 = vld [vmem:[%s1 + $0x3e4] sm:$0xff]
      %v595 = vld [vmem:[%s1 + $0x3ec] sm:$0xf]
      %v596 = vld [vmem:[%s1 + $0x3f0] sm:$0xff]
      %v597 = vld [vmem:[%s1 + $0x3f8] sm:$0xff]
      %v598 = vld [vmem:[%s1 + $0x400] sm:$0xff]
      %v599 = vld [vmem:[%s1 + $0x408] sm:$0xff]
      %v600 = vld [vmem:[%s1 + $0x410] sm:$0xf]
      %v601 = vld [vmem:[%s1 + $0x414] sm:$0xff]
      %v602 = vld [vmem:[%s1 + $0x41c] sm:$0xff]
      %v603 = vld [vmem:[%s1 + $0x424] sm:$0xff]
      %v604 = vld [vmem:[%s1 + $0x42c] sm:$0xff]
      %v605 = vld [vmem:[%s1 + $0x434] sm:$0xf]
      %v606 = vld [vmem:[%s1 + $0x438] sm:$0xff]
      %v607 = vld [vmem:[%s1 + $0x440] sm:$0xff]
      %v608 = vld [vmem:[%s1 + $0x448] sm:$0xff]
      %v609 = vld [vmem:[%s1 + $0x450] sm:$0xff]
      %v610 = vld [vmem:[%s1 + $0x458] sm:$0xf]
      %v611 = vld [vmem:[%s1 + $0x45c] sm:$0xff]
      %v612 = vld [vmem:[%s1 + $0x464] sm:$0xff]
      %v613 = vld [vmem:[%s1 + $0x46c] sm:$0xff]
      %v614 = vld [vmem:[%s1 + $0x474] sm:$0xff]
      %v615 = vld [vmem:[%s1 + $0x47c] sm:$0xf]
      %617 = vst [vmem:[#allocation1] ss:$4 sm:$0xff] %v455
      %v618 = vld.sshfl [vmem:[#allocation1] sm:$0xff pattern:$0x73625140]
      %v619 = vld.sshfl [vmem:[#allocation1 + $0x8] sm:$0xff pattern:$0x73625140]
      %v782 = vunpack.c.l.b16 %v456
      %v783 = vunpack.c.h.b16 %v456
      %v784 = vunpack.c.l.b16 %v457
      %v785 = vunpack.c.h.b16 %v457
      %v786 = vunpack.c.l.b16 %v458
      %v787 = vunpack.c.h.b16 %v458
      %v788 = vunpack.c.l.b16 %v459
      %v789 = vunpack.c.h.b16 %v459
      %v790 = vunpack.c.l.b16 %v460
      %v791 = vunpack.c.l.b16 %v461
      %v792 = vunpack.c.h.b16 %v461
      %v793 = vunpack.c.l.b16 %v462
      %v794 = vunpack.c.h.b16 %v462
      %v795 = vunpack.c.l.b16 %v463
      %v796 = vunpack.c.h.b16 %v463
      %v797 = vunpack.c.l.b16 %v464
      %v798 = vunpack.c.h.b16 %v464
      %v799 = vunpack.c.l.b16 %v465
      %v800 = vunpack.c.l.b16 %v466
      %v801 = vunpack.c.h.b16 %v466
      %v802 = vunpack.c.l.b16 %v467
      %v803 = vunpack.c.h.b16 %v467
      %v804 = vunpack.c.l.b16 %v468
      %v805 = vunpack.c.h.b16 %v468
      %v806 = vunpack.c.l.b16 %v469
      %v807 = vunpack.c.h.b16 %v469
      %v808 = vunpack.c.l.b16 %v470
      %v809 = vunpack.c.l.b16 %v471
      %v810 = vunpack.c.h.b16 %v471
      %v811 = vunpack.c.l.b16 %v472
      %v812 = vunpack.c.h.b16 %v472
      %v813 = vunpack.c.l.b16 %v473
      %v814 = vunpack.c.h.b16 %v473
      %v815 = vunpack.c.l.b16 %v474
      %v816 = vunpack.c.h.b16 %v474
      %v817 = vunpack.c.l.b16 %v475
      %v818 = vunpack.c.l.b16 %v476
      %v819 = vunpack.c.h.b16 %v476
      %v820 = vunpack.c.l.b16 %v477
      %v821 = vunpack.c.h.b16 %v477
      %v822 = vunpack.c.l.b16 %v478
      %v823 = vunpack.c.h.b16 %v478
      %v824 = vunpack.c.l.b16 %v479
      %v825 = vunpack.c.h.b16 %v479
      %v826 = vunpack.c.l.b16 %v480
      %v827 = vunpack.c.l.b16 %v481
      %v828 = vunpack.c.h.b16 %v481
      %v829 = vunpack.c.l.b16 %v482
      %v830 = vunpack.c.h.b16 %v482
      %v831 = vunpack.c.l.b16 %v483
      %v832 = vunpack.c.h.b16 %v483
      %v833 = vunpack.c.l.b16 %v484
      %v834 = vunpack.c.h.b16 %v484
      %v835 = vunpack.c.l.b16 %v485
      %v836 = vunpack.c.l.b16 %v486
      %v837 = vunpack.c.h.b16 %v486
      %v838 = vunpack.c.l.b16 %v487
      %v839 = vunpack.c.h.b16 %v487
      %v840 = vunpack.c.l.b16 %v488
      %v841 = vunpack.c.h.b16 %v488
      %v842 = vunpack.c.l.b16 %v489
      %v843 = vunpack.c.h.b16 %v489
      %v844 = vunpack.c.l.b16 %v490
      %v845 = vunpack.c.l.b16 %v491
      %v846 = vunpack.c.h.b16 %v491
      %v847 = vunpack.c.l.b16 %v492
      %v848 = vunpack.c.h.b16 %v492
      %v849 = vunpack.c.l.b16 %v493
      %v850 = vunpack.c.h.b16 %v493
      %v851 = vunpack.c.l.b16 %v494
      %v852 = vunpack.c.h.b16 %v494
      %v853 = vunpack.c.l.b16 %v495
      %v854 = vunpack.c.l.b16 %v496
      %v855 = vunpack.c.h.b16 %v496
      %v856 = vunpack.c.l.b16 %v497
      %v857 = vunpack.c.h.b16 %v497
      %v858 = vunpack.c.l.b16 %v498
      %v859 = vunpack.c.h.b16 %v498
      %v860 = vunpack.c.l.b16 %v499
      %v861 = vunpack.c.h.b16 %v499
      %v862 = vunpack.c.l.b16 %v500
      %v863 = vunpack.c.l.b16 %v501
      %v864 = vunpack.c.h.b16 %v501
      %v865 = vunpack.c.l.b16 %v502
      %v866 = vunpack.c.h.b16 %v502
      %v867 = vunpack.c.l.b16 %v503
      %v868 = vunpack.c.h.b16 %v503
      %v869 = vunpack.c.l.b16 %v504
      %v870 = vunpack.c.h.b16 %v504
      %v871 = vunpack.c.l.b16 %v505
      %v872 = vunpack.c.l.b16 %v506
      %v873 = vunpack.c.h.b16 %v506
      %v874 = vunpack.c.l.b16 %v507
      %v875 = vunpack.c.h.b16 %v507
      %v876 = vunpack.c.l.b16 %v508
      %v877 = vunpack.c.h.b16 %v508
      %v878 = vunpack.c.l.b16 %v509
      %v879 = vunpack.c.h.b16 %v509
      %v880 = vunpack.c.l.b16 %v510
      %v881 = vunpack.c.l.b16 %v511
      %v882 = vunpack.c.h.b16 %v511
      %v883 = vunpack.c.l.b16 %v512
      %v884 = vunpack.c.h.b16 %v512
      %v885 = vunpack.c.l.b16 %v513
      %v886 = vunpack.c.h.b16 %v513
      %v887 = vunpack.c.l.b16 %v514
      %v888 = vunpack.c.h.b16 %v514
      %v889 = vunpack.c.l.b16 %v515
      %v890 = vunpack.c.l.b16 %v516
      %v891 = vunpack.c.h.b16 %v516
      %v892 = vunpack.c.l.b16 %v517
      %v893 = vunpack.c.h.b16 %v517
      %v894 = vunpack.c.l.b16 %v518
      %v895 = vunpack.c.h.b16 %v518
      %v896 = vunpack.c.l.b16 %v519
      %v897 = vunpack.c.h.b16 %v519
      %v898 = vunpack.c.l.b16 %v520
      %v899 = vunpack.c.l.b16 %v521
      %v900 = vunpack.c.h.b16 %v521
      %v901 = vunpack.c.l.b16 %v522
      %v902 = vunpack.c.h.b16 %v522
      %v903 = vunpack.c.l.b16 %v523
      %v904 = vunpack.c.h.b16 %v523
      %v905 = vunpack.c.l.b16 %v524
      %v906 = vunpack.c.h.b16 %v524
      %v907 = vunpack.c.l.b16 %v525
      %v908 = vunpack.c.l.b16 %v526
      %v909 = vunpack.c.h.b16 %v526
      %v910 = vunpack.c.l.b16 %v527
      %v911 = vunpack.c.h.b16 %v527
      %v912 = vunpack.c.l.b16 %v528
      %v913 = vunpack.c.h.b16 %v528
      %v914 = vunpack.c.l.b16 %v529
      %v915 = vunpack.c.h.b16 %v529
      %v916 = vunpack.c.l.b16 %v530
      %v917 = vunpack.c.l.b16 %v531
      %v918 = vunpack.c.h.b16 %v531
      %v919 = vunpack.c.l.b16 %v532
      %v920 = vunpack.c.h.b16 %v532
      %v921 = vunpack.c.l.b16 %v533
      %v922 = vunpack.c.h.b16 %v533
      %v923 = vunpack.c.l.b16 %v534
      %v924 = vunpack.c.h.b16 %v534
      %v925 = vunpack.c.l.b16 %v535
      %v926 = vunpack.c.l.b16 %v536
      %v927 = vunpack.c.h.b16 %v536
      %v928 = vunpack.c.l.b16 %v537
      %v929 = vunpack.c.h.b16 %v537
      %v930 = vunpack.c.l.b16 %v538
      %v931 = vunpack.c.h.b16 %v538
      %v932 = vunpack.c.l.b16 %v539
      %v933 = vunpack.c.h.b16 %v539
      %v934 = vunpack.c.l.b16 %v540
      %v935 = vunpack.c.l.b16 %v541
      %v936 = vunpack.c.h.b16 %v541
      %v937 = vunpack.c.l.b16 %v542
      %v938 = vunpack.c.h.b16 %v542
      %v939 = vunpack.c.l.b16 %v543
      %v940 = vunpack.c.h.b16 %v543
      %v941 = vunpack.c.l.b16 %v544
      %v942 = vunpack.c.h.b16 %v544
      %v943 = vunpack.c.l.b16 %v545
      %v944 = vunpack.c.l.b16 %v546
      %v945 = vunpack.c.h.b16 %v546
      %v946 = vunpack.c.l.b16 %v547
      %v947 = vunpack.c.h.b16 %v547
      %v948 = vunpack.c.l.b16 %v548
      %v949 = vunpack.c.h.b16 %v548
      %v950 = vunpack.c.l.b16 %v549
      %v951 = vunpack.c.h.b16 %v549
      %v952 = vunpack.c.l.b16 %v550
      %v953 = vunpack.c.l.b16 %v551
      %v954 = vunpack.c.h.b16 %v551
      %v955 = vunpack.c.l.b16 %v552
      %v956 = vunpack.c.h.b16 %v552
      %v957 = vunpack.c.l.b16 %v553
      %v958 = vunpack.c.h.b16 %v553
      %v959 = vunpack.c.l.b16 %v554
      %v960 = vunpack.c.h.b16 %v554
      %v961 = vunpack.c.l.b16 %v555
      %v962 = vunpack.c.l.b16 %v556
      %v963 = vunpack.c.h.b16 %v556
      %v964 = vunpack.c.l.b16 %v557
      %v965 = vunpack.c.h.b16 %v557
      %v966 = vunpack.c.l.b16 %v558
      %v967 = vunpack.c.h.b16 %v558
      %v968 = vunpack.c.l.b16 %v559
      %v969 = vunpack.c.h.b16 %v559
      %v970 = vunpack.c.l.b16 %v560
      %v971 = vunpack.c.l.b16 %v561
      %v972 = vunpack.c.h.b16 %v561
      %v973 = vunpack.c.l.b16 %v562
      %v974 = vunpack.c.h.b16 %v562
      %v975 = vunpack.c.l.b16 %v563
      %v976 = vunpack.c.h.b16 %v563
      %v977 = vunpack.c.l.b16 %v564
      %v978 = vunpack.c.h.b16 %v564
      %v979 = vunpack.c.l.b16 %v565
      %v980 = vunpack.c.l.b16 %v566
      %v981 = vunpack.c.h.b16 %v566
      %v982 = vunpack.c.l.b16 %v567
      %v983 = vunpack.c.h.b16 %v567
      %v984 = vunpack.c.l.b16 %v568
      %v985 = vunpack.c.h.b16 %v568
      %v986 = vunpack.c.l.b16 %v569
      %v987 = vunpack.c.h.b16 %v569
      %v988 = vunpack.c.l.b16 %v570
      %v989 = vunpack.c.l.b16 %v571
      %v990 = vunpack.c.h.b16 %v571
      %v991 = vunpack.c.l.b16 %v572
      %v992 = vunpack.c.h.b16 %v572
      %v993 = vunpack.c.l.b16 %v573
      %v994 = vunpack.c.h.b16 %v573
      %v995 = vunpack.c.l.b16 %v574
      %v996 = vunpack.c.h.b16 %v574
      %v997 = vunpack.c.l.b16 %v575
      %v998 = vunpack.c.l.b16 %v576
      %v999 = vunpack.c.h.b16 %v576
      %v1000 = vunpack.c.l.b16 %v577
      %v1001 = vunpack.c.h.b16 %v577
      %v1002 = vunpack.c.l.b16 %v578
      %v1003 = vunpack.c.h.b16 %v578
      %v1004 = vunpack.c.l.b16 %v579
      %v1005 = vunpack.c.h.b16 %v579
      %v1006 = vunpack.c.l.b16 %v580
      %v1007 = vunpack.c.l.b16 %v581
      %v1008 = vunpack.c.h.b16 %v581
      %v1009 = vunpack.c.l.b16 %v582
      %v1010 = vunpack.c.h.b16 %v582
      %v1011 = vunpack.c.l.b16 %v583
      %v1012 = vunpack.c.h.b16 %v583
      %v1013 = vunpack.c.l.b16 %v584
      %v1014 = vunpack.c.h.b16 %v584
      %v1015 = vunpack.c.l.b16 %v585
      %v1016 = vunpack.c.l.b16 %v586
      %v1017 = vunpack.c.h.b16 %v586
      %v1018 = vunpack.c.l.b16 %v587
      %v1019 = vunpack.c.h.b16 %v587
      %v1020 = vunpack.c.l.b16 %v588
      %v1021 = vunpack.c.h.b16 %v588
      %v1022 = vunpack.c.l.b16 %v589
      %v1023 = vunpack.c.h.b16 %v589
      %v1024 = vunpack.c.l.b16 %v590
      %v1025 = vunpack.c.l.b16 %v591
      %v1026 = vunpack.c.h.b16 %v591
      %v1027 = vunpack.c.l.b16 %v592
      %v1028 = vunpack.c.h.b16 %v592
      %v1029 = vunpack.c.l.b16 %v593
      %v1030 = vunpack.c.h.b16 %v593
      %v1031 = vunpack.c.l.b16 %v594
      %v1032 = vunpack.c.h.b16 %v594
      %v1033 = vunpack.c.l.b16 %v595
      %v1034 = vunpack.c.l.b16 %v596
      %v1035 = vunpack.c.h.b16 %v596
      %v1036 = vunpack.c.l.b16 %v597
      %v1037 = vunpack.c.h.b16 %v597
      %v1038 = vunpack.c.l.b16 %v598
      %v1039 = vunpack.c.h.b16 %v598
      %v1040 = vunpack.c.l.b16 %v599
      %v1041 = vunpack.c.h.b16 %v599
      %v1042 = vunpack.c.l.b16 %v600
      %v1043 = vunpack.c.l.b16 %v601
      %v1044 = vunpack.c.h.b16 %v601
      %v1045 = vunpack.c.l.b16 %v602
      %v1046 = vunpack.c.h.b16 %v602
      %v1047 = vunpack.c.l.b16 %v603
      %v1048 = vunpack.c.h.b16 %v603
      %v1049 = vunpack.c.l.b16 %v604
      %v1050 = vunpack.c.h.b16 %v604
      %v1051 = vunpack.c.l.b16 %v605
      %v1052 = vunpack.c.l.b16 %v606
      %v1053 = vunpack.c.h.b16 %v606
      %v1054 = vunpack.c.l.b16 %v607
      %v1055 = vunpack.c.h.b16 %v607
      %v1056 = vunpack.c.l.b16 %v608
      %v1057 = vunpack.c.h.b16 %v608
      %v1058 = vunpack.c.l.b16 %v609
      %v1059 = vunpack.c.h.b16 %v609
      %v1060 = vunpack.c.l.b16 %v610
      %v1061 = vunpack.c.l.b16 %v611
      %v1062 = vunpack.c.h.b16 %v611
      %v1063 = vunpack.c.l.b16 %v612
      %v1064 = vunpack.c.h.b16 %v612
      %v1065 = vunpack.c.l.b16 %v613
      %v1066 = vunpack.c.h.b16 %v613
      %v1067 = vunpack.c.l.b16 %v614
      %v1068 = vunpack.c.h.b16 %v614
      %v1069 = vunpack.c.l.b16 %v615
      %v1070 = vpack.c.b16 %v791, %v782
      %v1071 = vpack.c.b16 %v792, %v783
      %v1072 = vpack.c.b16 %v793, %v784
      %v1073 = vpack.c.b16 %v794, %v785
      %v1074 = vpack.c.b16 %v795, %v786
      %v1075 = vpack.c.b16 %v796, %v787
      %v1076 = vpack.c.b16 %v797, %v788
      %v1077 = vpack.c.b16 %v798, %v789
      %v1078 = vpack.c.b16 %v799, %v790
      %v1079 = vpack.c.b16 %v809, %v800
      %v1080 = vpack.c.b16 %v810, %v801
      %v1081 = vpack.c.b16 %v811, %v802
      %v1082 = vpack.c.b16 %v812, %v803
      %v1083 = vpack.c.b16 %v813, %v804
      %v1084 = vpack.c.b16 %v814, %v805
      %v1085 = vpack.c.b16 %v815, %v806
      %v1086 = vpack.c.b16 %v816, %v807
      %v1087 = vpack.c.b16 %v817, %v808
      %v1088 = vpack.c.b16 %v827, %v818
      %v1089 = vpack.c.b16 %v828, %v819
      %v1090 = vpack.c.b16 %v829, %v820
      %v1091 = vpack.c.b16 %v830, %v821
      %v1092 = vpack.c.b16 %v831, %v822
      %v1093 = vpack.c.b16 %v832, %v823
      %v1094 = vpack.c.b16 %v833, %v824
      %v1095 = vpack.c.b16 %v834, %v825
      %v1096 = vpack.c.b16 %v835, %v826
      %v1097 = vpack.c.b16 %v845, %v836
      %v1098 = vpack.c.b16 %v846, %v837
      %v1099 = vpack.c.b16 %v847, %v838
      %v1100 = vpack.c.b16 %v848, %v839
      %v1101 = vpack.c.b16 %v849, %v840
      %v1102 = vpack.c.b16 %v850, %v841
      %v1103 = vpack.c.b16 %v851, %v842
      %v1104 = vpack.c.b16 %v852, %v843
      %v1105 = vpack.c.b16 %v853, %v844
      %v1106 = vpack.c.b16 %v863, %v854
      %v1107 = vpack.c.b16 %v864, %v855
      %v1108 = vpack.c.b16 %v865, %v856
      %v1109 = vpack.c.b16 %v866, %v857
      %v1110 = vpack.c.b16 %v867, %v858
      %v1111 = vpack.c.b16 %v868, %v859
      %v1112 = vpack.c.b16 %v869, %v860
      %v1113 = vpack.c.b16 %v870, %v861
      %v1114 = vpack.c.b16 %v871, %v862
      %v1115 = vpack.c.b16 %v881, %v872
      %v1116 = vpack.c.b16 %v882, %v873
      %v1117 = vpack.c.b16 %v883, %v874
      %v1118 = vpack.c.b16 %v884, %v875
      %v1119 = vpack.c.b16 %v885, %v876
      %v1120 = vpack.c.b16 %v886, %v877
      %v1121 = vpack.c.b16 %v887, %v878
      %v1122 = vpack.c.b16 %v888, %v879
      %v1123 = vpack.c.b16 %v889, %v880
      %v1124 = vpack.c.b16 %v899, %v890
      %v1125 = vpack.c.b16 %v900, %v891
      %v1126 = vpack.c.b16 %v901, %v892
      %v1127 = vpack.c.b16 %v902, %v893
      %v1128 = vpack.c.b16 %v903, %v894
      %v1129 = vpack.c.b16 %v904, %v895
      %v1130 = vpack.c.b16 %v905, %v896
      %v1131 = vpack.c.b16 %v906, %v897
      %v1132 = vpack.c.b16 %v907, %v898
      %v1133 = vpack.c.b16 %v917, %v908
      %v1134 = vpack.c.b16 %v918, %v909
      %v1135 = vpack.c.b16 %v919, %v910
      %v1136 = vpack.c.b16 %v920, %v911
      %v1137 = vpack.c.b16 %v921, %v912
      %v1138 = vpack.c.b16 %v922, %v913
      %v1139 = vpack.c.b16 %v923, %v914
      %v1140 = vpack.c.b16 %v924, %v915
      %v1141 = vpack.c.b16 %v925, %v916
      %v1142 = vpack.c.b16 %v935, %v926
      %v1143 = vpack.c.b16 %v936, %v927
      %v1144 = vpack.c.b16 %v937, %v928
      %v1145 = vpack.c.b16 %v938, %v929
      %v1146 = vpack.c.b16 %v939, %v930
      %v1147 = vpack.c.b16 %v940, %v931
      %v1148 = vpack.c.b16 %v941, %v932
      %v1149 = vpack.c.b16 %v942, %v933
      %v1150 = vpack.c.b16 %v943, %v934
      %v1151 = vpack.c.b16 %v953, %v944
      %v1152 = vpack.c.b16 %v954, %v945
      %v1153 = vpack.c.b16 %v955, %v946
      %v1154 = vpack.c.b16 %v956, %v947
      %v1155 = vpack.c.b16 %v957, %v948
      %v1156 = vpack.c.b16 %v958, %v949
      %v1157 = vpack.c.b16 %v959, %v950
      %v1158 = vpack.c.b16 %v960, %v951
      %v1159 = vpack.c.b16 %v961, %v952
      %v1160 = vpack.c.b16 %v971, %v962
      %v1161 = vpack.c.b16 %v972, %v963
      %v1162 = vpack.c.b16 %v973, %v964
      %v1163 = vpack.c.b16 %v974, %v965
      %v1164 = vpack.c.b16 %v975, %v966
      %v1165 = vpack.c.b16 %v976, %v967
      %v1166 = vpack.c.b16 %v977, %v968
      %v1167 = vpack.c.b16 %v978, %v969
      %v1168 = vpack.c.b16 %v979, %v970
      %v1169 = vpack.c.b16 %v989, %v980
      %v1170 = vpack.c.b16 %v990, %v981
      %v1171 = vpack.c.b16 %v991, %v982
      %v1172 = vpack.c.b16 %v992, %v983
      %v1173 = vpack.c.b16 %v993, %v984
      %v1174 = vpack.c.b16 %v994, %v985
      %v1175 = vpack.c.b16 %v995, %v986
      %v1176 = vpack.c.b16 %v996, %v987
      %v1177 = vpack.c.b16 %v997, %v988
      %v1178 = vpack.c.b16 %v1007, %v998
      %v1179 = vpack.c.b16 %v1008, %v999
      %v1180 = vpack.c.b16 %v1009, %v1000
      %v1181 = vpack.c.b16 %v1010, %v1001
      %v1182 = vpack.c.b16 %v1011, %v1002
      %v1183 = vpack.c.b16 %v1012, %v1003
      %v1184 = vpack.c.b16 %v1013, %v1004
      %v1185 = vpack.c.b16 %v1014, %v1005
      %v1186 = vpack.c.b16 %v1015, %v1006
      %v1187 = vpack.c.b16 %v1025, %v1016
      %v1188 = vpack.c.b16 %v1026, %v1017
      %v1189 = vpack.c.b16 %v1027, %v1018
      %v1190 = vpack.c.b16 %v1028, %v1019
      %v1191 = vpack.c.b16 %v1029, %v1020
      %v1192 = vpack.c.b16 %v1030, %v1021
      %v1193 = vpack.c.b16 %v1031, %v1022
      %v1194 = vpack.c.b16 %v1032, %v1023
      %v1195 = vpack.c.b16 %v1033, %v1024
      %v1196 = vpack.c.b16 %v1043, %v1034
      %v1197 = vpack.c.b16 %v1044, %v1035
      %v1198 = vpack.c.b16 %v1045, %v1036
      %v1199 = vpack.c.b16 %v1046, %v1037
      %v1200 = vpack.c.b16 %v1047, %v1038
      %v1201 = vpack.c.b16 %v1048, %v1039
      %v1202 = vpack.c.b16 %v1049, %v1040
      %v1203 = vpack.c.b16 %v1050, %v1041
      %v1204 = vpack.c.b16 %v1051, %v1042
      %v1205 = vpack.c.b16 %v1061, %v1052
      %v1206 = vpack.c.b16 %v1062, %v1053
      %v1207 = vpack.c.b16 %v1063, %v1054
      %v1208 = vpack.c.b16 %v1064, %v1055
      %v1209 = vpack.c.b16 %v1065, %v1056
      %v1210 = vpack.c.b16 %v1066, %v1057
      %v1211 = vpack.c.b16 %v1067, %v1058
      %v1212 = vpack.c.b16 %v1068, %v1059
      %v1213 = vpack.c.b16 %v1069, %v1060
      %1358 = vmatpush.bf16.msra.mxu0 %v1133
      %1359 = vmatpush.bf16.msra.mxu0 %v1124
      %1360 = vmatpush.bf16.msra.mxu0 %v1115
      %1361 = vmatpush.bf16.msra.mxu0 %v1106
      %1362 = vmatpush.bf16.msra.mxu0 %v1097
      %1363 = vmatpush.bf16.msra.mxu0 %v1088
      %1364 = vmatpush.bf16.msra.mxu0 %v1079
      %1365 = vmatpush.bf16.msra.mxu0 %v1070
      %1366 = vmatmul.bf16.gmra.mxu0 %v618
      %v1367 = vpop.f32.mrf.mxu0
      %v1368 = vadd.f32 0.0, %v1367
      %v1369 = vpop.f32.mrf.mxu0
      %1370 = vdwg.mxu0
      %1371 = vmatpush.bf16.msra.mxu0 %v1205
      %1372 = vmatpush.bf16.msra.mxu0 %v1196
      %1373 = vmatpush.bf16.msra.mxu0 %v1187
      %1374 = vmatpush.bf16.msra.mxu0 %v1178
      %1375 = vmatpush.bf16.msra.mxu0 %v1169
      %1376 = vmatpush.bf16.msra.mxu0 %v1160
      %1377 = vmatpush.bf16.msra.mxu0 %v1151
      %1378 = vmatpush.bf16.msra.mxu0 %v1142
      %1379 = vmatmul.bf16.gmra.mxu0 %v619
      %v1380 = vpop.f32.mrf.mxu0
      %v1381 = vadd.f32 %v1368, %v1380
      %v1382 = vpop.f32.mrf.mxu0
      %1383 = vdwg.mxu0
      %1384 = vmatpush.bf16.msra.mxu0 %v1134
      %1385 = vmatpush.bf16.msra.mxu0 %v1125
      %1386 = vmatpush.bf16.msra.mxu0 %v1116
      %1387 = vmatpush.bf16.msra.mxu0 %v1107
      %1388 = vmatpush.bf16.msra.mxu0 %v1098
      %1389 = vmatpush.bf16.msra.mxu0 %v1089
      %1390 = vmatpush.bf16.msra.mxu0 %v1080
      %1391 = vmatpush.bf16.msra.mxu0 %v1071
      %1392 = vmatmul.bf16.gmra.mxu0 %v618
      %v1393 = vpop.f32.mrf.mxu0
      %v1394 = vadd.f32 0.0, %v1393
      %v1395 = vpop.f32.mrf.mxu0
      %1396 = vdwg.mxu0
      %1397 = vmatpush.bf16.msra.mxu0 %v1206
      %1398 = vmatpush.bf16.msra.mxu0 %v1197
      %1399 = vmatpush.bf16.msra.mxu0 %v1188
      %1400 = vmatpush.bf16.msra.mxu0 %v1179
      %1401 = vmatpush.bf16.msra.mxu0 %v1170
      %1402 = vmatpush.bf16.msra.mxu0 %v1161
      %1403 = vmatpush.bf16.msra.mxu0 %v1152
      %1404 = vmatpush.bf16.msra.mxu0 %v1143
      %1405 = vmatmul.bf16.gmra.mxu0 %v619
      %v1406 = vpop.f32.mrf.mxu0
      %v1407 = vadd.f32 %v1394, %v1406
      %v1408 = vpop.f32.mrf.mxu0
      %1409 = vdwg.mxu0
      %1410 = vmatpush.bf16.msra.mxu0 %v1135
      %1411 = vmatpush.bf16.msra.mxu0 %v1126
      %1412 = vmatpush.bf16.msra.mxu0 %v1117
      %1413 = vmatpush.bf16.msra.mxu0 %v1108
      %1414 = vmatpush.bf16.msra.mxu0 %v1099
      %1415 = vmatpush.bf16.msra.mxu0 %v1090
      %1416 = vmatpush.bf16.msra.mxu0 %v1081
      %1417 = vmatpush.bf16.msra.mxu0 %v1072
      %1418 = vmatmul.bf16.gmra.mxu0 %v618
      %v1419 = vpop.f32.mrf.mxu0
      %v1420 = vadd.f32 0.0, %v1419
      %v1421 = vpop.f32.mrf.mxu0
      %1422 = vdwg.mxu0
      %1423 = vmatpush.bf16.msra.mxu0 %v1207
      %1424 = vmatpush.bf16.msra.mxu0 %v1198
      %1425 = vmatpush.bf16.msra.mxu0 %v1189
      %1426 = vmatpush.bf16.msra.mxu0 %v1180
      %1427 = vmatpush.bf16.msra.mxu0 %v1171
      %1428 = vmatpush.bf16.msra.mxu0 %v1162
      %1429 = vmatpush.bf16.msra.mxu0 %v1153
      %1430 = vmatpush.bf16.msra.mxu0 %v1144
      %1431 = vmatmul.bf16.gmra.mxu0 %v619
      %v1432 = vpop.f32.mrf.mxu0
      %v1433 = vadd.f32 %v1420, %v1432
      %v1434 = vpop.f32.mrf.mxu0
      %1435 = vdwg.mxu0
      %1436 = vmatpush.bf16.msra.mxu0 %v1136
      %1437 = vmatpush.bf16.msra.mxu0 %v1127
      %1438 = vmatpush.bf16.msra.mxu0 %v1118
      %1439 = vmatpush.bf16.msra.mxu0 %v1109
      %1440 = vmatpush.bf16.msra.mxu0 %v1100
      %1441 = vmatpush.bf16.msra.mxu0 %v1091
      %1442 = vmatpush.bf16.msra.mxu0 %v1082
      %1443 = vmatpush.bf16.msra.mxu0 %v1073
      %1444 = vmatmul.bf16.gmra.mxu0 %v618
      %v1445 = vpop.f32.mrf.mxu0
      %v1446 = vadd.f32 0.0, %v1445
      %v1447 = vpop.f32.mrf.mxu0
      %1448 = vdwg.mxu0
      %1449 = vmatpush.bf16.msra.mxu0 %v1208
      %1450 = vmatpush.bf16.msra.mxu0 %v1199
      %1451 = vmatpush.bf16.msra.mxu0 %v1190
      %1452 = vmatpush.bf16.msra.mxu0 %v1181
      %1453 = vmatpush.bf16.msra.mxu0 %v1172
      %1454 = vmatpush.bf16.msra.mxu0 %v1163
      %1455 = vmatpush.bf16.msra.mxu0 %v1154
      %1456 = vmatpush.bf16.msra.mxu0 %v1145
      %1457 = vmatmul.bf16.gmra.mxu0 %v619
      %v1458 = vpop.f32.mrf.mxu0
      %v1459 = vadd.f32 %v1446, %v1458
      %v1460 = vpop.f32.mrf.mxu0
      %1461 = vdwg.mxu0
      %1462 = vmatpush.bf16.msra.mxu0 %v1137
      %1463 = vmatpush.bf16.msra.mxu0 %v1128
      %1464 = vmatpush.bf16.msra.mxu0 %v1119
      %1465 = vmatpush.bf16.msra.mxu0 %v1110
      %1466 = vmatpush.bf16.msra.mxu0 %v1101
      %1467 = vmatpush.bf16.msra.mxu0 %v1092
      %1468 = vmatpush.bf16.msra.mxu0 %v1083
      %1469 = vmatpush.bf16.msra.mxu0 %v1074
      %1470 = vmatmul.bf16.gmra.mxu0 %v618
      %v1471 = vpop.f32.mrf.mxu0
      %v1472 = vadd.f32 0.0, %v1471
      %v1473 = vpop.f32.mrf.mxu0
      %1474 = vdwg.mxu0
      %1475 = vmatpush.bf16.msra.mxu0 %v1209
      %1476 = vmatpush.bf16.msra.mxu0 %v1200
      %1477 = vmatpush.bf16.msra.mxu0 %v1191
      %1478 = vmatpush.bf16.msra.mxu0 %v1182
      %1479 = vmatpush.bf16.msra.mxu0 %v1173
      %1480 = vmatpush.bf16.msra.mxu0 %v1164
      %1481 = vmatpush.bf16.msra.mxu0 %v1155
      %1482 = vmatpush.bf16.msra.mxu0 %v1146
      %1483 = vmatmul.bf16.gmra.mxu0 %v619
      %v1484 = vpop.f32.mrf.mxu0
      %v1485 = vadd.f32 %v1472, %v1484
      %v1486 = vpop.f32.mrf.mxu0
      %1487 = vdwg.mxu0
      %1488 = vmatpush.bf16.msra.mxu0 %v1138
      %1489 = vmatpush.bf16.msra.mxu0 %v1129
      %1490 = vmatpush.bf16.msra.mxu0 %v1120
      %1491 = vmatpush.bf16.msra.mxu0 %v1111
      %1492 = vmatpush.bf16.msra.mxu0 %v1102
      %1493 = vmatpush.bf16.msra.mxu0 %v1093
      %1494 = vmatpush.bf16.msra.mxu0 %v1084
      %1495 = vmatpush.bf16.msra.mxu0 %v1075
      %1496 = vmatmul.bf16.gmra.mxu0 %v618
      %v1497 = vpop.f32.mrf.mxu0
      %v1498 = vadd.f32 0.0, %v1497
      %v1499 = vpop.f32.mrf.mxu0
      %1500 = vdwg.mxu0
      %1501 = vmatpush.bf16.msra.mxu0 %v1210
      %1502 = vmatpush.bf16.msra.mxu0 %v1201
      %1503 = vmatpush.bf16.msra.mxu0 %v1192
      %1504 = vmatpush.bf16.msra.mxu0 %v1183
      %1505 = vmatpush.bf16.msra.mxu0 %v1174
      %1506 = vmatpush.bf16.msra.mxu0 %v1165
      %1507 = vmatpush.bf16.msra.mxu0 %v1156
      %1508 = vmatpush.bf16.msra.mxu0 %v1147
      %1509 = vmatmul.bf16.gmra.mxu0 %v619
      %v1510 = vpop.f32.mrf.mxu0
      %v1511 = vadd.f32 %v1498, %v1510
      %v1512 = vpop.f32.mrf.mxu0
      %1513 = vdwg.mxu0
      %1514 = vmatpush.bf16.msra.mxu0 %v1139
      %1515 = vmatpush.bf16.msra.mxu0 %v1130
      %1516 = vmatpush.bf16.msra.mxu0 %v1121
      %1517 = vmatpush.bf16.msra.mxu0 %v1112
      %1518 = vmatpush.bf16.msra.mxu0 %v1103
      %1519 = vmatpush.bf16.msra.mxu0 %v1094
      %1520 = vmatpush.bf16.msra.mxu0 %v1085
      %1521 = vmatpush.bf16.msra.mxu0 %v1076
      %1522 = vmatmul.bf16.gmra.mxu0 %v618
      %v1523 = vpop.f32.mrf.mxu0
      %v1524 = vadd.f32 0.0, %v1523
      %v1525 = vpop.f32.mrf.mxu0
      %1526 = vdwg.mxu0
      %1527 = vmatpush.bf16.msra.mxu0 %v1211
      %1528 = vmatpush.bf16.msra.mxu0 %v1202
      %1529 = vmatpush.bf16.msra.mxu0 %v1193
      %1530 = vmatpush.bf16.msra.mxu0 %v1184
      %1531 = vmatpush.bf16.msra.mxu0 %v1175
      %1532 = vmatpush.bf16.msra.mxu0 %v1166
      %1533 = vmatpush.bf16.msra.mxu0 %v1157
      %1534 = vmatpush.bf16.msra.mxu0 %v1148
      %1535 = vmatmul.bf16.gmra.mxu0 %v619
      %v1536 = vpop.f32.mrf.mxu0
      %v1537 = vadd.f32 %v1524, %v1536
      %v1538 = vpop.f32.mrf.mxu0
      %1539 = vdwg.mxu0
      %1540 = vmatpush.bf16.msra.mxu0 %v1140
      %1541 = vmatpush.bf16.msra.mxu0 %v1131
      %1542 = vmatpush.bf16.msra.mxu0 %v1122
      %1543 = vmatpush.bf16.msra.mxu0 %v1113
      %1544 = vmatpush.bf16.msra.mxu0 %v1104
      %1545 = vmatpush.bf16.msra.mxu0 %v1095
      %1546 = vmatpush.bf16.msra.mxu0 %v1086
      %1547 = vmatpush.bf16.msra.mxu0 %v1077
      %1548 = vmatmul.bf16.gmra.mxu0 %v618
      %v1549 = vpop.f32.mrf.mxu0
      %v1550 = vadd.f32 0.0, %v1549
      %v1551 = vpop.f32.mrf.mxu0
      %1552 = vdwg.mxu0
      %1553 = vmatpush.bf16.msra.mxu0 %v1212
      %1554 = vmatpush.bf16.msra.mxu0 %v1203
      %1555 = vmatpush.bf16.msra.mxu0 %v1194
      %1556 = vmatpush.bf16.msra.mxu0 %v1185
      %1557 = vmatpush.bf16.msra.mxu0 %v1176
      %1558 = vmatpush.bf16.msra.mxu0 %v1167
      %1559 = vmatpush.bf16.msra.mxu0 %v1158
      %1560 = vmatpush.bf16.msra.mxu0 %v1149
      %1561 = vmatmul.bf16.gmra.mxu0 %v619
      %v1562 = vpop.f32.mrf.mxu0
      %v1563 = vadd.f32 %v1550, %v1562
      %v1564 = vpop.f32.mrf.mxu0
      %1565 = vdwg.mxu0
      %1566 = vmatpush.bf16.msra.mxu0 %v1141
      %1567 = vmatpush.bf16.msra.mxu0 %v1132
      %1568 = vmatpush.bf16.msra.mxu0 %v1123
      %1569 = vmatpush.bf16.msra.mxu0 %v1114
      %1570 = vmatpush.bf16.msra.mxu0 %v1105
      %1571 = vmatpush.bf16.msra.mxu0 %v1096
      %1572 = vmatpush.bf16.msra.mxu0 %v1087
      %1573 = vmatpush.bf16.msra.mxu0 %v1078
      %1574 = vmatmul.bf16.gmra.mxu0 %v618
      %v1575 = vpop.f32.mrf.mxu0
      %v1576 = vadd.f32 0.0, %v1575
      %v1577 = vpop.f32.mrf.mxu0
      %1578 = vdwg.mxu0
      %1579 = vmatpush.bf16.msra.mxu0 %v1213
      %1580 = vmatpush.bf16.msra.mxu0 %v1204
      %1581 = vmatpush.bf16.msra.mxu0 %v1195
      %1582 = vmatpush.bf16.msra.mxu0 %v1186
      %1583 = vmatpush.bf16.msra.mxu0 %v1177
      %1584 = vmatpush.bf16.msra.mxu0 %v1168
      %1585 = vmatpush.bf16.msra.mxu0 %v1159
      %1586 = vmatpush.bf16.msra.mxu0 %v1150
      %1587 = vmatmul.bf16.gmra.mxu0 %v619
      %v1588 = vpop.f32.mrf.mxu0
      %v1589 = vadd.f32 %v1576, %v1588
      %v1590 = vpop.f32.mrf.mxu0
      %1591 = vdwg.mxu0
      %v1592 = vpack.c.bf16 %v1407, %v1381
      %v1593 = vpack.c.bf16 %v1459, %v1433
      %v1594 = vpack.c.bf16 %v1511, %v1485
      %v1595 = vpack.c.bf16 %v1563, %v1537
      %v1596 = vpack.c.bf16 %v1589, %v1589
      %v1602 = vrot.slane %v1592, 2
      %v1603 = vrot.slane %v1593, 4
      %v1604 = vrot.slane %v1593, 6
      %v1605 = vrot.slane %v1594, 2
      %v1606 = vrot.slane %v1595, 4
      %v1607 = vrot.slane %v1595, 6
      %v1608 = vrot.slane %v1596, 2
      %v1611 = vsel %vm446, %v1592, %v1602
      %vm1612 = vcmask 1045508
      %v1615 = vsel %vm1612, %v1603, %v1604
      %vm1616 = vcmask 1043456
      %v1617 = vsel %vm1616, %v1611, %v1615
      %v1620 = vsel %vm446, %v1594, %v1605
      %v1623 = vsel %vm1612, %v1606, %v1607
      %v1624 = vsel %vm1616, %v1620, %v1623
      %v1627 = vsel %vm446, %v1596, %v1608
      %1631 = vst [vmem:[#allocation2 + $0x2] sm:$0xff] %v1617
      %1632 = vst [vmem:[#allocation2 + $0xa] sm:$0xff] %v1624
      %vm1633 = vcmask 517120
      %1634 = vst.msk [vmem:[#allocation2 + $0x12] sm:$0x3] %vm1633, %v1627
      %v1635 = vld [vmem:[%s3] sm:$0x3]
      %v1636 = vld [vmem:[%s6] sm:$0xf]
      %v1637 = vld [vmem:[%s7] sm:$0xf]
      %v1638 = vld [vmem:[#allocation2] sm:$0xff]
      %v1639 = vld [vmem:[#allocation2 + $0x8] sm:$0xff]
      %v1640 = vld [vmem:[#allocation2 + $0x10] sm:$0xf]
      %1642 = vst [vmem:[#allocation1] ss:$2 sm:$0xff] %v1638
      %s1644 = scalar_lea.vmem [#allocation1], 16
      %1645 = vst [vmem:[%s1644] ss:$2 sm:$0xff] %v1639
      %s1647 = scalar_lea.vmem [#allocation1], 32
      %1648 = vst [vmem:[%s1647] ss:$2 sm:$0xff] %v1640
      %v1649 = vld.sshfl [vmem:[#allocation1] sm:$0xff pattern:$0x75643120]
      %v1651 = vld.sshfl [vmem:[#allocation1 + $0x8] sm:$0xff pattern:$0x75643120]
      %v1653 = vld.sshfl [vmem:[#allocation1 + $0x10] sm:$0xff pattern:$0x75643120]
      %v1655 = vld.sshfl [vmem:[#allocation1 + $0x18] sm:$0xff pattern:$0x75643120]
      %v1657 = vld.sshfl [vmem:[#allocation1 + $0x20] sm:$0xff pattern:$0x75643120]
      %1659 = vrot.lane.b32.xlu0 %v1649, 35
      %v1660 = vpop.permute.xlu0 %1659
      %1661 = vrot.lane.b32.xlu0 %v1651, 35
      %v1662 = vpop.permute.xlu0 %1661
      %1663 = vrot.lane.b32.xlu0 %v1653, 35
      %v1664 = vpop.permute.xlu0 %1663
      %1665 = vrot.lane.b32.xlu0 %v1655, 35
      %v1666 = vpop.permute.xlu0 %1665
      %1667 = vrot.lane.b32.xlu0 %v1657, 35
      %v1668 = vpop.permute.xlu0 %1667
      %v1669 = vrot.slane %v1660, 4
      %v1670 = vrot.slane %v1662, 4
      %v1671 = vrot.slane %v1664, 4
      %v1672 = vrot.slane %v1666, 4
      %v1673 = vrot.slane %v1668, 4
      %vm1674 = vcmask 1043456
      %v1675 = vsel %vm1674, %v1669, %v1670
      %vm1676 = vcmask 285696
      %v1677 = vsel %vm1676, %v1660, %v1675
      %v1678 = vsel %vm1674, %v1670, %v1671
      %v1679 = vsel %vm1676, %v1662, %v1678
      %v1680 = vsel %vm1674, %v1671, %v1672
      %v1681 = vsel %vm1676, %v1664, %v1680
      %v1682 = vsel %vm1674, %v1672, %v1673
      %v1683 = vsel %vm1676, %v1666, %v1682
      %v1684 = vsel %vm1676, %v1668, %v1673
      %1690 = vst [vmem:[#allocation4] sm:$0x33] %v1677
      %1691 = vst [vmem:[#allocation4 + $0x8] sm:$0x33] %v1679
      %1692 = vst [vmem:[#allocation4 + $0x10] sm:$0x33] %v1681
      %1693 = vst [vmem:[#allocation4 + $0x18] sm:$0x33] %v1683
      %1694 = vst.msk [vmem:[#allocation4 + $0x20] sm:$0x3] %vm1633, %v1684
      %v1695 = vld [vmem:[#allocation2] sm:$0xff]
      %v1696 = vld [vmem:[#allocation2 + $0x8] sm:$0xff]
      %v1697 = vld [vmem:[#allocation2 + $0x10] sm:$0xf]
      %s1699 = scalar_lea.vmem [#allocation1], 1
      %1700 = vst [vmem:[%s1699] ss:$2 sm:$0xff] %v1695
      %s1702 = scalar_lea.vmem [#allocation1], 17
      %1703 = vst [vmem:[%s1702] ss:$2 sm:$0xff] %v1696
      %s1705 = scalar_lea.vmem [#allocation1], 33
      %1706 = vst [vmem:[%s1705] ss:$2 sm:$0xff] %v1697
      %v1707 = vld.sshfl [vmem:[#allocation1] sm:$0xff pattern:$0x75643120]
      %v1709 = vld.sshfl [vmem:[#allocation1 + $0x8] sm:$0xff pattern:$0x75643120]
      %v1711 = vld.sshfl [vmem:[#allocation1 + $0x10] sm:$0xff pattern:$0x75643120]
      %v1713 = vld.sshfl [vmem:[#allocation1 + $0x18] sm:$0xff pattern:$0x75643120]
      %v1715 = vld.sshfl [vmem:[#allocation1 + $0x20] sm:$0xff pattern:$0x75643120]
      %1717 = vrot.lane.b32.xlu0 %v1707, 34
      %v1718 = vpop.permute.xlu0 %1717
      %1719 = vrot.lane.b32.xlu0 %v1709, 34
      %v1720 = vpop.permute.xlu0 %1719
      %1721 = vrot.lane.b32.xlu0 %v1711, 34
      %v1722 = vpop.permute.xlu0 %1721
      %1723 = vrot.lane.b32.xlu0 %v1713, 34
      %v1724 = vpop.permute.xlu0 %1723
      %1725 = vrot.lane.b32.xlu0 %v1715, 34
      %v1726 = vpop.permute.xlu0 %1725
      %v1727 = vrot.slane %v1718, 4
      %v1728 = vrot.slane %v1720, 4
      %v1729 = vrot.slane %v1722, 4
      %v1730 = vrot.slane %v1724, 4
      %v1731 = vrot.slane %v1726, 4
      %v1732 = vsel %vm1674, %v1727, %v1728
      %vm1733 = vcmask 277504
      %v1734 = vsel %vm1733, %v1718, %v1732
      %v1735 = vsel %vm1674, %v1728, %v1729
      %v1736 = vsel %vm1733, %v1720, %v1735
      %v1737 = vsel %vm1674, %v1729, %v1730
      %v1738 = vsel %vm1733, %v1722, %v1737
      %v1739 = vsel %vm1674, %v1730, %v1731
      %v1740 = vsel %vm1733, %v1724, %v1739
      %v1741 = vsel %vm1733, %v1726, %v1731
      %1747 = vst [vmem:[#allocation4] sm:$0xcc] %v1734
      %1748 = vst [vmem:[#allocation4 + $0x8] sm:$0xcc] %v1736
      %1749 = vst [vmem:[#allocation4 + $0x10] sm:$0xcc] %v1738
      %1750 = vst [vmem:[#allocation4 + $0x18] sm:$0xcc] %v1740
      %vm1751 = vcmask 519170
      %1752 = vst.msk [vmem:[#allocation4 + $0x20] sm:$0xc] %vm1751, %v1741
      %v1753 = vld [vmem:[#allocation2] sm:$0xff]
      %v1754 = vld [vmem:[#allocation2 + $0x8] sm:$0xff]
      %v1755 = vld [vmem:[#allocation2 + $0x10] sm:$0xf]
      %1757 = vst [vmem:[#allocation1] ss:$2 sm:$0xff] %v1753
      %s1759 = scalar_lea.vmem [#allocation1], 16
      %1760 = vst [vmem:[%s1759] ss:$2 sm:$0xff] %v1754
      %s1762 = scalar_lea.vmem [#allocation1], 32
      %1763 = vst [vmem:[%s1762] ss:$2 sm:$0xff] %v1755
      %v1764 = vld.sshfl [vmem:[#allocation1] sm:$0xff pattern:$0x75643120]
      %v1766 = vld.sshfl [vmem:[#allocation1 + $0x8] sm:$0xff pattern:$0x75643120]
      %v1768 = vld.sshfl [vmem:[#allocation1 + $0x10] sm:$0xff pattern:$0x75643120]
      %v1770 = vld.sshfl [vmem:[#allocation1 + $0x18] sm:$0xff pattern:$0x75643120]
      %v1772 = vld.sshfl [vmem:[#allocation1 + $0x20] sm:$0xff pattern:$0x75643120]
      %1774 = vrot.lane.b32.xlu0 %v1764, 33
      %v1775 = vpop.permute.xlu0 %1774
      %1776 = vrot.lane.b32.xlu0 %v1766, 33
      %v1777 = vpop.permute.xlu0 %1776
      %1778 = vrot.lane.b32.xlu0 %v1768, 33
      %v1779 = vpop.permute.xlu0 %1778
      %1780 = vrot.lane.b32.xlu0 %v1770, 33
      %v1781 = vpop.permute.xlu0 %1780
      %1782 = vrot.lane.b32.xlu0 %v1772, 33
      %v1783 = vpop.permute.xlu0 %1782
      %v1784 = vrot.slane %v1775, 4
      %v1785 = vrot.slane %v1777, 4
      %v1786 = vrot.slane %v1779, 4
      %v1787 = vrot.slane %v1781, 4
      %v1788 = vrot.slane %v1783, 4
      %v1789 = vsel %vm1674, %v1784, %v1785
      %vm1790 = vcmask 269312
      %v1791 = vsel %vm1790, %v1775, %v1789
      %v1792 = vsel %vm1674, %v1785, %v1786
      %v1793 = vsel %vm1790, %v1777, %v1792
      %v1794 = vsel %vm1674, %v1786, %v1787
      %v1795 = vsel %vm1790, %v1779, %v1794
      %v1796 = vsel %vm1674, %v1787, %v1788
      %v1797 = vsel %vm1790, %v1781, %v1796
      %v1798 = vsel %vm1790, %v1783, %v1788
      %1804 = vst [vmem:[#allocation4 + $0x24] sm:$0x33] %v1791
      %1805 = vst [vmem:[#allocation4 + $0x2c] sm:$0x33] %v1793
      %1806 = vst [vmem:[#allocation4 + $0x34] sm:$0x33] %v1795
      %1807 = vst [vmem:[#allocation4 + $0x3c] sm:$0x33] %v1797
      %1808 = vst.msk [vmem:[#allocation4 + $0x44] sm:$0x3] %vm1633, %v1798
      %v1809 = vld [vmem:[#allocation2] sm:$0xff]
      %v1810 = vld [vmem:[#allocation2 + $0x8] sm:$0xff]
      %v1811 = vld [vmem:[#allocation2 + $0x10] sm:$0xf]
      %s1813 = scalar_lea.vmem [#allocation1], 1
      %1814 = vst [vmem:[%s1813] ss:$2 sm:$0xff] %v1809
      %s1816 = scalar_lea.vmem [#allocation1], 17
      %1817 = vst [vmem:[%s1816] ss:$2 sm:$0xff] %v1810
      %s1819 = scalar_lea.vmem [#allocation1], 33
      %1820 = vst [vmem:[%s1819] ss:$2 sm:$0xff] %v1811
      %v1821 = vld.sshfl [vmem:[#allocation1] sm:$0xff pattern:$0x75643120]
      %v1823 = vld.sshfl [vmem:[#allocation1 + $0x8] sm:$0xff pattern:$0x75643120]
      %v1825 = vld.sshfl [vmem:[#allocation1 + $0x10] sm:$0xff pattern:$0x75643120]
      %v1827 = vld.sshfl [vmem:[#allocation1 + $0x18] sm:$0xff pattern:$0x75643120]
      %v1829 = vld.sshfl [vmem:[#allocation1 + $0x20] sm:$0xff pattern:$0x75643120]
      %1831 = vrot.lane.b32.xlu0 %v1821, 1
      %v1832 = vpop.permute.xlu0 %1831
      %1833 = vrot.lane.b32.xlu0 %v1823, 1
      %v1834 = vpop.permute.xlu0 %1833
      %1835 = vrot.lane.b32.xlu0 %v1825, 1
      %v1836 = vpop.permute.xlu0 %1835
      %1837 = vrot.lane.b32.xlu0 %v1827, 1
      %v1838 = vpop.permute.xlu0 %1837
      %1839 = vrot.lane.b32.xlu0 %v1829, 1
      %v1840 = vpop.permute.xlu0 %1839
      %v1841 = vrot.slane %v1832, 4
      %v1842 = vrot.slane %v1834, 4
      %v1843 = vrot.slane %v1836, 4
      %v1844 = vrot.slane %v1838, 4
      %v1845 = vrot.slane %v1840, 4
      %v1846 = vsel %vm1674, %v1841, %v1842
      %vm1847 = vcmask 7168
      %v1848 = vsel %vm1847, %v1832, %v1846
      %v1849 = vsel %vm1674, %v1842, %v1843
      %v1850 = vsel %vm1847, %v1834, %v1849
      %v1851 = vsel %vm1674, %v1843, %v1844
      %v1852 = vsel %vm1847, %v1836, %v1851
      %v1853 = vsel %vm1674, %v1844, %v1845
      %v1854 = vsel %vm1847, %v1838, %v1853
      %v1855 = vsel %vm1847, %v1840, %v1845
      %1861 = vst [vmem:[#allocation4 + $0x24] sm:$0xcc] %v1848
      %1862 = vst [vmem:[#allocation4 + $0x2c] sm:$0xcc] %v1850
      %1863 = vst [vmem:[#allocation4 + $0x34] sm:$0xcc] %v1852
      %1864 = vst [vmem:[#allocation4 + $0x3c] sm:$0xcc] %v1854
      %1865 = vst.msk [vmem:[#allocation4 + $0x44] sm:$0xc] %vm1751, %v1855
      %v1866 = vld [vmem:[#allocation2 + $0x2] sm:$0xff]
      %v1867 = vld [vmem:[#allocation2 + $0xa] sm:$0xff]
      %v1868 = vld [vmem:[#allocation2 + $0x12] sm:$0x3]
      %1870 = vst [vmem:[#allocation1] ss:$2 sm:$0xff] %v1866
      %s1872 = scalar_lea.vmem [#allocation1], 16
      %1873 = vst [vmem:[%s1872] ss:$2 sm:$0xff] %v1867
      %s1875 = scalar_lea.vmem [#allocation1], 32
      %1876 = vst [vmem:[%s1875] ss:$2 sm:$0xff] %v1868
      %v1877 = vld.sshfl [vmem:[#allocation1] sm:$0xff pattern:$0x75643120]
      %v1878 = vld.sshfl [vmem:[#allocation1 + $0x8] sm:$0xff pattern:$0x75643120]
      %v1879 = vld.sshfl [vmem:[#allocation1 + $0x10] sm:$0xff pattern:$0x75643120]
      %v1880 = vld.sshfl [vmem:[#allocation1 + $0x18] sm:$0xff pattern:$0x75643120]
      %v1881 = vld.sshfl [vmem:[#allocation1 + $0x20] sm:$0xff pattern:$0x75643120]
      %1887 = vst [vmem:[#allocation4 + $0x48] sm:$0x33] %v1877
      %1888 = vst [vmem:[#allocation4 + $0x50] sm:$0x33] %v1878
      %1889 = vst [vmem:[#allocation4 + $0x58] sm:$0x33] %v1879
      %1890 = vst [vmem:[#allocation4 + $0x60] sm:$0x33] %v1880
      %1891 = vst.msk [vmem:[#allocation4 + $0x68] sm:$0x3] %vm1633, %v1881
      %v1892 = vld [vmem:[#allocation2 + $0x2] sm:$0xff]
      %v1893 = vld [vmem:[#allocation2 + $0xa] sm:$0xff]
      %v1894 = vld [vmem:[#allocation2 + $0x12] sm:$0x3]
      %s1896 = scalar_lea.vmem [#allocation1], 1
      %1897 = vst [vmem:[%s1896] ss:$2 sm:$0xff] %v1892
      %s1899 = scalar_lea.vmem [#allocation1], 17
      %1900 = vst [vmem:[%s1899] ss:$2 sm:$0xff] %v1893
      %s1902 = scalar_lea.vmem [#allocation1], 33
      %1903 = vst [vmem:[%s1902] ss:$2 sm:$0xff] %v1894
      %v1904 = vld.sshfl [vmem:[#allocation1] sm:$0xff pattern:$0x75643120]
      %v1906 = vld.sshfl [vmem:[#allocation1 + $0x8] sm:$0xff pattern:$0x75643120]
      %v1908 = vld.sshfl [vmem:[#allocation1 + $0x10] sm:$0xff pattern:$0x75643120]
      %v1910 = vld.sshfl [vmem:[#allocation1 + $0x18] sm:$0xff pattern:$0x75643120]
      %v1912 = vld.sshfl [vmem:[#allocation1 + $0x20] sm:$0xff pattern:$0x75643120]
      %1914 = vrot.lane.b32.xlu0 %v1904, 127
      %v1915 = vpop.permute.xlu0 %1914
      %1916 = vrot.lane.b32.xlu0 %v1906, 127
      %v1917 = vpop.permute.xlu0 %1916
      %1918 = vrot.lane.b32.xlu0 %v1908, 127
      %v1919 = vpop.permute.xlu0 %1918
      %1920 = vrot.lane.b32.xlu0 %v1910, 127
      %v1921 = vpop.permute.xlu0 %1920
      %1922 = vrot.lane.b32.xlu0 %v1912, 127
      %v1923 = vpop.permute.xlu0 %1922
      %v1924 = vrot.slane %v1915, 4
      %v1925 = vrot.slane %v1917, 4
      %v1926 = vrot.slane %v1919, 4
      %v1927 = vrot.slane %v1921, 4
      %v1928 = vrot.slane %v1923, 4
      %v1929 = vsel %vm1674, %v1924, %v1925
      %vm1930 = vcmask 1039360
      %v1931 = vsel %vm1930, %v1915, %v1929
      %v1932 = vsel %vm1674, %v1925, %v1926
      %v1933 = vsel %vm1930, %v1917, %v1932
      %v1934 = vsel %vm1674, %v1926, %v1927
      %v1935 = vsel %vm1930, %v1919, %v1934
      %v1936 = vsel %vm1674, %v1927, %v1928
      %v1937 = vsel %vm1930, %v1921, %v1936
      %1943 = vst [vmem:[#allocation4 + $0x48] sm:$0xcc] %v1931
      %1944 = vst [vmem:[#allocation4 + $0x50] sm:$0xcc] %v1933
      %1945 = vst [vmem:[#allocation4 + $0x58] sm:$0xcc] %v1935
      %1946 = vst [vmem:[#allocation4 + $0x60] sm:$0xcc] %v1937
      %1947 = vst.msk [vmem:[#allocation4 + $0x68] sm:$0xc] %vm1751, %v1923
      %v1948 = vld [vmem:[#allocation2 + $0x2] sm:$0xff]
      %v1949 = vld [vmem:[#allocation2 + $0xa] sm:$0xff]
      %v1950 = vld [vmem:[#allocation2 + $0x12] sm:$0x3]
      %1952 = vst [vmem:[#allocation1] ss:$2 sm:$0xff] %v1948
      %s1954 = scalar_lea.vmem [#allocation1], 16
      %1955 = vst [vmem:[%s1954] ss:$2 sm:$0xff] %v1949
      %s1957 = scalar_lea.vmem [#allocation1], 32
      %1958 = vst [vmem:[%s1957] ss:$2 sm:$0xff] %v1950
      %v1959 = vld.sshfl [vmem:[#allocation1] sm:$0xff pattern:$0x75643120]
      %v1961 = vld.sshfl [vmem:[#allocation1 + $0x8] sm:$0xff pattern:$0x75643120]
      %v1963 = vld.sshfl [vmem:[#allocation1 + $0x10] sm:$0xff pattern:$0x75643120]
      %v1965 = vld.sshfl [vmem:[#allocation1 + $0x18] sm:$0xff pattern:$0x75643120]
      %v1967 = vld.sshfl [vmem:[#allocation1 + $0x20] sm:$0xff pattern:$0x75643120]
      %1969 = vrot.lane.b32.xlu0 %v1959, 95
      %v1970 = vpop.permute.xlu0 %1969
      %1971 = vrot.lane.b32.xlu0 %v1961, 95
      %v1972 = vpop.permute.xlu0 %1971
      %1973 = vrot.lane.b32.xlu0 %v1963, 95
      %v1974 = vpop.permute.xlu0 %1973
      %1975 = vrot.lane.b32.xlu0 %v1965, 95
      %v1976 = vpop.permute.xlu0 %1975
      %1977 = vrot.lane.b32.xlu0 %v1967, 95
      %v1978 = vpop.permute.xlu0 %1977
      %v1979 = vrot.slane %v1970, 4
      %v1980 = vrot.slane %v1972, 4
      %v1981 = vrot.slane %v1974, 4
      %v1982 = vrot.slane %v1976, 4
      %v1983 = vrot.slane %v1978, 4
      %v1984 = vsel %vm1674, %v1979, %v1980
      %vm1985 = vcmask 777216
      %v1986 = vsel %vm1985, %v1970, %v1984
      %v1987 = vsel %vm1674, %v1980, %v1981
      %v1988 = vsel %vm1985, %v1972, %v1987
      %v1989 = vsel %vm1674, %v1981, %v1982
      %v1990 = vsel %vm1985, %v1974, %v1989
      %v1991 = vsel %vm1674, %v1982, %v1983
      %v1992 = vsel %vm1985, %v1976, %v1991
      %1998 = vst [vmem:[#allocation4 + $0x6c] sm:$0x33] %v1986
      %1999 = vst [vmem:[#allocation4 + $0x74] sm:$0x33] %v1988
      %2000 = vst [vmem:[#allocation4 + $0x7c] sm:$0x33] %v1990
      %2001 = vst [vmem:[#allocation4 + $0x84] sm:$0x33] %v1992
      %2002 = vst.msk [vmem:[#allocation4 + $0x8c] sm:$0x3] %vm1633, %v1978
      %v2003 = vld [vmem:[#allocation2 + $0x2] sm:$0xff]
      %v2004 = vld [vmem:[#allocation2 + $0xa] sm:$0xff]
      %v2005 = vld [vmem:[#allocation2 + $0x12] sm:$0x3]
      %s2007 = scalar_lea.vmem [#allocation1], 1
      %2008 = vst [vmem:[%s2007] ss:$2 sm:$0xff] %v2003
      %s2010 = scalar_lea.vmem [#allocation1], 17
      %2011 = vst [vmem:[%s2010] ss:$2 sm:$0xff] %v2004
      %s2013 = scalar_lea.vmem [#allocation1], 33
      %2014 = vst [vmem:[%s2013] ss:$2 sm:$0xff] %v2005
      %v2015 = vld.sshfl [vmem:[#allocation1] sm:$0xff pattern:$0x75643120]
      %v2017 = vld.sshfl [vmem:[#allocation1 + $0x8] sm:$0xff pattern:$0x75643120]
      %v2019 = vld.sshfl [vmem:[#allocation1 + $0x10] sm:$0xff pattern:$0x75643120]
      %v2021 = vld.sshfl [vmem:[#allocation1 + $0x18] sm:$0xff pattern:$0x75643120]
      %v2023 = vld.sshfl [vmem:[#allocation1 + $0x20] sm:$0xff pattern:$0x75643120]
      %2025 = vrot.lane.b32.xlu0 %v2015, 94
      %v2026 = vpop.permute.xlu0 %2025
      %2027 = vrot.lane.b32.xlu0 %v2017, 94
      %v2028 = vpop.permute.xlu0 %2027
      %2029 = vrot.lane.b32.xlu0 %v2019, 94
      %v2030 = vpop.permute.xlu0 %2029
      %2031 = vrot.lane.b32.xlu0 %v2021, 94
      %v2032 = vpop.permute.xlu0 %2031
      %2033 = vrot.lane.b32.xlu0 %v2023, 94
      %v2034 = vpop.permute.xlu0 %2033
      %v2035 = vrot.slane %v2026, 4
      %v2036 = vrot.slane %v2028, 4
      %v2037 = vrot.slane %v2030, 4
      %v2038 = vrot.slane %v2032, 4
      %v2039 = vrot.slane %v2034, 4
      %v2040 = vsel %vm1674, %v2035, %v2036
      %vm2041 = vcmask 769024
      %v2042 = vsel %vm2041, %v2026, %v2040
      %v2043 = vsel %vm1674, %v2036, %v2037
      %v2044 = vsel %vm2041, %v2028, %v2043
      %v2045 = vsel %vm1674, %v2037, %v2038
      %v2046 = vsel %vm2041, %v2030, %v2045
      %v2047 = vsel %vm1674, %v2038, %v2039
      %v2048 = vsel %vm2041, %v2032, %v2047
      %2054 = vst [vmem:[#allocation4 + $0x6c] sm:$0xcc] %v2042
      %2055 = vst [vmem:[#allocation4 + $0x74] sm:$0xcc] %v2044
      %2056 = vst [vmem:[#allocation4 + $0x7c] sm:$0xcc] %v2046
      %2057 = vst [vmem:[#allocation4 + $0x84] sm:$0xcc] %v2048
      %2058 = vst.msk [vmem:[#allocation4 + $0x8c] sm:$0xc] %vm1751, %v2034
      %v2059 = vld [vmem:[#allocation2 + $0x2] sm:$0xff]
      %v2060 = vld [vmem:[#allocation2 + $0xa] sm:$0xff]
      %v2061 = vld [vmem:[#allocation2 + $0x12] sm:$0x3]
      %2063 = vst [vmem:[#allocation1] ss:$2 sm:$0xff] %v2059
      %s2065 = scalar_lea.vmem [#allocation1], 16
      %2066 = vst [vmem:[%s2065] ss:$2 sm:$0xff] %v2060
      %s2068 = scalar_lea.vmem [#allocation1], 32
      %2069 = vst [vmem:[%s2068] ss:$2 sm:$0xff] %v2061
      %v2070 = vld.sshfl [vmem:[#allocation1] sm:$0xff pattern:$0x75643120]
      %v2072 = vld.sshfl [vmem:[#allocation1 + $0x8] sm:$0xff pattern:$0x75643120]
      %v2074 = vld.sshfl [vmem:[#allocation1 + $0x10] sm:$0xff pattern:$0x75643120]
      %v2076 = vld.sshfl [vmem:[#allocation1 + $0x18] sm:$0xff pattern:$0x75643120]
      %v2078 = vld.sshfl [vmem:[#allocation1 + $0x20] sm:$0xff pattern:$0x75643120]
      %2080 = vrot.lane.b32.xlu0 %v2070, 93
      %v2081 = vpop.permute.xlu0 %2080
      %2082 = vrot.lane.b32.xlu0 %v2072, 93
      %v2083 = vpop.permute.xlu0 %2082
      %2084 = vrot.lane.b32.xlu0 %v2074, 93
      %v2085 = vpop.permute.xlu0 %2084
      %2086 = vrot.lane.b32.xlu0 %v2076, 93
      %v2087 = vpop.permute.xlu0 %2086
      %2088 = vrot.lane.b32.xlu0 %v2078, 93
      %v2089 = vpop.permute.xlu0 %2088
      %v2090 = vrot.slane %v2081, 4
      %v2091 = vrot.slane %v2083, 4
      %v2092 = vrot.slane %v2085, 4
      %v2093 = vrot.slane %v2087, 4
      %v2094 = vrot.slane %v2089, 4
      %v2095 = vsel %vm1674, %v2090, %v2091
      %vm2096 = vcmask 760832
      %v2097 = vsel %vm2096, %v2081, %v2095
      %v2098 = vsel %vm1674, %v2091, %v2092
      %v2099 = vsel %vm2096, %v2083, %v2098
      %v2100 = vsel %vm1674, %v2092, %v2093
      %v2101 = vsel %vm2096, %v2085, %v2100
      %v2102 = vsel %vm1674, %v2093, %v2094
      %v2103 = vsel %vm2096, %v2087, %v2102
      %2109 = vst [vmem:[#allocation4 + $0x90] sm:$0x33] %v2097
      %2110 = vst [vmem:[#allocation4 + $0x98] sm:$0x33] %v2099
      %2111 = vst [vmem:[#allocation4 + $0xa0] sm:$0x33] %v2101
      %2112 = vst [vmem:[#allocation4 + $0xa8] sm:$0x33] %v2103
      %2113 = vst.msk [vmem:[#allocation4 + $0xb0] sm:$0x3] %vm1633, %v2089
      %v2114 = vld [vmem:[#allocation4] sm:$0xff]
      %v2115 = vld [vmem:[#allocation4 + $0x8] sm:$0xff]
      %v2116 = vld [vmem:[#allocation4 + $0x10] sm:$0xff]
      %v2117 = vld [vmem:[#allocation4 + $0x18] sm:$0xff]
      %v2118 = vld [vmem:[#allocation4 + $0x20] sm:$0xf]
      %v2119 = vld [vmem:[#allocation4 + $0x24] sm:$0xff]
      %v2120 = vld [vmem:[#allocation4 + $0x2c] sm:$0xff]
      %v2121 = vld [vmem:[#allocation4 + $0x34] sm:$0xff]
      %v2122 = vld [vmem:[#allocation4 + $0x3c] sm:$0xff]
      %v2123 = vld [vmem:[#allocation4 + $0x44] sm:$0xf]
      %v2124 = vld [vmem:[#allocation4 + $0x48] sm:$0xff]
      %v2125 = vld [vmem:[#allocation4 + $0x50] sm:$0xff]
      %v2126 = vld [vmem:[#allocation4 + $0x58] sm:$0xff]
      %v2127 = vld [vmem:[#allocation4 + $0x60] sm:$0xff]
      %v2128 = vld [vmem:[#allocation4 + $0x68] sm:$0xf]
      %v2129 = vld [vmem:[#allocation4 + $0x6c] sm:$0xff]
      %v2130 = vld [vmem:[#allocation4 + $0x74] sm:$0xff]
      %v2131 = vld [vmem:[#allocation4 + $0x7c] sm:$0xff]
      %v2132 = vld [vmem:[#allocation4 + $0x84] sm:$0xff]
      %v2133 = vld [vmem:[#allocation4 + $0x8c] sm:$0xf]
      %v2134 = vld [vmem:[#allocation4 + $0x90] sm:$0x33]
      %v2135 = vld [vmem:[#allocation4 + $0x98] sm:$0x33]
      %v2136 = vld [vmem:[#allocation4 + $0xa0] sm:$0x33]
      %v2137 = vld [vmem:[#allocation4 + $0xa8] sm:$0x33]
      %v2138 = vld [vmem:[#allocation4 + $0xb0] sm:$0x3]
      %v2164 = vunpack.c.l.b16 %v2114
      %v2165 = vunpack.c.h.b16 %v2114
      %v2166 = vunpack.c.l.b16 %v2115
      %v2167 = vunpack.c.h.b16 %v2115
      %v2168 = vunpack.c.l.b16 %v2116
      %v2169 = vunpack.c.h.b16 %v2116
      %v2170 = vunpack.c.l.b16 %v2117
      %v2171 = vunpack.c.h.b16 %v2117
      %v2172 = vunpack.c.l.b16 %v2118
      %v2173 = vunpack.c.l.b16 %v2119
      %v2174 = vunpack.c.h.b16 %v2119
      %v2175 = vunpack.c.l.b16 %v2120
      %v2176 = vunpack.c.h.b16 %v2120
      %v2177 = vunpack.c.l.b16 %v2121
      %v2178 = vunpack.c.h.b16 %v2121
      %v2179 = vunpack.c.l.b16 %v2122
      %v2180 = vunpack.c.h.b16 %v2122
      %v2181 = vunpack.c.l.b16 %v2123
      %v2182 = vunpack.c.l.b16 %v2124
      %v2183 = vunpack.c.h.b16 %v2124
      %v2184 = vunpack.c.l.b16 %v2125
      %v2185 = vunpack.c.h.b16 %v2125
      %v2186 = vunpack.c.l.b16 %v2126
      %v2187 = vunpack.c.h.b16 %v2126
      %v2188 = vunpack.c.l.b16 %v2127
      %v2189 = vunpack.c.h.b16 %v2127
      %v2190 = vunpack.c.l.b16 %v2128
      %v2191 = vunpack.c.l.b16 %v2129
      %v2192 = vunpack.c.h.b16 %v2129
      %v2193 = vunpack.c.l.b16 %v2130
      %v2194 = vunpack.c.h.b16 %v2130
      %v2195 = vunpack.c.l.b16 %v2131
      %v2196 = vunpack.c.h.b16 %v2131
      %v2197 = vunpack.c.l.b16 %v2132
      %v2198 = vunpack.c.h.b16 %v2132
      %v2199 = vunpack.c.l.b16 %v2133
      %v2200 = vunpack.c.l.b16 %v2134
      %v2201 = vunpack.c.h.b16 %v2134
      %v2202 = vunpack.c.l.b16 %v2135
      %v2203 = vunpack.c.h.b16 %v2135
      %v2204 = vunpack.c.l.b16 %v2136
      %v2205 = vunpack.c.h.b16 %v2136
      %v2206 = vunpack.c.l.b16 %v2137
      %v2207 = vunpack.c.h.b16 %v2137
      %v2208 = vunpack.c.l.b16 %v2138
      %v2209 = vpack.c.b16 %v2173, %v2164
      %v2210 = vpack.c.b16 %v2174, %v2165
      %v2211 = vpack.c.b16 %v2175, %v2166
      %v2212 = vpack.c.b16 %v2176, %v2167
      %v2213 = vpack.c.b16 %v2177, %v2168
      %v2214 = vpack.c.b16 %v2178, %v2169
      %v2215 = vpack.c.b16 %v2179, %v2170
      %v2216 = vpack.c.b16 %v2180, %v2171
      %v2217 = vpack.c.b16 %v2181, %v2172
      %v2218 = vpack.c.b16 %v2191, %v2182
      %v2219 = vpack.c.b16 %v2192, %v2183
      %v2220 = vpack.c.b16 %v2193, %v2184
      %v2221 = vpack.c.b16 %v2194, %v2185
      %v2222 = vpack.c.b16 %v2195, %v2186
      %v2223 = vpack.c.b16 %v2196, %v2187
      %v2224 = vpack.c.b16 %v2197, %v2188
      %v2225 = vpack.c.b16 %v2198, %v2189
      %v2226 = vpack.c.b16 %v2199, %v2190
      %v2227 = vpack.c.b16 %v2200, %v2200
      %v2228 = vpack.c.b16 %v2201, %v2201
      %v2229 = vpack.c.b16 %v2202, %v2202
      %v2230 = vpack.c.b16 %v2203, %v2203
      %v2231 = vpack.c.b16 %v2204, %v2204
      %v2232 = vpack.c.b16 %v2205, %v2205
      %v2233 = vpack.c.b16 %v2206, %v2206
      %v2234 = vpack.c.b16 %v2207, %v2207
      %v2235 = vpack.c.b16 %v2208, %v2208
      %vm2254 = vcmask 293888
      %v2256 = vsel %vm2254, %v1635, 0
      %v2259 = vsel %vm446, %v2227, 0
      %v2262 = vsel %vm446, %v2228, 0
      %v2265 = vsel %vm446, %v2229, 0
      %v2268 = vsel %vm446, %v2230, 0
      %v2271 = vsel %vm446, %v2231, 0
      %v2274 = vsel %vm446, %v2232, 0
      %v2277 = vsel %vm446, %v2233, 0
      %v2280 = vsel %vm446, %v2234, 0
      %v2283 = vsel %vm446, %v2235, 0
      %2285 = vmatpush.bf16.msra.mxu0 0
      %2286 = vmatpush.bf16.msra.mxu0 0
      %2287 = vmatpush.bf16.msra.mxu0 0
      %2288 = vmatpush.bf16.msra.mxu0 0
      %2289 = vmatpush.bf16.msra.mxu0 0
      %2290 = vmatpush.bf16.msra.mxu0 %v2259
      %2291 = vmatpush.bf16.msra.mxu0 %v2218
      %2292 = vmatpush.bf16.msra.mxu0 %v2209
      %2293 = vmatmul.bf16.gmra.mxu0 %v2256
      %v2294 = vpop.f32.mrf.mxu0
      %v2295 = vadd.f32 0.0, %v2294
      %v2296 = vpop.f32.mrf.mxu0
      %2297 = vdwg.mxu0
      %2298 = vmatpush.bf16.msra.mxu0 0
      %2299 = vmatpush.bf16.msra.mxu0 0
      %2300 = vmatpush.bf16.msra.mxu0 0
      %2301 = vmatpush.bf16.msra.mxu0 0
      %2302 = vmatpush.bf16.msra.mxu0 0
      %2303 = vmatpush.bf16.msra.mxu0 %v2262
      %2304 = vmatpush.bf16.msra.mxu0 %v2219
      %2305 = vmatpush.bf16.msra.mxu0 %v2210
      %2306 = vmatmul.bf16.gmra.mxu0 %v2256
      %v2307 = vpop.f32.mrf.mxu0
      %v2308 = vadd.f32 0.0, %v2307
      %v2309 = vpop.f32.mrf.mxu0
      %2310 = vdwg.mxu0
      %2311 = vmatpush.bf16.msra.mxu0 0
      %2312 = vmatpush.bf16.msra.mxu0 0
      %2313 = vmatpush.bf16.msra.mxu0 0
      %2314 = vmatpush.bf16.msra.mxu0 0
      %2315 = vmatpush.bf16.msra.mxu0 0
      %2316 = vmatpush.bf16.msra.mxu0 %v2265
      %2317 = vmatpush.bf16.msra.mxu0 %v2220
      %2318 = vmatpush.bf16.msra.mxu0 %v2211
      %2319 = vmatmul.bf16.gmra.mxu0 %v2256
      %v2320 = vpop.f32.mrf.mxu0
      %v2321 = vadd.f32 0.0, %v2320
      %v2322 = vpop.f32.mrf.mxu0
      %2323 = vdwg.mxu0
      %2324 = vmatpush.bf16.msra.mxu0 0
      %2325 = vmatpush.bf16.msra.mxu0 0
      %2326 = vmatpush.bf16.msra.mxu0 0
      %2327 = vmatpush.bf16.msra.mxu0 0
      %2328 = vmatpush.bf16.msra.mxu0 0
      %2329 = vmatpush.bf16.msra.mxu0 %v2268
      %2330 = vmatpush.bf16.msra.mxu0 %v2221
      %2331 = vmatpush.bf16.msra.mxu0 %v2212
      %2332 = vmatmul.bf16.gmra.mxu0 %v2256
      %v2333 = vpop.f32.mrf.mxu0
      %v2334 = vadd.f32 0.0, %v2333
      %v2335 = vpop.f32.mrf.mxu0
      %2336 = vdwg.mxu0
      %2337 = vmatpush.bf16.msra.mxu0 0
      %2338 = vmatpush.bf16.msra.mxu0 0
      %2339 = vmatpush.bf16.msra.mxu0 0
      %2340 = vmatpush.bf16.msra.mxu0 0
      %2341 = vmatpush.bf16.msra.mxu0 0
      %2342 = vmatpush.bf16.msra.mxu0 %v2271
      %2343 = vmatpush.bf16.msra.mxu0 %v2222
      %2344 = vmatpush.bf16.msra.mxu0 %v2213
      %2345 = vmatmul.bf16.gmra.mxu0 %v2256
      %v2346 = vpop.f32.mrf.mxu0
      %v2347 = vadd.f32 0.0, %v2346
      %v2348 = vpop.f32.mrf.mxu0
      %2349 = vdwg.mxu0
      %2350 = vmatpush.bf16.msra.mxu0 0
      %2351 = vmatpush.bf16.msra.mxu0 0
      %2352 = vmatpush.bf16.msra.mxu0 0
      %2353 = vmatpush.bf16.msra.mxu0 0
      %2354 = vmatpush.bf16.msra.mxu0 0
      %2355 = vmatpush.bf16.msra.mxu0 %v2274
      %2356 = vmatpush.bf16.msra.mxu0 %v2223
      %2357 = vmatpush.bf16.msra.mxu0 %v2214
      %2358 = vmatmul.bf16.gmra.mxu0 %v2256
      %v2359 = vpop.f32.mrf.mxu0
      %v2360 = vadd.f32 0.0, %v2359
      %v2361 = vpop.f32.mrf.mxu0
      %2362 = vdwg.mxu0
      %2363 = vmatpush.bf16.msra.mxu0 0
      %2364 = vmatpush.bf16.msra.mxu0 0
      %2365 = vmatpush.bf16.msra.mxu0 0
      %2366 = vmatpush.bf16.msra.mxu0 0
      %2367 = vmatpush.bf16.msra.mxu0 0
      %2368 = vmatpush.bf16.msra.mxu0 %v2277
      %2369 = vmatpush.bf16.msra.mxu0 %v2224
      %2370 = vmatpush.bf16.msra.mxu0 %v2215
      %2371 = vmatmul.bf16.gmra.mxu0 %v2256
      %v2372 = vpop.f32.mrf.mxu0
      %v2373 = vadd.f32 0.0, %v2372
      %v2374 = vpop.f32.mrf.mxu0
      %2375 = vdwg.mxu0
      %2376 = vmatpush.bf16.msra.mxu0 0
      %2377 = vmatpush.bf16.msra.mxu0 0
      %2378 = vmatpush.bf16.msra.mxu0 0
      %2379 = vmatpush.bf16.msra.mxu0 0
      %2380 = vmatpush.bf16.msra.mxu0 0
      %2381 = vmatpush.bf16.msra.mxu0 %v2280
      %2382 = vmatpush.bf16.msra.mxu0 %v2225
      %2383 = vmatpush.bf16.msra.mxu0 %v2216
      %2384 = vmatmul.bf16.gmra.mxu0 %v2256
      %v2385 = vpop.f32.mrf.mxu0
      %v2386 = vadd.f32 0.0, %v2385
      %v2387 = vpop.f32.mrf.mxu0
      %2388 = vdwg.mxu0
      %2389 = vmatpush.bf16.msra.mxu0 0
      %2390 = vmatpush.bf16.msra.mxu0 0
      %2391 = vmatpush.bf16.msra.mxu0 0
      %2392 = vmatpush.bf16.msra.mxu0 0
      %2393 = vmatpush.bf16.msra.mxu0 0
      %2394 = vmatpush.bf16.msra.mxu0 %v2283
      %2395 = vmatpush.bf16.msra.mxu0 %v2226
      %2396 = vmatpush.bf16.msra.mxu0 %v2217
      %2397 = vmatmul.bf16.gmra.mxu0 %v2256
      %v2398 = vpop.f32.mrf.mxu0
      %v2399 = vadd.f32 0.0, %v2398
      %v2400 = vpop.f32.mrf.mxu0
      %2401 = vdwg.mxu0
      %2403 = vset.pattern.permute.xlu0 0
      %2404 = vperm.xlu0 %2403, %v1636
      %v2405 = vpop.permute.xlu0 %2404
      %v2407 = vmul.f32 %v2295, %v2405
      %v2408 = vmul.f32 %v2308, %v2405
      %v2409 = vmul.f32 %v2321, %v2405
      %v2410 = vmul.f32 %v2334, %v2405
      %v2411 = vmul.f32 %v2347, %v2405
      %v2412 = vmul.f32 %v2360, %v2405
      %v2413 = vmul.f32 %v2373, %v2405
      %v2414 = vmul.f32 %v2386, %v2405
      %v2415 = vmul.f32 %v2399, %v2405
      %2417 = vset.pattern.permute.xlu0 0
      %2418 = vperm.xlu0 %2417, %v1637
      %v2419 = vpop.permute.xlu0 %2418
      %v2421 = vadd.f32 %v2407, %v2419
      %v2422 = vadd.f32 %v2408, %v2419
      %v2423 = vadd.f32 %v2409, %v2419
      %v2424 = vadd.f32 %v2410, %v2419
      %v2425 = vadd.f32 %v2411, %v2419
      %v2426 = vadd.f32 %v2412, %v2419
      %v2427 = vadd.f32 %v2413, %v2419
      %v2428 = vadd.f32 %v2414, %v2419
      %v2429 = vadd.f32 %v2415, %v2419
      %v2430 = vmax.f32 %v2421, 0.0
      %v2431 = vmax.f32 %v2422, 0.0
      %v2432 = vmax.f32 %v2423, 0.0
      %v2433 = vmax.f32 %v2424, 0.0
      %v2434 = vmax.f32 %v2425, 0.0
      %v2435 = vmax.f32 %v2426, 0.0
      %v2436 = vmax.f32 %v2427, 0.0
      %v2437 = vmax.f32 %v2428, 0.0
      %v2438 = vmax.f32 %v2429, 0.0
      %v2441 = vperm.slane %v442, 0
      %v2442 = vperm.slane %v442, 1
      %v2443 = vperm.slane %v442, 2
      %v2444 = vperm.slane %v442, 3
      %v2445 = vperm.slane %v442, 4
      %v2446 = vperm.slane %v442, 5
      %v2447 = vperm.slane %v442, 6
      %v2448 = vperm.slane %v442, 7
      %v2449 = vperm.slane %v443, 0
      %v2459 = vmul.f32 %v2430, %v2441
      %v2460 = vmul.f32 %v2431, %v2442
      %v2461 = vmul.f32 %v2432, %v2443
      %v2462 = vmul.f32 %v2433, %v2444
      %v2463 = vmul.f32 %v2434, %v2445
      %v2464 = vmul.f32 %v2435, %v2446
      %v2465 = vmul.f32 %v2436, %v2447
      %v2466 = vmul.f32 %v2437, %v2448
      %v2467 = vmul.f32 %v2438, %v2449
      %v2468 = vpack.c.bf16 %v2460, %v2459
      %v2469 = vpack.c.bf16 %v2462, %v2461
      %v2470 = vpack.c.bf16 %v2464, %v2463
      %v2471 = vpack.c.bf16 %v2466, %v2465
      %v2472 = vpack.c.bf16 %v2467, %v2467
      %v2478 = vrot.slane %v2468, 2
      %v2479 = vrot.slane %v2469, 4
      %v2480 = vrot.slane %v2469, 6
      %v2481 = vrot.slane %v2470, 2
      %v2482 = vrot.slane %v2471, 4
      %v2483 = vrot.slane %v2471, 6
      %v2484 = vrot.slane %v2472, 2
      %v2487 = vsel %vm446, %v2468, %v2478
      %v2490 = vsel %vm1612, %v2479, %v2480
      %v2491 = vsel %vm1616, %v2487, %v2490
      %v2494 = vsel %vm446, %v2470, %v2481
      %v2497 = vsel %vm1612, %v2482, %v2483
      %v2498 = vsel %vm1616, %v2494, %v2497
      %v2501 = vsel %vm446, %v2472, %v2484
      %2505 = vst [vmem:[#allocation3 + $0x2] sm:$0xff] %v2491
      %2506 = vst [vmem:[#allocation3 + $0xa] sm:$0xff] %v2498
      %2507 = vst.msk [vmem:[#allocation3 + $0x12] sm:$0x3] %vm1633, %v2501
      %v2508 = vld [vmem:[%s4] sm:$0x3]
      %v2509 = vld [vmem:[%s8] sm:$0xf]
      %v2510 = vld [vmem:[#allocation3] sm:$0xff]
      %v2511 = vld [vmem:[#allocation3 + $0x8] sm:$0xff]
      %v2512 = vld [vmem:[#allocation3 + $0x10] sm:$0xf]
      %2514 = vst [vmem:[#allocation1] ss:$2 sm:$0xff] %v2510
      %s2516 = scalar_lea.vmem [#allocation1], 16
      %2517 = vst [vmem:[%s2516] ss:$2 sm:$0xff] %v2511
      %s2519 = scalar_lea.vmem [#allocation1], 32
      %2520 = vst [vmem:[%s2519] ss:$2 sm:$0xff] %v2512
      %v2521 = vld.sshfl [vmem:[#allocation1] sm:$0xff pattern:$0x75643120]
      %v2523 = vld.sshfl [vmem:[#allocation1 + $0x8] sm:$0xff pattern:$0x75643120]
      %v2525 = vld.sshfl [vmem:[#allocation1 + $0x10] sm:$0xff pattern:$0x75643120]
      %v2527 = vld.sshfl [vmem:[#allocation1 + $0x18] sm:$0xff pattern:$0x75643120]
      %v2529 = vld.sshfl [vmem:[#allocation1 + $0x20] sm:$0xff pattern:$0x75643120]
      %2531 = vrot.lane.b32.xlu0 %v2521, 35
      %v2532 = vpop.permute.xlu0 %2531
      %2533 = vrot.lane.b32.xlu0 %v2523, 35
      %v2534 = vpop.permute.xlu0 %2533
      %2535 = vrot.lane.b32.xlu0 %v2525, 35
      %v2536 = vpop.permute.xlu0 %2535
      %2537 = vrot.lane.b32.xlu0 %v2527, 35
      %v2538 = vpop.permute.xlu0 %2537
      %2539 = vrot.lane.b32.xlu0 %v2529, 35
      %v2540 = vpop.permute.xlu0 %2539
      %v2541 = vrot.slane %v2532, 4
      %v2542 = vrot.slane %v2534, 4
      %v2543 = vrot.slane %v2536, 4
      %v2544 = vrot.slane %v2538, 4
      %v2545 = vrot.slane %v2540, 4
      %v2546 = vsel %vm1674, %v2541, %v2542
      %v2547 = vsel %vm1676, %v2532, %v2546
      %v2548 = vsel %vm1674, %v2542, %v2543
      %v2549 = vsel %vm1676, %v2534, %v2548
      %v2550 = vsel %vm1674, %v2543, %v2544
      %v2551 = vsel %vm1676, %v2536, %v2550
      %v2552 = vsel %vm1674, %v2544, %v2545
      %v2553 = vsel %vm1676, %v2538, %v2552
      %v2554 = vsel %vm1676, %v2540, %v2545
      %2560 = vst [vmem:[#allocation4] sm:$0x33] %v2547
      %2561 = vst [vmem:[#allocation4 + $0x8] sm:$0x33] %v2549
      %2562 = vst [vmem:[#allocation4 + $0x10] sm:$0x33] %v2551
      %2563 = vst [vmem:[#allocation4 + $0x18] sm:$0x33] %v2553
      %2564 = vst.msk [vmem:[#allocation4 + $0x20] sm:$0x3] %vm1633, %v2554
      %v2565 = vld [vmem:[#allocation3] sm:$0xff]
      %v2566 = vld [vmem:[#allocation3 + $0x8] sm:$0xff]
      %v2567 = vld [vmem:[#allocation3 + $0x10] sm:$0xf]
      %s2569 = scalar_lea.vmem [#allocation1], 1
      %2570 = vst [vmem:[%s2569] ss:$2 sm:$0xff] %v2565
      %s2572 = scalar_lea.vmem [#allocation1], 17
      %2573 = vst [vmem:[%s2572] ss:$2 sm:$0xff] %v2566
      %s2575 = scalar_lea.vmem [#allocation1], 33
      %2576 = vst [vmem:[%s2575] ss:$2 sm:$0xff] %v2567
      %v2577 = vld.sshfl [vmem:[#allocation1] sm:$0xff pattern:$0x75643120]
      %v2579 = vld.sshfl [vmem:[#allocation1 + $0x8] sm:$0xff pattern:$0x75643120]
      %v2581 = vld.sshfl [vmem:[#allocation1 + $0x10] sm:$0xff pattern:$0x75643120]
      %v2583 = vld.sshfl [vmem:[#allocation1 + $0x18] sm:$0xff pattern:$0x75643120]
      %v2585 = vld.sshfl [vmem:[#allocation1 + $0x20] sm:$0xff pattern:$0x75643120]
      %2587 = vrot.lane.b32.xlu0 %v2577, 34
      %v2588 = vpop.permute.xlu0 %2587
      %2589 = vrot.lane.b32.xlu0 %v2579, 34
      %v2590 = vpop.permute.xlu0 %2589
      %2591 = vrot.lane.b32.xlu0 %v2581, 34
      %v2592 = vpop.permute.xlu0 %2591
      %2593 = vrot.lane.b32.xlu0 %v2583, 34
      %v2594 = vpop.permute.xlu0 %2593
      %2595 = vrot.lane.b32.xlu0 %v2585, 34
      %v2596 = vpop.permute.xlu0 %2595
      %v2597 = vrot.slane %v2588, 4
      %v2598 = vrot.slane %v2590, 4
      %v2599 = vrot.slane %v2592, 4
      %v2600 = vrot.slane %v2594, 4
      %v2601 = vrot.slane %v2596, 4
      %v2602 = vsel %vm1674, %v2597, %v2598
      %v2603 = vsel %vm1733, %v2588, %v2602
      %v2604 = vsel %vm1674, %v2598, %v2599
      %v2605 = vsel %vm1733, %v2590, %v2604
      %v2606 = vsel %vm1674, %v2599, %v2600
      %v2607 = vsel %vm1733, %v2592, %v2606
      %v2608 = vsel %vm1674, %v2600, %v2601
      %v2609 = vsel %vm1733, %v2594, %v2608
      %v2610 = vsel %vm1733, %v2596, %v2601
      %2616 = vst [vmem:[#allocation4] sm:$0xcc] %v2603
      %2617 = vst [vmem:[#allocation4 + $0x8] sm:$0xcc] %v2605
      %2618 = vst [vmem:[#allocation4 + $0x10] sm:$0xcc] %v2607
      %2619 = vst [vmem:[#allocation4 + $0x18] sm:$0xcc] %v2609
      %2620 = vst.msk [vmem:[#allocation4 + $0x20] sm:$0xc] %vm1751, %v2610
      %v2621 = vld [vmem:[#allocation3] sm:$0xff]
      %v2622 = vld [vmem:[#allocation3 + $0x8] sm:$0xff]
      %v2623 = vld [vmem:[#allocation3 + $0x10] sm:$0xf]
      %2625 = vst [vmem:[#allocation1] ss:$2 sm:$0xff] %v2621
      %s2627 = scalar_lea.vmem [#allocation1], 16
      %2628 = vst [vmem:[%s2627] ss:$2 sm:$0xff] %v2622
      %s2630 = scalar_lea.vmem [#allocation1], 32
      %2631 = vst [vmem:[%s2630] ss:$2 sm:$0xff] %v2623
      %v2632 = vld.sshfl [vmem:[#allocation1] sm:$0xff pattern:$0x75643120]
      %v2634 = vld.sshfl [vmem:[#allocation1 + $0x8] sm:$0xff pattern:$0x75643120]
      %v2636 = vld.sshfl [vmem:[#allocation1 + $0x10] sm:$0xff pattern:$0x75643120]
      %v2638 = vld.sshfl [vmem:[#allocation1 + $0x18] sm:$0xff pattern:$0x75643120]
      %v2640 = vld.sshfl [vmem:[#allocation1 + $0x20] sm:$0xff pattern:$0x75643120]
      %2642 = vrot.lane.b32.xlu0 %v2632, 33
      %v2643 = vpop.permute.xlu0 %2642
      %2644 = vrot.lane.b32.xlu0 %v2634, 33
      %v2645 = vpop.permute.xlu0 %2644
      %2646 = vrot.lane.b32.xlu0 %v2636, 33
      %v2647 = vpop.permute.xlu0 %2646
      %2648 = vrot.lane.b32.xlu0 %v2638, 33
      %v2649 = vpop.permute.xlu0 %2648
      %2650 = vrot.lane.b32.xlu0 %v2640, 33
      %v2651 = vpop.permute.xlu0 %2650
      %v2652 = vrot.slane %v2643, 4
      %v2653 = vrot.slane %v2645, 4
      %v2654 = vrot.slane %v2647, 4
      %v2655 = vrot.slane %v2649, 4
      %v2656 = vrot.slane %v2651, 4
      %v2657 = vsel %vm1674, %v2652, %v2653
      %v2658 = vsel %vm1790, %v2643, %v2657
      %v2659 = vsel %vm1674, %v2653, %v2654
      %v2660 = vsel %vm1790, %v2645, %v2659
      %v2661 = vsel %vm1674, %v2654, %v2655
      %v2662 = vsel %vm1790, %v2647, %v2661
      %v2663 = vsel %vm1674, %v2655, %v2656
      %v2664 = vsel %vm1790, %v2649, %v2663
      %v2665 = vsel %vm1790, %v2651, %v2656
      %2671 = vst [vmem:[#allocation4 + $0x24] sm:$0x33] %v2658
      %2672 = vst [vmem:[#allocation4 + $0x2c] sm:$0x33] %v2660
      %2673 = vst [vmem:[#allocation4 + $0x34] sm:$0x33] %v2662
      %2674 = vst [vmem:[#allocation4 + $0x3c] sm:$0x33] %v2664
      %2675 = vst.msk [vmem:[#allocation4 + $0x44] sm:$0x3] %vm1633, %v2665
      %v2676 = vld [vmem:[#allocation3] sm:$0xff]
      %v2677 = vld [vmem:[#allocation3 + $0x8] sm:$0xff]
      %v2678 = vld [vmem:[#allocation3 + $0x10] sm:$0xf]
      %s2680 = scalar_lea.vmem [#allocation1], 1
      %2681 = vst [vmem:[%s2680] ss:$2 sm:$0xff] %v2676
      %s2683 = scalar_lea.vmem [#allocation1], 17
      %2684 = vst [vmem:[%s2683] ss:$2 sm:$0xff] %v2677
      %s2686 = scalar_lea.vmem [#allocation1], 33
      %2687 = vst [vmem:[%s2686] ss:$2 sm:$0xff] %v2678
      %v2688 = vld.sshfl [vmem:[#allocation1] sm:$0xff pattern:$0x75643120]
      %v2690 = vld.sshfl [vmem:[#allocation1 + $0x8] sm:$0xff pattern:$0x75643120]
      %v2692 = vld.sshfl [vmem:[#allocation1 + $0x10] sm:$0xff pattern:$0x75643120]
      %v2694 = vld.sshfl [vmem:[#allocation1 + $0x18] sm:$0xff pattern:$0x75643120]
      %v2696 = vld.sshfl [vmem:[#allocation1 + $0x20] sm:$0xff pattern:$0x75643120]
      %2698 = vrot.lane.b32.xlu0 %v2688, 1
      %v2699 = vpop.permute.xlu0 %2698
      %2700 = vrot.lane.b32.xlu0 %v2690, 1
      %v2701 = vpop.permute.xlu0 %2700
      %2702 = vrot.lane.b32.xlu0 %v2692, 1
      %v2703 = vpop.permute.xlu0 %2702
      %2704 = vrot.lane.b32.xlu0 %v2694, 1
      %v2705 = vpop.permute.xlu0 %2704
      %2706 = vrot.lane.b32.xlu0 %v2696, 1
      %v2707 = vpop.permute.xlu0 %2706
      %v2708 = vrot.slane %v2699, 4
      %v2709 = vrot.slane %v2701, 4
      %v2710 = vrot.slane %v2703, 4
      %v2711 = vrot.slane %v2705, 4
      %v2712 = vrot.slane %v2707, 4
      %v2713 = vsel %vm1674, %v2708, %v2709
      %v2714 = vsel %vm1847, %v2699, %v2713
      %v2715 = vsel %vm1674, %v2709, %v2710
      %v2716 = vsel %vm1847, %v2701, %v2715
      %v2717 = vsel %vm1674, %v2710, %v2711
      %v2718 = vsel %vm1847, %v2703, %v2717
      %v2719 = vsel %vm1674, %v2711, %v2712
      %v2720 = vsel %vm1847, %v2705, %v2719
      %v2721 = vsel %vm1847, %v2707, %v2712
      %2727 = vst [vmem:[#allocation4 + $0x24] sm:$0xcc] %v2714
      %2728 = vst [vmem:[#allocation4 + $0x2c] sm:$0xcc] %v2716
      %2729 = vst [vmem:[#allocation4 + $0x34] sm:$0xcc] %v2718
      %2730 = vst [vmem:[#allocation4 + $0x3c] sm:$0xcc] %v2720
      %2731 = vst.msk [vmem:[#allocation4 + $0x44] sm:$0xc] %vm1751, %v2721
      %v2732 = vld [vmem:[#allocation3 + $0x2] sm:$0xff]
      %v2733 = vld [vmem:[#allocation3 + $0xa] sm:$0xff]
      %v2734 = vld [vmem:[#allocation3 + $0x12] sm:$0x3]
      %2736 = vst [vmem:[#allocation1] ss:$2 sm:$0xff] %v2732
      %s2738 = scalar_lea.vmem [#allocation1], 16
      %2739 = vst [vmem:[%s2738] ss:$2 sm:$0xff] %v2733
      %s2741 = scalar_lea.vmem [#allocation1], 32
      %2742 = vst [vmem:[%s2741] ss:$2 sm:$0xff] %v2734
      %v2743 = vld.sshfl [vmem:[#allocation1] sm:$0xff pattern:$0x75643120]
      %v2744 = vld.sshfl [vmem:[#allocation1 + $0x8] sm:$0xff pattern:$0x75643120]
      %v2745 = vld.sshfl [vmem:[#allocation1 + $0x10] sm:$0xff pattern:$0x75643120]
      %v2746 = vld.sshfl [vmem:[#allocation1 + $0x18] sm:$0xff pattern:$0x75643120]
      %v2747 = vld.sshfl [vmem:[#allocation1 + $0x20] sm:$0xff pattern:$0x75643120]
      %2753 = vst [vmem:[#allocation4 + $0x48] sm:$0x33] %v2743
      %2754 = vst [vmem:[#allocation4 + $0x50] sm:$0x33] %v2744
      %2755 = vst [vmem:[#allocation4 + $0x58] sm:$0x33] %v2745
      %2756 = vst [vmem:[#allocation4 + $0x60] sm:$0x33] %v2746
      %2757 = vst.msk [vmem:[#allocation4 + $0x68] sm:$0x3] %vm1633, %v2747
      %v2758 = vld [vmem:[#allocation3 + $0x2] sm:$0xff]
      %v2759 = vld [vmem:[#allocation3 + $0xa] sm:$0xff]
      %v2760 = vld [vmem:[#allocation3 + $0x12] sm:$0x3]
      %s2762 = scalar_lea.vmem [#allocation1], 1
      %2763 = vst [vmem:[%s2762] ss:$2 sm:$0xff] %v2758
      %s2765 = scalar_lea.vmem [#allocation1], 17
      %2766 = vst [vmem:[%s2765] ss:$2 sm:$0xff] %v2759
      %s2768 = scalar_lea.vmem [#allocation1], 33
      %2769 = vst [vmem:[%s2768] ss:$2 sm:$0xff] %v2760
      %v2770 = vld.sshfl [vmem:[#allocation1] sm:$0xff pattern:$0x75643120]
      %v2772 = vld.sshfl [vmem:[#allocation1 + $0x8] sm:$0xff pattern:$0x75643120]
      %v2774 = vld.sshfl [vmem:[#allocation1 + $0x10] sm:$0xff pattern:$0x75643120]
      %v2776 = vld.sshfl [vmem:[#allocation1 + $0x18] sm:$0xff pattern:$0x75643120]
      %v2778 = vld.sshfl [vmem:[#allocation1 + $0x20] sm:$0xff pattern:$0x75643120]
      %2780 = vrot.lane.b32.xlu0 %v2770, 127
      %v2781 = vpop.permute.xlu0 %2780
      %2782 = vrot.lane.b32.xlu0 %v2772, 127
      %v2783 = vpop.permute.xlu0 %2782
      %2784 = vrot.lane.b32.xlu0 %v2774, 127
      %v2785 = vpop.permute.xlu0 %2784
      %2786 = vrot.lane.b32.xlu0 %v2776, 127
      %v2787 = vpop.permute.xlu0 %2786
      %2788 = vrot.lane.b32.xlu0 %v2778, 127
      %v2789 = vpop.permute.xlu0 %2788
      %v2790 = vrot.slane %v2781, 4
      %v2791 = vrot.slane %v2783, 4
      %v2792 = vrot.slane %v2785, 4
      %v2793 = vrot.slane %v2787, 4
      %v2794 = vrot.slane %v2789, 4
      %v2795 = vsel %vm1674, %v2790, %v2791
      %v2796 = vsel %vm1930, %v2781, %v2795
      %v2797 = vsel %vm1674, %v2791, %v2792
      %v2798 = vsel %vm1930, %v2783, %v2797
      %v2799 = vsel %vm1674, %v2792, %v2793
      %v2800 = vsel %vm1930, %v2785, %v2799
      %v2801 = vsel %vm1674, %v2793, %v2794
      %v2802 = vsel %vm1930, %v2787, %v2801
      %2808 = vst [vmem:[#allocation4 + $0x48] sm:$0xcc] %v2796
      %2809 = vst [vmem:[#allocation4 + $0x50] sm:$0xcc] %v2798
      %2810 = vst [vmem:[#allocation4 + $0x58] sm:$0xcc] %v2800
      %2811 = vst [vmem:[#allocation4 + $0x60] sm:$0xcc] %v2802
      %2812 = vst.msk [vmem:[#allocation4 + $0x68] sm:$0xc] %vm1751, %v2789
      %v2813 = vld [vmem:[#allocation3 + $0x2] sm:$0xff]
      %v2814 = vld [vmem:[#allocation3 + $0xa] sm:$0xff]
      %v2815 = vld [vmem:[#allocation3 + $0x12] sm:$0x3]
      %2817 = vst [vmem:[#allocation1] ss:$2 sm:$0xff] %v2813
      %s2819 = scalar_lea.vmem [#allocation1], 16
      %2820 = vst [vmem:[%s2819] ss:$2 sm:$0xff] %v2814
      %s2822 = scalar_lea.vmem [#allocation1], 32
      %2823 = vst [vmem:[%s2822] ss:$2 sm:$0xff] %v2815
      %v2824 = vld.sshfl [vmem:[#allocation1] sm:$0xff pattern:$0x75643120]
      %v2826 = vld.sshfl [vmem:[#allocation1 + $0x8] sm:$0xff pattern:$0x75643120]
      %v2828 = vld.sshfl [vmem:[#allocation1 + $0x10] sm:$0xff pattern:$0x75643120]
      %v2830 = vld.sshfl [vmem:[#allocation1 + $0x18] sm:$0xff pattern:$0x75643120]
      %v2832 = vld.sshfl [vmem:[#allocation1 + $0x20] sm:$0xff pattern:$0x75643120]
      %2834 = vrot.lane.b32.xlu0 %v2824, 95
      %v2835 = vpop.permute.xlu0 %2834
      %2836 = vrot.lane.b32.xlu0 %v2826, 95
      %v2837 = vpop.permute.xlu0 %2836
      %2838 = vrot.lane.b32.xlu0 %v2828, 95
      %v2839 = vpop.permute.xlu0 %2838
      %2840 = vrot.lane.b32.xlu0 %v2830, 95
      %v2841 = vpop.permute.xlu0 %2840
      %2842 = vrot.lane.b32.xlu0 %v2832, 95
      %v2843 = vpop.permute.xlu0 %2842
      %v2844 = vrot.slane %v2835, 4
      %v2845 = vrot.slane %v2837, 4
      %v2846 = vrot.slane %v2839, 4
      %v2847 = vrot.slane %v2841, 4
      %v2848 = vrot.slane %v2843, 4
      %v2849 = vsel %vm1674, %v2844, %v2845
      %v2850 = vsel %vm1985, %v2835, %v2849
      %v2851 = vsel %vm1674, %v2845, %v2846
      %v2852 = vsel %vm1985, %v2837, %v2851
      %v2853 = vsel %vm1674, %v2846, %v2847
      %v2854 = vsel %vm1985, %v2839, %v2853
      %v2855 = vsel %vm1674, %v2847, %v2848
      %v2856 = vsel %vm1985, %v2841, %v2855
      %2862 = vst [vmem:[#allocation4 + $0x6c] sm:$0x33] %v2850
      %2863 = vst [vmem:[#allocation4 + $0x74] sm:$0x33] %v2852
      %2864 = vst [vmem:[#allocation4 + $0x7c] sm:$0x33] %v2854
      %2865 = vst [vmem:[#allocation4 + $0x84] sm:$0x33] %v2856
      %2866 = vst.msk [vmem:[#allocation4 + $0x8c] sm:$0x3] %vm1633, %v2843
      %v2867 = vld [vmem:[#allocation3 + $0x2] sm:$0xff]
      %v2868 = vld [vmem:[#allocation3 + $0xa] sm:$0xff]
      %v2869 = vld [vmem:[#allocation3 + $0x12] sm:$0x3]
      %s2871 = scalar_lea.vmem [#allocation1], 1
      %2872 = vst [vmem:[%s2871] ss:$2 sm:$0xff] %v2867
      %s2874 = scalar_lea.vmem [#allocation1], 17
      %2875 = vst [vmem:[%s2874] ss:$2 sm:$0xff] %v2868
      %s2877 = scalar_lea.vmem [#allocation1], 33
      %2878 = vst [vmem:[%s2877] ss:$2 sm:$0xff] %v2869
      %v2879 = vld.sshfl [vmem:[#allocation1] sm:$0xff pattern:$0x75643120]
      %v2881 = vld.sshfl [vmem:[#allocation1 + $0x8] sm:$0xff pattern:$0x75643120]
      %v2883 = vld.sshfl [vmem:[#allocation1 + $0x10] sm:$0xff pattern:$0x75643120]
      %v2885 = vld.sshfl [vmem:[#allocation1 + $0x18] sm:$0xff pattern:$0x75643120]
      %v2887 = vld.sshfl [vmem:[#allocation1 + $0x20] sm:$0xff pattern:$0x75643120]
      %2889 = vrot.lane.b32.xlu0 %v2879, 94
      %v2890 = vpop.permute.xlu0 %2889
      %2891 = vrot.lane.b32.xlu0 %v2881, 94
      %v2892 = vpop.permute.xlu0 %2891
      %2893 = vrot.lane.b32.xlu0 %v2883, 94
      %v2894 = vpop.permute.xlu0 %2893
      %2895 = vrot.lane.b32.xlu0 %v2885, 94
      %v2896 = vpop.permute.xlu0 %2895
      %2897 = vrot.lane.b32.xlu0 %v2887, 94
      %v2898 = vpop.permute.xlu0 %2897
      %v2899 = vrot.slane %v2890, 4
      %v2900 = vrot.slane %v2892, 4
      %v2901 = vrot.slane %v2894, 4
      %v2902 = vrot.slane %v2896, 4
      %v2903 = vrot.slane %v2898, 4
      %v2904 = vsel %vm1674, %v2899, %v2900
      %v2905 = vsel %vm2041, %v2890, %v2904
      %v2906 = vsel %vm1674, %v2900, %v2901
      %v2907 = vsel %vm2041, %v2892, %v2906
      %v2908 = vsel %vm1674, %v2901, %v2902
      %v2909 = vsel %vm2041, %v2894, %v2908
      %v2910 = vsel %vm1674, %v2902, %v2903
      %v2911 = vsel %vm2041, %v2896, %v2910
      %2917 = vst [vmem:[#allocation4 + $0x6c] sm:$0xcc] %v2905
      %2918 = vst [vmem:[#allocation4 + $0x74] sm:$0xcc] %v2907
      %2919 = vst [vmem:[#allocation4 + $0x7c] sm:$0xcc] %v2909
      %2920 = vst [vmem:[#allocation4 + $0x84] sm:$0xcc] %v2911
      %2921 = vst.msk [vmem:[#allocation4 + $0x8c] sm:$0xc] %vm1751, %v2898
      %v2922 = vld [vmem:[#allocation3 + $0x2] sm:$0xff]
      %v2923 = vld [vmem:[#allocation3 + $0xa] sm:$0xff]
      %v2924 = vld [vmem:[#allocation3 + $0x12] sm:$0x3]
      %2926 = vst [vmem:[#allocation1] ss:$2 sm:$0xff] %v2922
      %s2928 = scalar_lea.vmem [#allocation1], 16
      %2929 = vst [vmem:[%s2928] ss:$2 sm:$0xff] %v2923
      %s2931 = scalar_lea.vmem [#allocation1], 32
      %2932 = vst [vmem:[%s2931] ss:$2 sm:$0xff] %v2924
      %v2933 = vld.sshfl [vmem:[#allocation1] sm:$0xff pattern:$0x75643120]
      %v2935 = vld.sshfl [vmem:[#allocation1 + $0x8] sm:$0xff pattern:$0x75643120]
      %v2937 = vld.sshfl [vmem:[#allocation1 + $0x10] sm:$0xff pattern:$0x75643120]
      %v2939 = vld.sshfl [vmem:[#allocation1 + $0x18] sm:$0xff pattern:$0x75643120]
      %v2941 = vld.sshfl [vmem:[#allocation1 + $0x20] sm:$0xff pattern:$0x75643120]
      %2943 = vrot.lane.b32.xlu0 %v2933, 93
      %v2944 = vpop.permute.xlu0 %2943
      %2945 = vrot.lane.b32.xlu0 %v2935, 93
      %v2946 = vpop.permute.xlu0 %2945
      %2947 = vrot.lane.b32.xlu0 %v2937, 93
      %v2948 = vpop.permute.xlu0 %2947
      %2949 = vrot.lane.b32.xlu0 %v2939, 93
      %v2950 = vpop.permute.xlu0 %2949
      %2951 = vrot.lane.b32.xlu0 %v2941, 93
      %v2952 = vpop.permute.xlu0 %2951
      %v2953 = vrot.slane %v2944, 4
      %v2954 = vrot.slane %v2946, 4
      %v2955 = vrot.slane %v2948, 4
      %v2956 = vrot.slane %v2950, 4
      %v2957 = vrot.slane %v2952, 4
      %v2958 = vsel %vm1674, %v2953, %v2954
      %v2959 = vsel %vm2096, %v2944, %v2958
      %v2960 = vsel %vm1674, %v2954, %v2955
      %v2961 = vsel %vm2096, %v2946, %v2960
      %v2962 = vsel %vm1674, %v2955, %v2956
      %v2963 = vsel %vm2096, %v2948, %v2962
      %v2964 = vsel %vm1674, %v2956, %v2957
      %v2965 = vsel %vm2096, %v2950, %v2964
      %2971 = vst [vmem:[#allocation4 + $0x90] sm:$0x33] %v2959
      %2972 = vst [vmem:[#allocation4 + $0x98] sm:$0x33] %v2961
      %2973 = vst [vmem:[#allocation4 + $0xa0] sm:$0x33] %v2963
      %2974 = vst [vmem:[#allocation4 + $0xa8] sm:$0x33] %v2965
      %2975 = vst.msk [vmem:[#allocation4 + $0xb0] sm:$0x3] %vm1633, %v2952
      %v2976 = vld [vmem:[#allocation4] sm:$0xff]
      %v2977 = vld [vmem:[#allocation4 + $0x8] sm:$0xff]
      %v2978 = vld [vmem:[#allocation4 + $0x10] sm:$0xff]
      %v2979 = vld [vmem:[#allocation4 + $0x18] sm:$0xff]
      %v2980 = vld [vmem:[#allocation4 + $0x20] sm:$0xf]
      %v2981 = vld [vmem:[#allocation4 + $0x24] sm:$0xff]
      %v2982 = vld [vmem:[#allocation4 + $0x2c] sm:$0xff]
      %v2983 = vld [vmem:[#allocation4 + $0x34] sm:$0xff]
      %v2984 = vld [vmem:[#allocation4 + $0x3c] sm:$0xff]
      %v2985 = vld [vmem:[#allocation4 + $0x44] sm:$0xf]
      %v2986 = vld [vmem:[#allocation4 + $0x48] sm:$0xff]
      %v2987 = vld [vmem:[#allocation4 + $0x50] sm:$0xff]
      %v2988 = vld [vmem:[#allocation4 + $0x58] sm:$0xff]
      %v2989 = vld [vmem:[#allocation4 + $0x60] sm:$0xff]
      %v2990 = vld [vmem:[#allocation4 + $0x68] sm:$0xf]
      %v2991 = vld [vmem:[#allocation4 + $0x6c] sm:$0xff]
      %v2992 = vld [vmem:[#allocation4 + $0x74] sm:$0xff]
      %v2993 = vld [vmem:[#allocation4 + $0x7c] sm:$0xff]
      %v2994 = vld [vmem:[#allocation4 + $0x84] sm:$0xff]
      %v2995 = vld [vmem:[#allocation4 + $0x8c] sm:$0xf]
      %v2996 = vld [vmem:[#allocation4 + $0x90] sm:$0x33]
      %v2997 = vld [vmem:[#allocation4 + $0x98] sm:$0x33]
      %v2998 = vld [vmem:[#allocation4 + $0xa0] sm:$0x33]
      %v2999 = vld [vmem:[#allocation4 + $0xa8] sm:$0x33]
      %v3000 = vld [vmem:[#allocation4 + $0xb0] sm:$0x3]
      %3002 = vset.pattern.permute.xlu0 0
      %3003 = vperm.xlu0 %3002, %v2509
      %v3004 = vpop.permute.xlu0 %3003
      %v3031 = vunpack.c.l.b16 %v2976
      %v3032 = vunpack.c.h.b16 %v2976
      %v3033 = vunpack.c.l.b16 %v2977
      %v3034 = vunpack.c.h.b16 %v2977
      %v3035 = vunpack.c.l.b16 %v2978
      %v3036 = vunpack.c.h.b16 %v2978
      %v3037 = vunpack.c.l.b16 %v2979
      %v3038 = vunpack.c.h.b16 %v2979
      %v3039 = vunpack.c.l.b16 %v2980
      %v3040 = vunpack.c.l.b16 %v2981
      %v3041 = vunpack.c.h.b16 %v2981
      %v3042 = vunpack.c.l.b16 %v2982
      %v3043 = vunpack.c.h.b16 %v2982
      %v3044 = vunpack.c.l.b16 %v2983
      %v3045 = vunpack.c.h.b16 %v2983
      %v3046 = vunpack.c.l.b16 %v2984
      %v3047 = vunpack.c.h.b16 %v2984
      %v3048 = vunpack.c.l.b16 %v2985
      %v3049 = vunpack.c.l.b16 %v2986
      %v3050 = vunpack.c.h.b16 %v2986
      %v3051 = vunpack.c.l.b16 %v2987
      %v3052 = vunpack.c.h.b16 %v2987
      %v3053 = vunpack.c.l.b16 %v2988
      %v3054 = vunpack.c.h.b16 %v2988
      %v3055 = vunpack.c.l.b16 %v2989
      %v3056 = vunpack.c.h.b16 %v2989
      %v3057 = vunpack.c.l.b16 %v2990
      %v3058 = vunpack.c.l.b16 %v2991
      %v3059 = vunpack.c.h.b16 %v2991
      %v3060 = vunpack.c.l.b16 %v2992
      %v3061 = vunpack.c.h.b16 %v2992
      %v3062 = vunpack.c.l.b16 %v2993
      %v3063 = vunpack.c.h.b16 %v2993
      %v3064 = vunpack.c.l.b16 %v2994
      %v3065 = vunpack.c.h.b16 %v2994
      %v3066 = vunpack.c.l.b16 %v2995
      %v3067 = vunpack.c.l.b16 %v2996
      %v3068 = vunpack.c.h.b16 %v2996
      %v3069 = vunpack.c.l.b16 %v2997
      %v3070 = vunpack.c.h.b16 %v2997
      %v3071 = vunpack.c.l.b16 %v2998
      %v3072 = vunpack.c.h.b16 %v2998
      %v3073 = vunpack.c.l.b16 %v2999
      %v3074 = vunpack.c.h.b16 %v2999
      %v3075 = vunpack.c.l.b16 %v3000
      %v3076 = vpack.c.b16 %v3040, %v3031
      %v3077 = vpack.c.b16 %v3041, %v3032
      %v3078 = vpack.c.b16 %v3042, %v3033
      %v3079 = vpack.c.b16 %v3043, %v3034
      %v3080 = vpack.c.b16 %v3044, %v3035
      %v3081 = vpack.c.b16 %v3045, %v3036
      %v3082 = vpack.c.b16 %v3046, %v3037
      %v3083 = vpack.c.b16 %v3047, %v3038
      %v3084 = vpack.c.b16 %v3048, %v3039
      %v3085 = vpack.c.b16 %v3058, %v3049
      %v3086 = vpack.c.b16 %v3059, %v3050
      %v3087 = vpack.c.b16 %v3060, %v3051
      %v3088 = vpack.c.b16 %v3061, %v3052
      %v3089 = vpack.c.b16 %v3062, %v3053
      %v3090 = vpack.c.b16 %v3063, %v3054
      %v3091 = vpack.c.b16 %v3064, %v3055
      %v3092 = vpack.c.b16 %v3065, %v3056
      %v3093 = vpack.c.b16 %v3066, %v3057
      %v3094 = vpack.c.b16 %v3067, %v3067
      %v3095 = vpack.c.b16 %v3068, %v3068
      %v3096 = vpack.c.b16 %v3069, %v3069
      %v3097 = vpack.c.b16 %v3070, %v3070
      %v3098 = vpack.c.b16 %v3071, %v3071
      %v3099 = vpack.c.b16 %v3072, %v3072
      %v3100 = vpack.c.b16 %v3073, %v3073
      %v3101 = vpack.c.b16 %v3074, %v3074
      %v3102 = vpack.c.b16 %v3075, %v3075
      %v3122 = vsel %vm2254, %v2508, 0
      %v3125 = vsel %vm446, %v3094, 0
      %v3128 = vsel %vm446, %v3095, 0
      %v3131 = vsel %vm446, %v3096, 0
      %v3134 = vsel %vm446, %v3097, 0
      %v3137 = vsel %vm446, %v3098, 0
      %v3140 = vsel %vm446, %v3099, 0
      %v3143 = vsel %vm446, %v3100, 0
      %v3146 = vsel %vm446, %v3101, 0
      %v3149 = vsel %vm446, %v3102, 0
      %3151 = vmatpush.bf16.msra.mxu0 0
      %3152 = vmatpush.bf16.msra.mxu0 0
      %3153 = vmatpush.bf16.msra.mxu0 0
      %3154 = vmatpush.bf16.msra.mxu0 0
      %3155 = vmatpush.bf16.msra.mxu0 0
      %3156 = vmatpush.bf16.msra.mxu0 %v3125
      %3157 = vmatpush.bf16.msra.mxu0 %v3085
      %3158 = vmatpush.bf16.msra.mxu0 %v3076
      %3159 = vmatmul.bf16.gmra.mxu0 %v3122
      %v3160 = vpop.f32.mrf.mxu0
      %v3161 = vadd.f32 %v3004, %v3160
      %v3162 = vpop.f32.mrf.mxu0
      %3163 = vdwg.mxu0
      %3164 = vmatpush.bf16.msra.mxu0 0
      %3165 = vmatpush.bf16.msra.mxu0 0
      %3166 = vmatpush.bf16.msra.mxu0 0
      %3167 = vmatpush.bf16.msra.mxu0 0
      %3168 = vmatpush.bf16.msra.mxu0 0
      %3169 = vmatpush.bf16.msra.mxu0 %v3128
      %3170 = vmatpush.bf16.msra.mxu0 %v3086
      %3171 = vmatpush.bf16.msra.mxu0 %v3077
      %3172 = vmatmul.bf16.gmra.mxu0 %v3122
      %v3173 = vpop.f32.mrf.mxu0
      %v3174 = vadd.f32 %v3004, %v3173
      %v3175 = vpop.f32.mrf.mxu0
      %3176 = vdwg.mxu0
      %3177 = vmatpush.bf16.msra.mxu0 0
      %3178 = vmatpush.bf16.msra.mxu0 0
      %3179 = vmatpush.bf16.msra.mxu0 0
      %3180 = vmatpush.bf16.msra.mxu0 0
      %3181 = vmatpush.bf16.msra.mxu0 0
      %3182 = vmatpush.bf16.msra.mxu0 %v3131
      %3183 = vmatpush.bf16.msra.mxu0 %v3087
      %3184 = vmatpush.bf16.msra.mxu0 %v3078
      %3185 = vmatmul.bf16.gmra.mxu0 %v3122
      %v3186 = vpop.f32.mrf.mxu0
      %v3187 = vadd.f32 %v3004, %v3186
      %v3188 = vpop.f32.mrf.mxu0
      %3189 = vdwg.mxu0
      %3190 = vmatpush.bf16.msra.mxu0 0
      %3191 = vmatpush.bf16.msra.mxu0 0
      %3192 = vmatpush.bf16.msra.mxu0 0
      %3193 = vmatpush.bf16.msra.mxu0 0
      %3194 = vmatpush.bf16.msra.mxu0 0
      %3195 = vmatpush.bf16.msra.mxu0 %v3134
      %3196 = vmatpush.bf16.msra.mxu0 %v3088
      %3197 = vmatpush.bf16.msra.mxu0 %v3079
      %3198 = vmatmul.bf16.gmra.mxu0 %v3122
      %v3199 = vpop.f32.mrf.mxu0
      %v3200 = vadd.f32 %v3004, %v3199
      %v3201 = vpop.f32.mrf.mxu0
      %3202 = vdwg.mxu0
      %3203 = vmatpush.bf16.msra.mxu0 0
      %3204 = vmatpush.bf16.msra.mxu0 0
      %3205 = vmatpush.bf16.msra.mxu0 0
      %3206 = vmatpush.bf16.msra.mxu0 0
      %3207 = vmatpush.bf16.msra.mxu0 0
      %3208 = vmatpush.bf16.msra.mxu0 %v3137
      %3209 = vmatpush.bf16.msra.mxu0 %v3089
      %3210 = vmatpush.bf16.msra.mxu0 %v3080
      %3211 = vmatmul.bf16.gmra.mxu0 %v3122
      %v3212 = vpop.f32.mrf.mxu0
      %v3213 = vadd.f32 %v3004, %v3212
      %v3214 = vpop.f32.mrf.mxu0
      %3215 = vdwg.mxu0
      %3216 = vmatpush.bf16.msra.mxu0 0
      %3217 = vmatpush.bf16.msra.mxu0 0
      %3218 = vmatpush.bf16.msra.mxu0 0
      %3219 = vmatpush.bf16.msra.mxu0 0
      %3220 = vmatpush.bf16.msra.mxu0 0
      %3221 = vmatpush.bf16.msra.mxu0 %v3140
      %3222 = vmatpush.bf16.msra.mxu0 %v3090
      %3223 = vmatpush.bf16.msra.mxu0 %v3081
      %3224 = vmatmul.bf16.gmra.mxu0 %v3122
      %v3225 = vpop.f32.mrf.mxu0
      %v3226 = vadd.f32 %v3004, %v3225
      %v3227 = vpop.f32.mrf.mxu0
      %3228 = vdwg.mxu0
      %3229 = vmatpush.bf16.msra.mxu0 0
      %3230 = vmatpush.bf16.msra.mxu0 0
      %3231 = vmatpush.bf16.msra.mxu0 0
      %3232 = vmatpush.bf16.msra.mxu0 0
      %3233 = vmatpush.bf16.msra.mxu0 0
      %3234 = vmatpush.bf16.msra.mxu0 %v3143
      %3235 = vmatpush.bf16.msra.mxu0 %v3091
      %3236 = vmatpush.bf16.msra.mxu0 %v3082
      %3237 = vmatmul.bf16.gmra.mxu0 %v3122
      %v3238 = vpop.f32.mrf.mxu0
      %v3239 = vadd.f32 %v3004, %v3238
      %v3240 = vpop.f32.mrf.mxu0
      %3241 = vdwg.mxu0
      %3242 = vmatpush.bf16.msra.mxu0 0
      %3243 = vmatpush.bf16.msra.mxu0 0
      %3244 = vmatpush.bf16.msra.mxu0 0
      %3245 = vmatpush.bf16.msra.mxu0 0
      %3246 = vmatpush.bf16.msra.mxu0 0
      %3247 = vmatpush.bf16.msra.mxu0 %v3146
      %3248 = vmatpush.bf16.msra.mxu0 %v3092
      %3249 = vmatpush.bf16.msra.mxu0 %v3083
      %3250 = vmatmul.bf16.gmra.mxu0 %v3122
      %v3251 = vpop.f32.mrf.mxu0
      %v3252 = vadd.f32 %v3004, %v3251
      %v3253 = vpop.f32.mrf.mxu0
      %3254 = vdwg.mxu0
      %3255 = vmatpush.bf16.msra.mxu0 0
      %3256 = vmatpush.bf16.msra.mxu0 0
      %3257 = vmatpush.bf16.msra.mxu0 0
      %3258 = vmatpush.bf16.msra.mxu0 0
      %3259 = vmatpush.bf16.msra.mxu0 0
      %3260 = vmatpush.bf16.msra.mxu0 %v3149
      %3261 = vmatpush.bf16.msra.mxu0 %v3093
      %3262 = vmatpush.bf16.msra.mxu0 %v3084
      %3263 = vmatmul.bf16.gmra.mxu0 %v3122
      %v3264 = vpop.f32.mrf.mxu0
      %v3265 = vadd.f32 %v3004, %v3264
      %v3266 = vpop.f32.mrf.mxu0
      %3267 = vdwg.mxu0
      %v3268 = vmul.f32 %v3161, %v2441
      %v3269 = vmul.f32 %v3174, %v2442
      %v3270 = vmul.f32 %v3187, %v2443
      %v3271 = vmul.f32 %v3200, %v2444
      %v3272 = vmul.f32 %v3213, %v2445
      %v3273 = vmul.f32 %v3226, %v2446
      %v3274 = vmul.f32 %v3239, %v2447
      %v3275 = vmul.f32 %v3252, %v2448
      %v3276 = vmul.f32 %v3265, %v2449
      %v3277 = vpack.c.bf16 %v3269, %v3268
      %v3278 = vpack.c.bf16 %v3271, %v3270
      %v3279 = vpack.c.bf16 %v3273, %v3272
      %v3280 = vpack.c.bf16 %v3275, %v3274
      %v3281 = vpack.c.bf16 %v3276, %v3276
      %v3287 = vrot.slane %v3277, 2
      %v3288 = vrot.slane %v3278, 4
      %v3289 = vrot.slane %v3278, 6
      %v3290 = vrot.slane %v3279, 2
      %v3291 = vrot.slane %v3280, 4
      %v3292 = vrot.slane %v3280, 6
      %v3293 = vrot.slane %v3281, 2
      %v3296 = vsel %vm446, %v3277, %v3287
      %v3299 = vsel %vm1612, %v3288, %v3289
      %v3300 = vsel %vm1616, %v3296, %v3299
      %v3303 = vsel %vm446, %v3279, %v3290
      %v3306 = vsel %vm1612, %v3291, %v3292
      %v3307 = vsel %vm1616, %v3303, %v3306
      %v3310 = vsel %vm446, %v3281, %v3293
      %3314 = vst [vmem:[#allocation2 + $0x2] sm:$0xff] %v3300
      %3315 = vst [vmem:[#allocation2 + $0xa] sm:$0xff] %v3307
      %3316 = vst.msk [vmem:[#allocation2 + $0x12] sm:$0x3] %vm1633, %v3310
      %v3317 = vld [vmem:[%s4] sm:$0x3]
      %v3318 = vld [vmem:[%s9] sm:$0xf]
      %v3319 = vld [vmem:[%s10] sm:$0xf]
      %v3320 = vld [vmem:[#allocation2] sm:$0xff]
      %v3321 = vld [vmem:[#allocation2 + $0x8] sm:$0xff]
      %v3322 = vld [vmem:[#allocation2 + $0x10] sm:$0xf]
      %3324 = vst [vmem:[#allocation1] ss:$2 sm:$0xff] %v3320
      %s3326 = scalar_lea.vmem [#allocation1], 16
      %3327 = vst [vmem:[%s3326] ss:$2 sm:$0xff] %v3321
      %s3329 = scalar_lea.vmem [#allocation1], 32
      %3330 = vst [vmem:[%s3329] ss:$2 sm:$0xff] %v3322
      %v3331 = vld.sshfl [vmem:[#allocation1] sm:$0xff pattern:$0x75643120]
      %v3333 = vld.sshfl [vmem:[#allocation1 + $0x8] sm:$0xff pattern:$0x75643120]
      %v3335 = vld.sshfl [vmem:[#allocation1 + $0x10] sm:$0xff pattern:$0x75643120]
      %v3337 = vld.sshfl [vmem:[#allocation1 + $0x18] sm:$0xff pattern:$0x75643120]
      %v3339 = vld.sshfl [vmem:[#allocation1 + $0x20] sm:$0xff pattern:$0x75643120]
      %3341 = vrot.lane.b32.xlu0 %v3331, 35
      %v3342 = vpop.permute.xlu0 %3341
      %3343 = vrot.lane.b32.xlu0 %v3333, 35
      %v3344 = vpop.permute.xlu0 %3343
      %3345 = vrot.lane.b32.xlu0 %v3335, 35
      %v3346 = vpop.permute.xlu0 %3345
      %3347 = vrot.lane.b32.xlu0 %v3337, 35
      %v3348 = vpop.permute.xlu0 %3347
      %3349 = vrot.lane.b32.xlu0 %v3339, 35
      %v3350 = vpop.permute.xlu0 %3349
      %v3351 = vrot.slane %v3342, 4
      %v3352 = vrot.slane %v3344, 4
      %v3353 = vrot.slane %v3346, 4
      %v3354 = vrot.slane %v3348, 4
      %v3355 = vrot.slane %v3350, 4
      %v3356 = vsel %vm1674, %v3351, %v3352
      %v3357 = vsel %vm1676, %v3342, %v3356
      %v3358 = vsel %vm1674, %v3352, %v3353
      %v3359 = vsel %vm1676, %v3344, %v3358
      %v3360 = vsel %vm1674, %v3353, %v3354
      %v3361 = vsel %vm1676, %v3346, %v3360
      %v3362 = vsel %vm1674, %v3354, %v3355
      %v3363 = vsel %vm1676, %v3348, %v3362
      %v3364 = vsel %vm1676, %v3350, %v3355
      %3370 = vst [vmem:[#allocation4] sm:$0x33] %v3357
      %3371 = vst [vmem:[#allocation4 + $0x8] sm:$0x33] %v3359
      %3372 = vst [vmem:[#allocation4 + $0x10] sm:$0x33] %v3361
      %3373 = vst [vmem:[#allocation4 + $0x18] sm:$0x33] %v3363
      %3374 = vst.msk [vmem:[#allocation4 + $0x20] sm:$0x3] %vm1633, %v3364
      %v3375 = vld [vmem:[#allocation2] sm:$0xff]
      %v3376 = vld [vmem:[#allocation2 + $0x8] sm:$0xff]
      %v3377 = vld [vmem:[#allocation2 + $0x10] sm:$0xf]
      %s3379 = scalar_lea.vmem [#allocation1], 1
      %3380 = vst [vmem:[%s3379] ss:$2 sm:$0xff] %v3375
      %s3382 = scalar_lea.vmem [#allocation1], 17
      %3383 = vst [vmem:[%s3382] ss:$2 sm:$0xff] %v3376
      %s3385 = scalar_lea.vmem [#allocation1], 33
      %3386 = vst [vmem:[%s3385] ss:$2 sm:$0xff] %v3377
      %v3387 = vld.sshfl [vmem:[#allocation1] sm:$0xff pattern:$0x75643120]
      %v3389 = vld.sshfl [vmem:[#allocation1 + $0x8] sm:$0xff pattern:$0x75643120]
      %v3391 = vld.sshfl [vmem:[#allocation1 + $0x10] sm:$0xff pattern:$0x75643120]
      %v3393 = vld.sshfl [vmem:[#allocation1 + $0x18] sm:$0xff pattern:$0x75643120]
      %v3395 = vld.sshfl [vmem:[#allocation1 + $0x20] sm:$0xff pattern:$0x75643120]
      %3397 = vrot.lane.b32.xlu0 %v3387, 34
      %v3398 = vpop.permute.xlu0 %3397
      %3399 = vrot.lane.b32.xlu0 %v3389, 34
      %v3400 = vpop.permute.xlu0 %3399
      %3401 = vrot.lane.b32.xlu0 %v3391, 34
      %v3402 = vpop.permute.xlu0 %3401
      %3403 = vrot.lane.b32.xlu0 %v3393, 34
      %v3404 = vpop.permute.xlu0 %3403
      %3405 = vrot.lane.b32.xlu0 %v3395, 34
      %v3406 = vpop.permute.xlu0 %3405
      %v3407 = vrot.slane %v3398, 4
      %v3408 = vrot.slane %v3400, 4
      %v3409 = vrot.slane %v3402, 4
      %v3410 = vrot.slane %v3404, 4
      %v3411 = vrot.slane %v3406, 4
      %v3412 = vsel %vm1674, %v3407, %v3408
      %v3413 = vsel %vm1733, %v3398, %v3412
      %v3414 = vsel %vm1674, %v3408, %v3409
      %v3415 = vsel %vm1733, %v3400, %v3414
      %v3416 = vsel %vm1674, %v3409, %v3410
      %v3417 = vsel %vm1733, %v3402, %v3416
      %v3418 = vsel %vm1674, %v3410, %v3411
      %v3419 = vsel %vm1733, %v3404, %v3418
      %v3420 = vsel %vm1733, %v3406, %v3411
      %3426 = vst [vmem:[#allocation4] sm:$0xcc] %v3413
      %3427 = vst [vmem:[#allocation4 + $0x8] sm:$0xcc] %v3415
      %3428 = vst [vmem:[#allocation4 + $0x10] sm:$0xcc] %v3417
      %3429 = vst [vmem:[#allocation4 + $0x18] sm:$0xcc] %v3419
      %3430 = vst.msk [vmem:[#allocation4 + $0x20] sm:$0xc] %vm1751, %v3420
      %v3431 = vld [vmem:[#allocation2] sm:$0xff]
      %v3432 = vld [vmem:[#allocation2 + $0x8] sm:$0xff]
      %v3433 = vld [vmem:[#allocation2 + $0x10] sm:$0xf]
      %3435 = vst [vmem:[#allocation1] ss:$2 sm:$0xff] %v3431
      %s3437 = scalar_lea.vmem [#allocation1], 16
      %3438 = vst [vmem:[%s3437] ss:$2 sm:$0xff] %v3432
      %s3440 = scalar_lea.vmem [#allocation1], 32
      %3441 = vst [vmem:[%s3440] ss:$2 sm:$0xff] %v3433
      %v3442 = vld.sshfl [vmem:[#allocation1] sm:$0xff pattern:$0x75643120]
      %v3444 = vld.sshfl [vmem:[#allocation1 + $0x8] sm:$0xff pattern:$0x75643120]
      %v3446 = vld.sshfl [vmem:[#allocation1 + $0x10] sm:$0xff pattern:$0x75643120]
      %v3448 = vld.sshfl [vmem:[#allocation1 + $0x18] sm:$0xff pattern:$0x75643120]
      %v3450 = vld.sshfl [vmem:[#allocation1 + $0x20] sm:$0xff pattern:$0x75643120]
      %3452 = vrot.lane.b32.xlu0 %v3442, 33
      %v3453 = vpop.permute.xlu0 %3452
      %3454 = vrot.lane.b32.xlu0 %v3444, 33
      %v3455 = vpop.permute.xlu0 %3454
      %3456 = vrot.lane.b32.xlu0 %v3446, 33
      %v3457 = vpop.permute.xlu0 %3456
      %3458 = vrot.lane.b32.xlu0 %v3448, 33
      %v3459 = vpop.permute.xlu0 %3458
      %3460 = vrot.lane.b32.xlu0 %v3450, 33
      %v3461 = vpop.permute.xlu0 %3460
      %v3462 = vrot.slane %v3453, 4
      %v3463 = vrot.slane %v3455, 4
      %v3464 = vrot.slane %v3457, 4
      %v3465 = vrot.slane %v3459, 4
      %v3466 = vrot.slane %v3461, 4
      %v3467 = vsel %vm1674, %v3462, %v3463
      %v3468 = vsel %vm1790, %v3453, %v3467
      %v3469 = vsel %vm1674, %v3463, %v3464
      %v3470 = vsel %vm1790, %v3455, %v3469
      %v3471 = vsel %vm1674, %v3464, %v3465
      %v3472 = vsel %vm1790, %v3457, %v3471
      %v3473 = vsel %vm1674, %v3465, %v3466
      %v3474 = vsel %vm1790, %v3459, %v3473
      %v3475 = vsel %vm1790, %v3461, %v3466
      %3481 = vst [vmem:[#allocation4 + $0x24] sm:$0x33] %v3468
      %3482 = vst [vmem:[#allocation4 + $0x2c] sm:$0x33] %v3470
      %3483 = vst [vmem:[#allocation4 + $0x34] sm:$0x33] %v3472
      %3484 = vst [vmem:[#allocation4 + $0x3c] sm:$0x33] %v3474
      %3485 = vst.msk [vmem:[#allocation4 + $0x44] sm:$0x3] %vm1633, %v3475
      %v3486 = vld [vmem:[#allocation2] sm:$0xff]
      %v3487 = vld [vmem:[#allocation2 + $0x8] sm:$0xff]
      %v3488 = vld [vmem:[#allocation2 + $0x10] sm:$0xf]
      %s3490 = scalar_lea.vmem [#allocation1], 1
      %3491 = vst [vmem:[%s3490] ss:$2 sm:$0xff] %v3486
      %s3493 = scalar_lea.vmem [#allocation1], 17
      %3494 = vst [vmem:[%s3493] ss:$2 sm:$0xff] %v3487
      %s3496 = scalar_lea.vmem [#allocation1], 33
      %3497 = vst [vmem:[%s3496] ss:$2 sm:$0xff] %v3488
      %v3498 = vld.sshfl [vmem:[#allocation1] sm:$0xff pattern:$0x75643120]
      %v3500 = vld.sshfl [vmem:[#allocation1 + $0x8] sm:$0xff pattern:$0x75643120]
      %v3502 = vld.sshfl [vmem:[#allocation1 + $0x10] sm:$0xff pattern:$0x75643120]
      %v3504 = vld.sshfl [vmem:[#allocation1 + $0x18] sm:$0xff pattern:$0x75643120]
      %v3506 = vld.sshfl [vmem:[#allocation1 + $0x20] sm:$0xff pattern:$0x75643120]
      %3508 = vrot.lane.b32.xlu0 %v3498, 1
      %v3509 = vpop.permute.xlu0 %3508
      %3510 = vrot.lane.b32.xlu0 %v3500, 1
      %v3511 = vpop.permute.xlu0 %3510
      %3512 = vrot.lane.b32.xlu0 %v3502, 1
      %v3513 = vpop.permute.xlu0 %3512
      %3514 = vrot.lane.b32.xlu0 %v3504, 1
      %v3515 = vpop.permute.xlu0 %3514
      %3516 = vrot.lane.b32.xlu0 %v3506, 1
      %v3517 = vpop.permute.xlu0 %3516
      %v3518 = vrot.slane %v3509, 4
      %v3519 = vrot.slane %v3511, 4
      %v3520 = vrot.slane %v3513, 4
      %v3521 = vrot.slane %v3515, 4
      %v3522 = vrot.slane %v3517, 4
      %v3523 = vsel %vm1674, %v3518, %v3519
      %v3524 = vsel %vm1847, %v3509, %v3523
      %v3525 = vsel %vm1674, %v3519, %v3520
      %v3526 = vsel %vm1847, %v3511, %v3525
      %v3527 = vsel %vm1674, %v3520, %v3521
      %v3528 = vsel %vm1847, %v3513, %v3527
      %v3529 = vsel %vm1674, %v3521, %v3522
      %v3530 = vsel %vm1847, %v3515, %v3529
      %v3531 = vsel %vm1847, %v3517, %v3522
      %3537 = vst [vmem:[#allocation4 + $0x24] sm:$0xcc] %v3524
      %3538 = vst [vmem:[#allocation4 + $0x2c] sm:$0xcc] %v3526
      %3539 = vst [vmem:[#allocation4 + $0x34] sm:$0xcc] %v3528
      %3540 = vst [vmem:[#allocation4 + $0x3c] sm:$0xcc] %v3530
      %3541 = vst.msk [vmem:[#allocation4 + $0x44] sm:$0xc] %vm1751, %v3531
      %v3542 = vld [vmem:[#allocation2 + $0x2] sm:$0xff]
      %v3543 = vld [vmem:[#allocation2 + $0xa] sm:$0xff]
      %v3544 = vld [vmem:[#allocation2 + $0x12] sm:$0x3]
      %3546 = vst [vmem:[#allocation1] ss:$2 sm:$0xff] %v3542
      %s3548 = scalar_lea.vmem [#allocation1], 16
      %3549 = vst [vmem:[%s3548] ss:$2 sm:$0xff] %v3543
      %s3551 = scalar_lea.vmem [#allocation1], 32
      %3552 = vst [vmem:[%s3551] ss:$2 sm:$0xff] %v3544
      %v3553 = vld.sshfl [vmem:[#allocation1] sm:$0xff pattern:$0x75643120]
      %v3554 = vld.sshfl [vmem:[#allocation1 + $0x8] sm:$0xff pattern:$0x75643120]
      %v3555 = vld.sshfl [vmem:[#allocation1 + $0x10] sm:$0xff pattern:$0x75643120]
      %v3556 = vld.sshfl [vmem:[#allocation1 + $0x18] sm:$0xff pattern:$0x75643120]
      %v3557 = vld.sshfl [vmem:[#allocation1 + $0x20] sm:$0xff pattern:$0x75643120]
      %3563 = vst [vmem:[#allocation4 + $0x48] sm:$0x33] %v3553
      %3564 = vst [vmem:[#allocation4 + $0x50] sm:$0x33] %v3554
      %3565 = vst [vmem:[#allocation4 + $0x58] sm:$0x33] %v3555
      %3566 = vst [vmem:[#allocation4 + $0x60] sm:$0x33] %v3556
      %3567 = vst.msk [vmem:[#allocation4 + $0x68] sm:$0x3] %vm1633, %v3557
      %v3568 = vld [vmem:[#allocation2 + $0x2] sm:$0xff]
      %v3569 = vld [vmem:[#allocation2 + $0xa] sm:$0xff]
      %v3570 = vld [vmem:[#allocation2 + $0x12] sm:$0x3]
      %s3572 = scalar_lea.vmem [#allocation1], 1
      %3573 = vst [vmem:[%s3572] ss:$2 sm:$0xff] %v3568
      %s3575 = scalar_lea.vmem [#allocation1], 17
      %3576 = vst [vmem:[%s3575] ss:$2 sm:$0xff] %v3569
      %s3578 = scalar_lea.vmem [#allocation1], 33
      %3579 = vst [vmem:[%s3578] ss:$2 sm:$0xff] %v3570
      %v3580 = vld.sshfl [vmem:[#allocation1] sm:$0xff pattern:$0x75643120]
      %v3582 = vld.sshfl [vmem:[#allocation1 + $0x8] sm:$0xff pattern:$0x75643120]
      %v3584 = vld.sshfl [vmem:[#allocation1 + $0x10] sm:$0xff pattern:$0x75643120]
      %v3586 = vld.sshfl [vmem:[#allocation1 + $0x18] sm:$0xff pattern:$0x75643120]
      %v3588 = vld.sshfl [vmem:[#allocation1 + $0x20] sm:$0xff pattern:$0x75643120]
      %3590 = vrot.lane.b32.xlu0 %v3580, 127
      %v3591 = vpop.permute.xlu0 %3590
      %3592 = vrot.lane.b32.xlu0 %v3582, 127
      %v3593 = vpop.permute.xlu0 %3592
      %3594 = vrot.lane.b32.xlu0 %v3584, 127
      %v3595 = vpop.permute.xlu0 %3594
      %3596 = vrot.lane.b32.xlu0 %v3586, 127
      %v3597 = vpop.permute.xlu0 %3596
      %3598 = vrot.lane.b32.xlu0 %v3588, 127
      %v3599 = vpop.permute.xlu0 %3598
      %v3600 = vrot.slane %v3591, 4
      %v3601 = vrot.slane %v3593, 4
      %v3602 = vrot.slane %v3595, 4
      %v3603 = vrot.slane %v3597, 4
      %v3604 = vrot.slane %v3599, 4
      %v3605 = vsel %vm1674, %v3600, %v3601
      %v3606 = vsel %vm1930, %v3591, %v3605
      %v3607 = vsel %vm1674, %v3601, %v3602
      %v3608 = vsel %vm1930, %v3593, %v3607
      %v3609 = vsel %vm1674, %v3602, %v3603
      %v3610 = vsel %vm1930, %v3595, %v3609
      %v3611 = vsel %vm1674, %v3603, %v3604
      %v3612 = vsel %vm1930, %v3597, %v3611
      %3618 = vst [vmem:[#allocation4 + $0x48] sm:$0xcc] %v3606
      %3619 = vst [vmem:[#allocation4 + $0x50] sm:$0xcc] %v3608
      %3620 = vst [vmem:[#allocation4 + $0x58] sm:$0xcc] %v3610
      %3621 = vst [vmem:[#allocation4 + $0x60] sm:$0xcc] %v3612
      %3622 = vst.msk [vmem:[#allocation4 + $0x68] sm:$0xc] %vm1751, %v3599
      %v3623 = vld [vmem:[#allocation2 + $0x2] sm:$0xff]
      %v3624 = vld [vmem:[#allocation2 + $0xa] sm:$0xff]
      %v3625 = vld [vmem:[#allocation2 + $0x12] sm:$0x3]
      %3627 = vst [vmem:[#allocation1] ss:$2 sm:$0xff] %v3623
      %s3629 = scalar_lea.vmem [#allocation1], 16
      %3630 = vst [vmem:[%s3629] ss:$2 sm:$0xff] %v3624
      %s3632 = scalar_lea.vmem [#allocation1], 32
      %3633 = vst [vmem:[%s3632] ss:$2 sm:$0xff] %v3625
      %v3634 = vld.sshfl [vmem:[#allocation1] sm:$0xff pattern:$0x75643120]
      %v3636 = vld.sshfl [vmem:[#allocation1 + $0x8] sm:$0xff pattern:$0x75643120]
      %v3638 = vld.sshfl [vmem:[#allocation1 + $0x10] sm:$0xff pattern:$0x75643120]
      %v3640 = vld.sshfl [vmem:[#allocation1 + $0x18] sm:$0xff pattern:$0x75643120]
      %v3642 = vld.sshfl [vmem:[#allocation1 + $0x20] sm:$0xff pattern:$0x75643120]
      %3644 = vrot.lane.b32.xlu0 %v3634, 95
      %v3645 = vpop.permute.xlu0 %3644
      %3646 = vrot.lane.b32.xlu0 %v3636, 95
      %v3647 = vpop.permute.xlu0 %3646
      %3648 = vrot.lane.b32.xlu0 %v3638, 95
      %v3649 = vpop.permute.xlu0 %3648
      %3650 = vrot.lane.b32.xlu0 %v3640, 95
      %v3651 = vpop.permute.xlu0 %3650
      %3652 = vrot.lane.b32.xlu0 %v3642, 95
      %v3653 = vpop.permute.xlu0 %3652
      %v3654 = vrot.slane %v3645, 4
      %v3655 = vrot.slane %v3647, 4
      %v3656 = vrot.slane %v3649, 4
      %v3657 = vrot.slane %v3651, 4
      %v3658 = vrot.slane %v3653, 4
      %v3659 = vsel %vm1674, %v3654, %v3655
      %v3660 = vsel %vm1985, %v3645, %v3659
      %v3661 = vsel %vm1674, %v3655, %v3656
      %v3662 = vsel %vm1985, %v3647, %v3661
      %v3663 = vsel %vm1674, %v3656, %v3657
      %v3664 = vsel %vm1985, %v3649, %v3663
      %v3665 = vsel %vm1674, %v3657, %v3658
      %v3666 = vsel %vm1985, %v3651, %v3665
      %3672 = vst [vmem:[#allocation4 + $0x6c] sm:$0x33] %v3660
      %3673 = vst [vmem:[#allocation4 + $0x74] sm:$0x33] %v3662
      %3674 = vst [vmem:[#allocation4 + $0x7c] sm:$0x33] %v3664
      %3675 = vst [vmem:[#allocation4 + $0x84] sm:$0x33] %v3666
      %3676 = vst.msk [vmem:[#allocation4 + $0x8c] sm:$0x3] %vm1633, %v3653
      %v3677 = vld [vmem:[#allocation2 + $0x2] sm:$0xff]
      %v3678 = vld [vmem:[#allocation2 + $0xa] sm:$0xff]
      %v3679 = vld [vmem:[#allocation2 + $0x12] sm:$0x3]
      %s3681 = scalar_lea.vmem [#allocation1], 1
      %3682 = vst [vmem:[%s3681] ss:$2 sm:$0xff] %v3677
      %s3684 = scalar_lea.vmem [#allocation1], 17
      %3685 = vst [vmem:[%s3684] ss:$2 sm:$0xff] %v3678
      %s3687 = scalar_lea.vmem [#allocation1], 33
      %3688 = vst [vmem:[%s3687] ss:$2 sm:$0xff] %v3679
      %v3689 = vld.sshfl [vmem:[#allocation1] sm:$0xff pattern:$0x75643120]
      %v3691 = vld.sshfl [vmem:[#allocation1 + $0x8] sm:$0xff pattern:$0x75643120]
      %v3693 = vld.sshfl [vmem:[#allocation1 + $0x10] sm:$0xff pattern:$0x75643120]
      %v3695 = vld.sshfl [vmem:[#allocation1 + $0x18] sm:$0xff pattern:$0x75643120]
      %v3697 = vld.sshfl [vmem:[#allocation1 + $0x20] sm:$0xff pattern:$0x75643120]
      %3699 = vrot.lane.b32.xlu0 %v3689, 94
      %v3700 = vpop.permute.xlu0 %3699
      %3701 = vrot.lane.b32.xlu0 %v3691, 94
      %v3702 = vpop.permute.xlu0 %3701
      %3703 = vrot.lane.b32.xlu0 %v3693, 94
      %v3704 = vpop.permute.xlu0 %3703
      %3705 = vrot.lane.b32.xlu0 %v3695, 94
      %v3706 = vpop.permute.xlu0 %3705
      %3707 = vrot.lane.b32.xlu0 %v3697, 94
      %v3708 = vpop.permute.xlu0 %3707
      %v3709 = vrot.slane %v3700, 4
      %v3710 = vrot.slane %v3702, 4
      %v3711 = vrot.slane %v3704, 4
      %v3712 = vrot.slane %v3706, 4
      %v3713 = vrot.slane %v3708, 4
      %v3714 = vsel %vm1674, %v3709, %v3710
      %v3715 = vsel %vm2041, %v3700, %v3714
      %v3716 = vsel %vm1674, %v3710, %v3711
      %v3717 = vsel %vm2041, %v3702, %v3716
      %v3718 = vsel %vm1674, %v3711, %v3712
      %v3719 = vsel %vm2041, %v3704, %v3718
      %v3720 = vsel %vm1674, %v3712, %v3713
      %v3721 = vsel %vm2041, %v3706, %v3720
      %3727 = vst [vmem:[#allocation4 + $0x6c] sm:$0xcc] %v3715
      %3728 = vst [vmem:[#allocation4 + $0x74] sm:$0xcc] %v3717
      %3729 = vst [vmem:[#allocation4 + $0x7c] sm:$0xcc] %v3719
      %3730 = vst [vmem:[#allocation4 + $0x84] sm:$0xcc] %v3721
      %3731 = vst.msk [vmem:[#allocation4 + $0x8c] sm:$0xc] %vm1751, %v3708
      %v3732 = vld [vmem:[#allocation2 + $0x2] sm:$0xff]
      %v3733 = vld [vmem:[#allocation2 + $0xa] sm:$0xff]
      %v3734 = vld [vmem:[#allocation2 + $0x12] sm:$0x3]
      %3736 = vst [vmem:[#allocation1] ss:$2 sm:$0xff] %v3732
      %s3738 = scalar_lea.vmem [#allocation1], 16
      %3739 = vst [vmem:[%s3738] ss:$2 sm:$0xff] %v3733
      %s3741 = scalar_lea.vmem [#allocation1], 32
      %3742 = vst [vmem:[%s3741] ss:$2 sm:$0xff] %v3734
      %v3743 = vld.sshfl [vmem:[#allocation1] sm:$0xff pattern:$0x75643120]
      %v3745 = vld.sshfl [vmem:[#allocation1 + $0x8] sm:$0xff pattern:$0x75643120]
      %v3747 = vld.sshfl [vmem:[#allocation1 + $0x10] sm:$0xff pattern:$0x75643120]
      %v3749 = vld.sshfl [vmem:[#allocation1 + $0x18] sm:$0xff pattern:$0x75643120]
      %v3751 = vld.sshfl [vmem:[#allocation1 + $0x20] sm:$0xff pattern:$0x75643120]
      %3753 = vrot.lane.b32.xlu0 %v3743, 93
      %v3754 = vpop.permute.xlu0 %3753
      %3755 = vrot.lane.b32.xlu0 %v3745, 93
      %v3756 = vpop.permute.xlu0 %3755
      %3757 = vrot.lane.b32.xlu0 %v3747, 93
      %v3758 = vpop.permute.xlu0 %3757
      %3759 = vrot.lane.b32.xlu0 %v3749, 93
      %v3760 = vpop.permute.xlu0 %3759
      %3761 = vrot.lane.b32.xlu0 %v3751, 93
      %v3762 = vpop.permute.xlu0 %3761
      %v3763 = vrot.slane %v3754, 4
      %v3764 = vrot.slane %v3756, 4
      %v3765 = vrot.slane %v3758, 4
      %v3766 = vrot.slane %v3760, 4
      %v3767 = vrot.slane %v3762, 4
      %v3768 = vsel %vm1674, %v3763, %v3764
      %v3769 = vsel %vm2096, %v3754, %v3768
      %v3770 = vsel %vm1674, %v3764, %v3765
      %v3771 = vsel %vm2096, %v3756, %v3770
      %v3772 = vsel %vm1674, %v3765, %v3766
      %v3773 = vsel %vm2096, %v3758, %v3772
      %v3774 = vsel %vm1674, %v3766, %v3767
      %v3775 = vsel %vm2096, %v3760, %v3774
      %3781 = vst [vmem:[#allocation4 + $0x90] sm:$0x33] %v3769
      %3782 = vst [vmem:[#allocation4 + $0x98] sm:$0x33] %v3771
      %3783 = vst [vmem:[#allocation4 + $0xa0] sm:$0x33] %v3773
      %3784 = vst [vmem:[#allocation4 + $0xa8] sm:$0x33] %v3775
      %3785 = vst.msk [vmem:[#allocation4 + $0xb0] sm:$0x3] %vm1633, %v3762
      %v3786 = vld [vmem:[#allocation4] sm:$0xff]
      %v3787 = vld [vmem:[#allocation4 + $0x8] sm:$0xff]
      %v3788 = vld [vmem:[#allocation4 + $0x10] sm:$0xff]
      %v3789 = vld [vmem:[#allocation4 + $0x18] sm:$0xff]
      %v3790 = vld [vmem:[#allocation4 + $0x20] sm:$0xf]
      %v3791 = vld [vmem:[#allocation4 + $0x24] sm:$0xff]
      %v3792 = vld [vmem:[#allocation4 + $0x2c] sm:$0xff]
      %v3793 = vld [vmem:[#allocation4 + $0x34] sm:$0xff]
      %v3794 = vld [vmem:[#allocation4 + $0x3c] sm:$0xff]
      %v3795 = vld [vmem:[#allocation4 + $0x44] sm:$0xf]
      %v3796 = vld [vmem:[#allocation4 + $0x48] sm:$0xff]
      %v3797 = vld [vmem:[#allocation4 + $0x50] sm:$0xff]
      %v3798 = vld [vmem:[#allocation4 + $0x58] sm:$0xff]
      %v3799 = vld [vmem:[#allocation4 + $0x60] sm:$0xff]
      %v3800 = vld [vmem:[#allocation4 + $0x68] sm:$0xf]
      %v3801 = vld [vmem:[#allocation4 + $0x6c] sm:$0xff]
      %v3802 = vld [vmem:[#allocation4 + $0x74] sm:$0xff]
      %v3803 = vld [vmem:[#allocation4 + $0x7c] sm:$0xff]
      %v3804 = vld [vmem:[#allocation4 + $0x84] sm:$0xff]
      %v3805 = vld [vmem:[#allocation4 + $0x8c] sm:$0xf]
      %v3806 = vld [vmem:[#allocation4 + $0x90] sm:$0x33]
      %v3807 = vld [vmem:[#allocation4 + $0x98] sm:$0x33]
      %v3808 = vld [vmem:[#allocation4 + $0xa0] sm:$0x33]
      %v3809 = vld [vmem:[#allocation4 + $0xa8] sm:$0x33]
      %v3810 = vld [vmem:[#allocation4 + $0xb0] sm:$0x3]
      %v3836 = vunpack.c.l.b16 %v3786
      %v3837 = vunpack.c.h.b16 %v3786
      %v3838 = vunpack.c.l.b16 %v3787
      %v3839 = vunpack.c.h.b16 %v3787
      %v3840 = vunpack.c.l.b16 %v3788
      %v3841 = vunpack.c.h.b16 %v3788
      %v3842 = vunpack.c.l.b16 %v3789
      %v3843 = vunpack.c.h.b16 %v3789
      %v3844 = vunpack.c.l.b16 %v3790
      %v3845 = vunpack.c.l.b16 %v3791
      %v3846 = vunpack.c.h.b16 %v3791
      %v3847 = vunpack.c.l.b16 %v3792
      %v3848 = vunpack.c.h.b16 %v3792
      %v3849 = vunpack.c.l.b16 %v3793
      %v3850 = vunpack.c.h.b16 %v3793
      %v3851 = vunpack.c.l.b16 %v3794
      %v3852 = vunpack.c.h.b16 %v3794
      %v3853 = vunpack.c.l.b16 %v3795
      %v3854 = vunpack.c.l.b16 %v3796
      %v3855 = vunpack.c.h.b16 %v3796
      %v3856 = vunpack.c.l.b16 %v3797
      %v3857 = vunpack.c.h.b16 %v3797
      %v3858 = vunpack.c.l.b16 %v3798
      %v3859 = vunpack.c.h.b16 %v3798
      %v3860 = vunpack.c.l.b16 %v3799
      %v3861 = vunpack.c.h.b16 %v3799
      %v3862 = vunpack.c.l.b16 %v3800
      %v3863 = vunpack.c.l.b16 %v3801
      %v3864 = vunpack.c.h.b16 %v3801
      %v3865 = vunpack.c.l.b16 %v3802
      %v3866 = vunpack.c.h.b16 %v3802
      %v3867 = vunpack.c.l.b16 %v3803
      %v3868 = vunpack.c.h.b16 %v3803
      %v3869 = vunpack.c.l.b16 %v3804
      %v3870 = vunpack.c.h.b16 %v3804
      %v3871 = vunpack.c.l.b16 %v3805
      %v3872 = vunpack.c.l.b16 %v3806
      %v3873 = vunpack.c.h.b16 %v3806
      %v3874 = vunpack.c.l.b16 %v3807
      %v3875 = vunpack.c.h.b16 %v3807
      %v3876 = vunpack.c.l.b16 %v3808
      %v3877 = vunpack.c.h.b16 %v3808
      %v3878 = vunpack.c.l.b16 %v3809
      %v3879 = vunpack.c.h.b16 %v3809
      %v3880 = vunpack.c.l.b16 %v3810
      %v3881 = vpack.c.b16 %v3845, %v3836
      %v3882 = vpack.c.b16 %v3846, %v3837
      %v3883 = vpack.c.b16 %v3847, %v3838
      %v3884 = vpack.c.b16 %v3848, %v3839
      %v3885 = vpack.c.b16 %v3849, %v3840
      %v3886 = vpack.c.b16 %v3850, %v3841
      %v3887 = vpack.c.b16 %v3851, %v3842
      %v3888 = vpack.c.b16 %v3852, %v3843
      %v3889 = vpack.c.b16 %v3853, %v3844
      %v3890 = vpack.c.b16 %v3863, %v3854
      %v3891 = vpack.c.b16 %v3864, %v3855
      %v3892 = vpack.c.b16 %v3865, %v3856
      %v3893 = vpack.c.b16 %v3866, %v3857
      %v3894 = vpack.c.b16 %v3867, %v3858
      %v3895 = vpack.c.b16 %v3868, %v3859
      %v3896 = vpack.c.b16 %v3869, %v3860
      %v3897 = vpack.c.b16 %v3870, %v3861
      %v3898 = vpack.c.b16 %v3871, %v3862
      %v3899 = vpack.c.b16 %v3872, %v3872
      %v3900 = vpack.c.b16 %v3873, %v3873
      %v3901 = vpack.c.b16 %v3874, %v3874
      %v3902 = vpack.c.b16 %v3875, %v3875
      %v3903 = vpack.c.b16 %v3876, %v3876
      %v3904 = vpack.c.b16 %v3877, %v3877
      %v3905 = vpack.c.b16 %v3878, %v3878
      %v3906 = vpack.c.b16 %v3879, %v3879
      %v3907 = vpack.c.b16 %v3880, %v3880
      %v3927 = vsel %vm2254, %v3317, 0
      %v3930 = vsel %vm446, %v3899, 0
      %v3933 = vsel %vm446, %v3900, 0
      %v3936 = vsel %vm446, %v3901, 0
      %v3939 = vsel %vm446, %v3902, 0
      %v3942 = vsel %vm446, %v3903, 0
      %v3945 = vsel %vm446, %v3904, 0
      %v3948 = vsel %vm446, %v3905, 0
      %v3951 = vsel %vm446, %v3906, 0
      %v3954 = vsel %vm446, %v3907, 0
      %3956 = vmatpush.bf16.msra.mxu0 0
      %3957 = vmatpush.bf16.msra.mxu0 0
      %3958 = vmatpush.bf16.msra.mxu0 0
      %3959 = vmatpush.bf16.msra.mxu0 0
      %3960 = vmatpush.bf16.msra.mxu0 0
      %3961 = vmatpush.bf16.msra.mxu0 %v3930
      %3962 = vmatpush.bf16.msra.mxu0 %v3890
      %3963 = vmatpush.bf16.msra.mxu0 %v3881
      %3964 = vmatmul.bf16.gmra.mxu0 %v3927
      %v3965 = vpop.f32.mrf.mxu0
      %v3966 = vadd.f32 0.0, %v3965
      %v3967 = vpop.f32.mrf.mxu0
      %3968 = vdwg.mxu0
      %3969 = vmatpush.bf16.msra.mxu0 0
      %3970 = vmatpush.bf16.msra.mxu0 0
      %3971 = vmatpush.bf16.msra.mxu0 0
      %3972 = vmatpush.bf16.msra.mxu0 0
      %3973 = vmatpush.bf16.msra.mxu0 0
      %3974 = vmatpush.bf16.msra.mxu0 %v3933
      %3975 = vmatpush.bf16.msra.mxu0 %v3891
      %3976 = vmatpush.bf16.msra.mxu0 %v3882
      %3977 = vmatmul.bf16.gmra.mxu0 %v3927
      %v3978 = vpop.f32.mrf.mxu0
      %v3979 = vadd.f32 0.0, %v3978
      %v3980 = vpop.f32.mrf.mxu0
      %3981 = vdwg.mxu0
      %3982 = vmatpush.bf16.msra.mxu0 0
      %3983 = vmatpush.bf16.msra.mxu0 0
      %3984 = vmatpush.bf16.msra.mxu0 0
      %3985 = vmatpush.bf16.msra.mxu0 0
      %3986 = vmatpush.bf16.msra.mxu0 0
      %3987 = vmatpush.bf16.msra.mxu0 %v3936
      %3988 = vmatpush.bf16.msra.mxu0 %v3892
      %3989 = vmatpush.bf16.msra.mxu0 %v3883
      %3990 = vmatmul.bf16.gmra.mxu0 %v3927
      %v3991 = vpop.f32.mrf.mxu0
      %v3992 = vadd.f32 0.0, %v3991
      %v3993 = vpop.f32.mrf.mxu0
      %3994 = vdwg.mxu0
      %3995 = vmatpush.bf16.msra.mxu0 0
      %3996 = vmatpush.bf16.msra.mxu0 0
      %3997 = vmatpush.bf16.msra.mxu0 0
      %3998 = vmatpush.bf16.msra.mxu0 0
      %3999 = vmatpush.bf16.msra.mxu0 0
      %4000 = vmatpush.bf16.msra.mxu0 %v3939
      %4001 = vmatpush.bf16.msra.mxu0 %v3893
      %4002 = vmatpush.bf16.msra.mxu0 %v3884
      %4003 = vmatmul.bf16.gmra.mxu0 %v3927
      %v4004 = vpop.f32.mrf.mxu0
      %v4005 = vadd.f32 0.0, %v4004
      %v4006 = vpop.f32.mrf.mxu0
      %4007 = vdwg.mxu0
      %4008 = vmatpush.bf16.msra.mxu0 0
      %4009 = vmatpush.bf16.msra.mxu0 0
      %4010 = vmatpush.bf16.msra.mxu0 0
      %4011 = vmatpush.bf16.msra.mxu0 0
      %4012 = vmatpush.bf16.msra.mxu0 0
      %4013 = vmatpush.bf16.msra.mxu0 %v3942
      %4014 = vmatpush.bf16.msra.mxu0 %v3894
      %4015 = vmatpush.bf16.msra.mxu0 %v3885
      %4016 = vmatmul.bf16.gmra.mxu0 %v3927
      %v4017 = vpop.f32.mrf.mxu0
      %v4018 = vadd.f32 0.0, %v4017
      %v4019 = vpop.f32.mrf.mxu0
      %4020 = vdwg.mxu0
      %4021 = vmatpush.bf16.msra.mxu0 0
      %4022 = vmatpush.bf16.msra.mxu0 0
      %4023 = vmatpush.bf16.msra.mxu0 0
      %4024 = vmatpush.bf16.msra.mxu0 0
      %4025 = vmatpush.bf16.msra.mxu0 0
      %4026 = vmatpush.bf16.msra.mxu0 %v3945
      %4027 = vmatpush.bf16.msra.mxu0 %v3895
      %4028 = vmatpush.bf16.msra.mxu0 %v3886
      %4029 = vmatmul.bf16.gmra.mxu0 %v3927
      %v4030 = vpop.f32.mrf.mxu0
      %v4031 = vadd.f32 0.0, %v4030
      %v4032 = vpop.f32.mrf.mxu0
      %4033 = vdwg.mxu0
      %4034 = vmatpush.bf16.msra.mxu0 0
      %4035 = vmatpush.bf16.msra.mxu0 0
      %4036 = vmatpush.bf16.msra.mxu0 0
      %4037 = vmatpush.bf16.msra.mxu0 0
      %4038 = vmatpush.bf16.msra.mxu0 0
      %4039 = vmatpush.bf16.msra.mxu0 %v3948
      %4040 = vmatpush.bf16.msra.mxu0 %v3896
      %4041 = vmatpush.bf16.msra.mxu0 %v3887
      %4042 = vmatmul.bf16.gmra.mxu0 %v3927
      %v4043 = vpop.f32.mrf.mxu0
      %v4044 = vadd.f32 0.0, %v4043
      %v4045 = vpop.f32.mrf.mxu0
      %4046 = vdwg.mxu0
      %4047 = vmatpush.bf16.msra.mxu0 0
      %4048 = vmatpush.bf16.msra.mxu0 0
      %4049 = vmatpush.bf16.msra.mxu0 0
      %4050 = vmatpush.bf16.msra.mxu0 0
      %4051 = vmatpush.bf16.msra.mxu0 0
      %4052 = vmatpush.bf16.msra.mxu0 %v3951
      %4053 = vmatpush.bf16.msra.mxu0 %v3897
      %4054 = vmatpush.bf16.msra.mxu0 %v3888
      %4055 = vmatmul.bf16.gmra.mxu0 %v3927
      %v4056 = vpop.f32.mrf.mxu0
      %v4057 = vadd.f32 0.0, %v4056
      %v4058 = vpop.f32.mrf.mxu0
      %4059 = vdwg.mxu0
      %4060 = vmatpush.bf16.msra.mxu0 0
      %4061 = vmatpush.bf16.msra.mxu0 0
      %4062 = vmatpush.bf16.msra.mxu0 0
      %4063 = vmatpush.bf16.msra.mxu0 0
      %4064 = vmatpush.bf16.msra.mxu0 0
      %4065 = vmatpush.bf16.msra.mxu0 %v3954
      %4066 = vmatpush.bf16.msra.mxu0 %v3898
      %4067 = vmatpush.bf16.msra.mxu0 %v3889
      %4068 = vmatmul.bf16.gmra.mxu0 %v3927
      %v4069 = vpop.f32.mrf.mxu0
      %v4070 = vadd.f32 0.0, %v4069
      %v4071 = vpop.f32.mrf.mxu0
      %4072 = vdwg.mxu0
      %4074 = vset.pattern.permute.xlu0 0
      %4075 = vperm.xlu0 %4074, %v3318
      %v4076 = vpop.permute.xlu0 %4075
      %v4078 = vmul.f32 %v3966, %v4076
      %v4079 = vmul.f32 %v3979, %v4076
      %v4080 = vmul.f32 %v3992, %v4076
      %v4081 = vmul.f32 %v4005, %v4076
      %v4082 = vmul.f32 %v4018, %v4076
      %v4083 = vmul.f32 %v4031, %v4076
      %v4084 = vmul.f32 %v4044, %v4076
      %v4085 = vmul.f32 %v4057, %v4076
      %v4086 = vmul.f32 %v4070, %v4076
      %4088 = vset.pattern.permute.xlu0 0
      %4089 = vperm.xlu0 %4088, %v3319
      %v4090 = vpop.permute.xlu0 %4089
      %v4092 = vadd.f32 %v4078, %v4090
      %v4093 = vadd.f32 %v4079, %v4090
      %v4094 = vadd.f32 %v4080, %v4090
      %v4095 = vadd.f32 %v4081, %v4090
      %v4096 = vadd.f32 %v4082, %v4090
      %v4097 = vadd.f32 %v4083, %v4090
      %v4098 = vadd.f32 %v4084, %v4090
      %v4099 = vadd.f32 %v4085, %v4090
      %v4100 = vadd.f32 %v4086, %v4090
      %v4101 = vmax.f32 %v4092, 0.0
      %v4102 = vmax.f32 %v4093, 0.0
      %v4103 = vmax.f32 %v4094, 0.0
      %v4104 = vmax.f32 %v4095, 0.0
      %v4105 = vmax.f32 %v4096, 0.0
      %v4106 = vmax.f32 %v4097, 0.0
      %v4107 = vmax.f32 %v4098, 0.0
      %v4108 = vmax.f32 %v4099, 0.0
      %v4109 = vmax.f32 %v4100, 0.0
      %v4110 = vmul.f32 %v4101, %v2441
      %v4111 = vmul.f32 %v4102, %v2442
      %v4112 = vmul.f32 %v4103, %v2443
      %v4113 = vmul.f32 %v4104, %v2444
      %v4114 = vmul.f32 %v4105, %v2445
      %v4115 = vmul.f32 %v4106, %v2446
      %v4116 = vmul.f32 %v4107, %v2447
      %v4117 = vmul.f32 %v4108, %v2448
      %v4118 = vmul.f32 %v4109, %v2449
      %v4119 = vpack.c.bf16 %v4111, %v4110
      %v4120 = vpack.c.bf16 %v4113, %v4112
      %v4121 = vpack.c.bf16 %v4115, %v4114
      %v4122 = vpack.c.bf16 %v4117, %v4116
      %v4123 = vpack.c.bf16 %v4118, %v4118
      %v4129 = vrot.slane %v4119, 2
      %v4130 = vrot.slane %v4120, 4
      %v4131 = vrot.slane %v4120, 6
      %v4132 = vrot.slane %v4121, 2
      %v4133 = vrot.slane %v4122, 4
      %v4134 = vrot.slane %v4122, 6
      %v4135 = vrot.slane %v4123, 2
      %v4138 = vsel %vm446, %v4119, %v4129
      %v4141 = vsel %vm1612, %v4130, %v4131
      %v4142 = vsel %vm1616, %v4138, %v4141
      %v4145 = vsel %vm446, %v4121, %v4132
      %v4148 = vsel %vm1612, %v4133, %v4134
      %v4149 = vsel %vm1616, %v4145, %v4148
      %v4152 = vsel %vm446, %v4123, %v4135
      %4156 = vst [vmem:[#allocation3 + $0x2] sm:$0xff] %v4142
      %4157 = vst [vmem:[#allocation3 + $0xa] sm:$0xff] %v4149
      %4158 = vst.msk [vmem:[#allocation3 + $0x12] sm:$0x3] %vm1633, %v4152
      %v4159 = vld [vmem:[%s5] sm:$0xf]
      %v4160 = vld [vmem:[%s11] sm:$0xff]
      %v4161 = vld [vmem:[%s12] sm:$0xff]
      %v4162 = vld [vmem:[#allocation3] sm:$0xff]
      %v4163 = vld [vmem:[#allocation3 + $0x8] sm:$0xff]
      %v4164 = vld [vmem:[#allocation3 + $0x10] sm:$0xf]
      %4166 = vst [vmem:[#allocation1] ss:$2 sm:$0xff] %v4162
      %s4168 = scalar_lea.vmem [#allocation1], 16
      %4169 = vst [vmem:[%s4168] ss:$2 sm:$0xff] %v4163
      %s4171 = scalar_lea.vmem [#allocation1], 32
      %4172 = vst [vmem:[%s4171] ss:$2 sm:$0xff] %v4164
      %v4173 = vld.sshfl [vmem:[#allocation1] sm:$0xff pattern:$0x75643120]
      %v4175 = vld.sshfl [vmem:[#allocation1 + $0x8] sm:$0xff pattern:$0x75643120]
      %v4177 = vld.sshfl [vmem:[#allocation1 + $0x10] sm:$0xff pattern:$0x75643120]
      %v4179 = vld.sshfl [vmem:[#allocation1 + $0x18] sm:$0xff pattern:$0x75643120]
      %v4181 = vld.sshfl [vmem:[#allocation1 + $0x20] sm:$0xff pattern:$0x75643120]
      %4183 = vrot.lane.b32.xlu0 %v4173, 35
      %v4184 = vpop.permute.xlu0 %4183
      %4185 = vrot.lane.b32.xlu0 %v4175, 35
      %v4186 = vpop.permute.xlu0 %4185
      %4187 = vrot.lane.b32.xlu0 %v4177, 35
      %v4188 = vpop.permute.xlu0 %4187
      %4189 = vrot.lane.b32.xlu0 %v4179, 35
      %v4190 = vpop.permute.xlu0 %4189
      %4191 = vrot.lane.b32.xlu0 %v4181, 35
      %v4192 = vpop.permute.xlu0 %4191
      %v4193 = vrot.slane %v4184, 4
      %v4194 = vrot.slane %v4186, 4
      %v4195 = vrot.slane %v4188, 4
      %v4196 = vrot.slane %v4190, 4
      %v4197 = vrot.slane %v4192, 4
      %v4198 = vsel %vm1674, %v4193, %v4194
      %v4199 = vsel %vm1676, %v4184, %v4198
      %v4200 = vsel %vm1674, %v4194, %v4195
      %v4201 = vsel %vm1676, %v4186, %v4200
      %v4202 = vsel %vm1674, %v4195, %v4196
      %v4203 = vsel %vm1676, %v4188, %v4202
      %v4204 = vsel %vm1674, %v4196, %v4197
      %v4205 = vsel %vm1676, %v4190, %v4204
      %v4206 = vsel %vm1676, %v4192, %v4197
      %4212 = vst [vmem:[#allocation4] sm:$0x33] %v4199
      %4213 = vst [vmem:[#allocation4 + $0x8] sm:$0x33] %v4201
      %4214 = vst [vmem:[#allocation4 + $0x10] sm:$0x33] %v4203
      %4215 = vst [vmem:[#allocation4 + $0x18] sm:$0x33] %v4205
      %4216 = vst.msk [vmem:[#allocation4 + $0x20] sm:$0x3] %vm1633, %v4206
      %v4217 = vld [vmem:[#allocation3] sm:$0xff]
      %v4218 = vld [vmem:[#allocation3 + $0x8] sm:$0xff]
      %v4219 = vld [vmem:[#allocation3 + $0x10] sm:$0xf]
      %s4221 = scalar_lea.vmem [#allocation1], 1
      %4222 = vst [vmem:[%s4221] ss:$2 sm:$0xff] %v4217
      %s4224 = scalar_lea.vmem [#allocation1], 17
      %4225 = vst [vmem:[%s4224] ss:$2 sm:$0xff] %v4218
      %s4227 = scalar_lea.vmem [#allocation1], 33
      %4228 = vst [vmem:[%s4227] ss:$2 sm:$0xff] %v4219
      %v4229 = vld.sshfl [vmem:[#allocation1] sm:$0xff pattern:$0x75643120]
      %v4231 = vld.sshfl [vmem:[#allocation1 + $0x8] sm:$0xff pattern:$0x75643120]
      %v4233 = vld.sshfl [vmem:[#allocation1 + $0x10] sm:$0xff pattern:$0x75643120]
      %v4235 = vld.sshfl [vmem:[#allocation1 + $0x18] sm:$0xff pattern:$0x75643120]
      %v4237 = vld.sshfl [vmem:[#allocation1 + $0x20] sm:$0xff pattern:$0x75643120]
      %4239 = vrot.lane.b32.xlu0 %v4229, 34
      %v4240 = vpop.permute.xlu0 %4239
      %4241 = vrot.lane.b32.xlu0 %v4231, 34
      %v4242 = vpop.permute.xlu0 %4241
      %4243 = vrot.lane.b32.xlu0 %v4233, 34
      %v4244 = vpop.permute.xlu0 %4243
      %4245 = vrot.lane.b32.xlu0 %v4235, 34
      %v4246 = vpop.permute.xlu0 %4245
      %4247 = vrot.lane.b32.xlu0 %v4237, 34
      %v4248 = vpop.permute.xlu0 %4247
      %v4249 = vrot.slane %v4240, 4
      %v4250 = vrot.slane %v4242, 4
      %v4251 = vrot.slane %v4244, 4
      %v4252 = vrot.slane %v4246, 4
      %v4253 = vrot.slane %v4248, 4
      %v4254 = vsel %vm1674, %v4249, %v4250
      %v4255 = vsel %vm1733, %v4240, %v4254
      %v4256 = vsel %vm1674, %v4250, %v4251
      %v4257 = vsel %vm1733, %v4242, %v4256
      %v4258 = vsel %vm1674, %v4251, %v4252
      %v4259 = vsel %vm1733, %v4244, %v4258
      %v4260 = vsel %vm1674, %v4252, %v4253
      %v4261 = vsel %vm1733, %v4246, %v4260
      %v4262 = vsel %vm1733, %v4248, %v4253
      %4268 = vst [vmem:[#allocation4] sm:$0xcc] %v4255
      %4269 = vst [vmem:[#allocation4 + $0x8] sm:$0xcc] %v4257
      %4270 = vst [vmem:[#allocation4 + $0x10] sm:$0xcc] %v4259
      %4271 = vst [vmem:[#allocation4 + $0x18] sm:$0xcc] %v4261
      %4272 = vst.msk [vmem:[#allocation4 + $0x20] sm:$0xc] %vm1751, %v4262
      %v4273 = vld [vmem:[#allocation3] sm:$0xff]
      %v4274 = vld [vmem:[#allocation3 + $0x8] sm:$0xff]
      %v4275 = vld [vmem:[#allocation3 + $0x10] sm:$0xf]
      %4277 = vst [vmem:[#allocation1] ss:$2 sm:$0xff] %v4273
      %s4279 = scalar_lea.vmem [#allocation1], 16
      %4280 = vst [vmem:[%s4279] ss:$2 sm:$0xff] %v4274
      %s4282 = scalar_lea.vmem [#allocation1], 32
      %4283 = vst [vmem:[%s4282] ss:$2 sm:$0xff] %v4275
      %v4284 = vld.sshfl [vmem:[#allocation1] sm:$0xff pattern:$0x75643120]
      %v4286 = vld.sshfl [vmem:[#allocation1 + $0x8] sm:$0xff pattern:$0x75643120]
      %v4288 = vld.sshfl [vmem:[#allocation1 + $0x10] sm:$0xff pattern:$0x75643120]
      %v4290 = vld.sshfl [vmem:[#allocation1 + $0x18] sm:$0xff pattern:$0x75643120]
      %v4292 = vld.sshfl [vmem:[#allocation1 + $0x20] sm:$0xff pattern:$0x75643120]
      %4294 = vrot.lane.b32.xlu0 %v4284, 33
      %v4295 = vpop.permute.xlu0 %4294
      %4296 = vrot.lane.b32.xlu0 %v4286, 33
      %v4297 = vpop.permute.xlu0 %4296
      %4298 = vrot.lane.b32.xlu0 %v4288, 33
      %v4299 = vpop.permute.xlu0 %4298
      %4300 = vrot.lane.b32.xlu0 %v4290, 33
      %v4301 = vpop.permute.xlu0 %4300
      %4302 = vrot.lane.b32.xlu0 %v4292, 33
      %v4303 = vpop.permute.xlu0 %4302
      %v4304 = vrot.slane %v4295, 4
      %v4305 = vrot.slane %v4297, 4
      %v4306 = vrot.slane %v4299, 4
      %v4307 = vrot.slane %v4301, 4
      %v4308 = vrot.slane %v4303, 4
      %v4309 = vsel %vm1674, %v4304, %v4305
      %v4310 = vsel %vm1790, %v4295, %v4309
      %v4311 = vsel %vm1674, %v4305, %v4306
      %v4312 = vsel %vm1790, %v4297, %v4311
      %v4313 = vsel %vm1674, %v4306, %v4307
      %v4314 = vsel %vm1790, %v4299, %v4313
      %v4315 = vsel %vm1674, %v4307, %v4308
      %v4316 = vsel %vm1790, %v4301, %v4315
      %v4317 = vsel %vm1790, %v4303, %v4308
      %4323 = vst [vmem:[#allocation4 + $0x24] sm:$0x33] %v4310
      %4324 = vst [vmem:[#allocation4 + $0x2c] sm:$0x33] %v4312
      %4325 = vst [vmem:[#allocation4 + $0x34] sm:$0x33] %v4314
      %4326 = vst [vmem:[#allocation4 + $0x3c] sm:$0x33] %v4316
      %4327 = vst.msk [vmem:[#allocation4 + $0x44] sm:$0x3] %vm1633, %v4317
      %v4328 = vld [vmem:[#allocation3] sm:$0xff]
      %v4329 = vld [vmem:[#allocation3 + $0x8] sm:$0xff]
      %v4330 = vld [vmem:[#allocation3 + $0x10] sm:$0xf]
      %s4332 = scalar_lea.vmem [#allocation1], 1
      %4333 = vst [vmem:[%s4332] ss:$2 sm:$0xff] %v4328
      %s4335 = scalar_lea.vmem [#allocation1], 17
      %4336 = vst [vmem:[%s4335] ss:$2 sm:$0xff] %v4329
      %s4338 = scalar_lea.vmem [#allocation1], 33
      %4339 = vst [vmem:[%s4338] ss:$2 sm:$0xff] %v4330
      %v4340 = vld.sshfl [vmem:[#allocation1] sm:$0xff pattern:$0x75643120]
      %v4342 = vld.sshfl [vmem:[#allocation1 + $0x8] sm:$0xff pattern:$0x75643120]
      %v4344 = vld.sshfl [vmem:[#allocation1 + $0x10] sm:$0xff pattern:$0x75643120]
      %v4346 = vld.sshfl [vmem:[#allocation1 + $0x18] sm:$0xff pattern:$0x75643120]
      %v4348 = vld.sshfl [vmem:[#allocation1 + $0x20] sm:$0xff pattern:$0x75643120]
      %4350 = vrot.lane.b32.xlu0 %v4340, 1
      %v4351 = vpop.permute.xlu0 %4350
      %4352 = vrot.lane.b32.xlu0 %v4342, 1
      %v4353 = vpop.permute.xlu0 %4352
      %4354 = vrot.lane.b32.xlu0 %v4344, 1
      %v4355 = vpop.permute.xlu0 %4354
      %4356 = vrot.lane.b32.xlu0 %v4346, 1
      %v4357 = vpop.permute.xlu0 %4356
      %4358 = vrot.lane.b32.xlu0 %v4348, 1
      %v4359 = vpop.permute.xlu0 %4358
      %v4360 = vrot.slane %v4351, 4
      %v4361 = vrot.slane %v4353, 4
      %v4362 = vrot.slane %v4355, 4
      %v4363 = vrot.slane %v4357, 4
      %v4364 = vrot.slane %v4359, 4
      %v4365 = vsel %vm1674, %v4360, %v4361
      %v4366 = vsel %vm1847, %v4351, %v4365
      %v4367 = vsel %vm1674, %v4361, %v4362
      %v4368 = vsel %vm1847, %v4353, %v4367
      %v4369 = vsel %vm1674, %v4362, %v4363
      %v4370 = vsel %vm1847, %v4355, %v4369
      %v4371 = vsel %vm1674, %v4363, %v4364
      %v4372 = vsel %vm1847, %v4357, %v4371
      %v4373 = vsel %vm1847, %v4359, %v4364
      %4379 = vst [vmem:[#allocation4 + $0x24] sm:$0xcc] %v4366
      %4380 = vst [vmem:[#allocation4 + $0x2c] sm:$0xcc] %v4368
      %4381 = vst [vmem:[#allocation4 + $0x34] sm:$0xcc] %v4370
      %4382 = vst [vmem:[#allocation4 + $0x3c] sm:$0xcc] %v4372
      %4383 = vst.msk [vmem:[#allocation4 + $0x44] sm:$0xc] %vm1751, %v4373
      %v4384 = vld [vmem:[#allocation3 + $0x2] sm:$0xff]
      %v4385 = vld [vmem:[#allocation3 + $0xa] sm:$0xff]
      %v4386 = vld [vmem:[#allocation3 + $0x12] sm:$0x3]
      %4388 = vst [vmem:[#allocation1] ss:$2 sm:$0xff] %v4384
      %s4390 = scalar_lea.vmem [#allocation1], 16
      %4391 = vst [vmem:[%s4390] ss:$2 sm:$0xff] %v4385
      %s4393 = scalar_lea.vmem [#allocation1], 32
      %4394 = vst [vmem:[%s4393] ss:$2 sm:$0xff] %v4386
      %v4395 = vld.sshfl [vmem:[#allocation1] sm:$0xff pattern:$0x75643120]
      %v4396 = vld.sshfl [vmem:[#allocation1 + $0x8] sm:$0xff pattern:$0x75643120]
      %v4397 = vld.sshfl [vmem:[#allocation1 + $0x10] sm:$0xff pattern:$0x75643120]
      %v4398 = vld.sshfl [vmem:[#allocation1 + $0x18] sm:$0xff pattern:$0x75643120]
      %v4399 = vld.sshfl [vmem:[#allocation1 + $0x20] sm:$0xff pattern:$0x75643120]
      %4405 = vst [vmem:[#allocation4 + $0x48] sm:$0x33] %v4395
      %4406 = vst [vmem:[#allocation4 + $0x50] sm:$0x33] %v4396
      %4407 = vst [vmem:[#allocation4 + $0x58] sm:$0x33] %v4397
      %4408 = vst [vmem:[#allocation4 + $0x60] sm:$0x33] %v4398
      %4409 = vst.msk [vmem:[#allocation4 + $0x68] sm:$0x3] %vm1633, %v4399
      %v4410 = vld [vmem:[#allocation3 + $0x2] sm:$0xff]
      %v4411 = vld [vmem:[#allocation3 + $0xa] sm:$0xff]
      %v4412 = vld [vmem:[#allocation3 + $0x12] sm:$0x3]
      %s4414 = scalar_lea.vmem [#allocation1], 1
      %4415 = vst [vmem:[%s4414] ss:$2 sm:$0xff] %v4410
      %s4417 = scalar_lea.vmem [#allocation1], 17
      %4418 = vst [vmem:[%s4417] ss:$2 sm:$0xff] %v4411
      %s4420 = scalar_lea.vmem [#allocation1], 33
      %4421 = vst [vmem:[%s4420] ss:$2 sm:$0xff] %v4412
      %v4422 = vld.sshfl [vmem:[#allocation1] sm:$0xff pattern:$0x75643120]
      %v4424 = vld.sshfl [vmem:[#allocation1 + $0x8] sm:$0xff pattern:$0x75643120]
      %v4426 = vld.sshfl [vmem:[#allocation1 + $0x10] sm:$0xff pattern:$0x75643120]
      %v4428 = vld.sshfl [vmem:[#allocation1 + $0x18] sm:$0xff pattern:$0x75643120]
      %v4430 = vld.sshfl [vmem:[#allocation1 + $0x20] sm:$0xff pattern:$0x75643120]
      %4432 = vrot.lane.b32.xlu0 %v4422, 127
      %v4433 = vpop.permute.xlu0 %4432
      %4434 = vrot.lane.b32.xlu0 %v4424, 127
      %v4435 = vpop.permute.xlu0 %4434
      %4436 = vrot.lane.b32.xlu0 %v4426, 127
      %v4437 = vpop.permute.xlu0 %4436
      %4438 = vrot.lane.b32.xlu0 %v4428, 127
      %v4439 = vpop.permute.xlu0 %4438
      %4440 = vrot.lane.b32.xlu0 %v4430, 127
      %v4441 = vpop.permute.xlu0 %4440
      %v4442 = vrot.slane %v4433, 4
      %v4443 = vrot.slane %v4435, 4
      %v4444 = vrot.slane %v4437, 4
      %v4445 = vrot.slane %v4439, 4
      %v4446 = vrot.slane %v4441, 4
      %v4447 = vsel %vm1674, %v4442, %v4443
      %v4448 = vsel %vm1930, %v4433, %v4447
      %v4449 = vsel %vm1674, %v4443, %v4444
      %v4450 = vsel %vm1930, %v4435, %v4449
      %v4451 = vsel %vm1674, %v4444, %v4445
      %v4452 = vsel %vm1930, %v4437, %v4451
      %v4453 = vsel %vm1674, %v4445, %v4446
      %v4454 = vsel %vm1930, %v4439, %v4453
      %4460 = vst [vmem:[#allocation4 + $0x48] sm:$0xcc] %v4448
      %4461 = vst [vmem:[#allocation4 + $0x50] sm:$0xcc] %v4450
      %4462 = vst [vmem:[#allocation4 + $0x58] sm:$0xcc] %v4452
      %4463 = vst [vmem:[#allocation4 + $0x60] sm:$0xcc] %v4454
      %4464 = vst.msk [vmem:[#allocation4 + $0x68] sm:$0xc] %vm1751, %v4441
      %v4465 = vld [vmem:[#allocation3 + $0x2] sm:$0xff]
      %v4466 = vld [vmem:[#allocation3 + $0xa] sm:$0xff]
      %v4467 = vld [vmem:[#allocation3 + $0x12] sm:$0x3]
      %4469 = vst [vmem:[#allocation1] ss:$2 sm:$0xff] %v4465
      %s4471 = scalar_lea.vmem [#allocation1], 16
      %4472 = vst [vmem:[%s4471] ss:$2 sm:$0xff] %v4466
      %s4474 = scalar_lea.vmem [#allocation1], 32
      %4475 = vst [vmem:[%s4474] ss:$2 sm:$0xff] %v4467
      %v4476 = vld.sshfl [vmem:[#allocation1] sm:$0xff pattern:$0x75643120]
      %v4478 = vld.sshfl [vmem:[#allocation1 + $0x8] sm:$0xff pattern:$0x75643120]
      %v4480 = vld.sshfl [vmem:[#allocation1 + $0x10] sm:$0xff pattern:$0x75643120]
      %v4482 = vld.sshfl [vmem:[#allocation1 + $0x18] sm:$0xff pattern:$0x75643120]
      %v4484 = vld.sshfl [vmem:[#allocation1 + $0x20] sm:$0xff pattern:$0x75643120]
      %4486 = vrot.lane.b32.xlu0 %v4476, 95
      %v4487 = vpop.permute.xlu0 %4486
      %4488 = vrot.lane.b32.xlu0 %v4478, 95
      %v4489 = vpop.permute.xlu0 %4488
      %4490 = vrot.lane.b32.xlu0 %v4480, 95
      %v4491 = vpop.permute.xlu0 %4490
      %4492 = vrot.lane.b32.xlu0 %v4482, 95
      %v4493 = vpop.permute.xlu0 %4492
      %4494 = vrot.lane.b32.xlu0 %v4484, 95
      %v4495 = vpop.permute.xlu0 %4494
      %v4496 = vrot.slane %v4487, 4
      %v4497 = vrot.slane %v4489, 4
      %v4498 = vrot.slane %v4491, 4
      %v4499 = vrot.slane %v4493, 4
      %v4500 = vrot.slane %v4495, 4
      %v4501 = vsel %vm1674, %v4496, %v4497
      %v4502 = vsel %vm1985, %v4487, %v4501
      %v4503 = vsel %vm1674, %v4497, %v4498
      %v4504 = vsel %vm1985, %v4489, %v4503
      %v4505 = vsel %vm1674, %v4498, %v4499
      %v4506 = vsel %vm1985, %v4491, %v4505
      %v4507 = vsel %vm1674, %v4499, %v4500
      %v4508 = vsel %vm1985, %v4493, %v4507
      %4514 = vst [vmem:[#allocation4 + $0x6c] sm:$0x33] %v4502
      %4515 = vst [vmem:[#allocation4 + $0x74] sm:$0x33] %v4504
      %4516 = vst [vmem:[#allocation4 + $0x7c] sm:$0x33] %v4506
      %4517 = vst [vmem:[#allocation4 + $0x84] sm:$0x33] %v4508
      %4518 = vst.msk [vmem:[#allocation4 + $0x8c] sm:$0x3] %vm1633, %v4495
      %v4519 = vld [vmem:[#allocation3 + $0x2] sm:$0xff]
      %v4520 = vld [vmem:[#allocation3 + $0xa] sm:$0xff]
      %v4521 = vld [vmem:[#allocation3 + $0x12] sm:$0x3]
      %s4523 = scalar_lea.vmem [#allocation1], 1
      %4524 = vst [vmem:[%s4523] ss:$2 sm:$0xff] %v4519
      %s4526 = scalar_lea.vmem [#allocation1], 17
      %4527 = vst [vmem:[%s4526] ss:$2 sm:$0xff] %v4520
      %s4529 = scalar_lea.vmem [#allocation1], 33
      %4530 = vst [vmem:[%s4529] ss:$2 sm:$0xff] %v4521
      %v4531 = vld.sshfl [vmem:[#allocation1] sm:$0xff pattern:$0x75643120]
      %v4533 = vld.sshfl [vmem:[#allocation1 + $0x8] sm:$0xff pattern:$0x75643120]
      %v4535 = vld.sshfl [vmem:[#allocation1 + $0x10] sm:$0xff pattern:$0x75643120]
      %v4537 = vld.sshfl [vmem:[#allocation1 + $0x18] sm:$0xff pattern:$0x75643120]
      %v4539 = vld.sshfl [vmem:[#allocation1 + $0x20] sm:$0xff pattern:$0x75643120]
      %4541 = vrot.lane.b32.xlu0 %v4531, 94
      %v4542 = vpop.permute.xlu0 %4541
      %4543 = vrot.lane.b32.xlu0 %v4533, 94
      %v4544 = vpop.permute.xlu0 %4543
      %4545 = vrot.lane.b32.xlu0 %v4535, 94
      %v4546 = vpop.permute.xlu0 %4545
      %4547 = vrot.lane.b32.xlu0 %v4537, 94
      %v4548 = vpop.permute.xlu0 %4547
      %4549 = vrot.lane.b32.xlu0 %v4539, 94
      %v4550 = vpop.permute.xlu0 %4549
      %v4551 = vrot.slane %v4542, 4
      %v4552 = vrot.slane %v4544, 4
      %v4553 = vrot.slane %v4546, 4
      %v4554 = vrot.slane %v4548, 4
      %v4555 = vrot.slane %v4550, 4
      %v4556 = vsel %vm1674, %v4551, %v4552
      %v4557 = vsel %vm2041, %v4542, %v4556
      %v4558 = vsel %vm1674, %v4552, %v4553
      %v4559 = vsel %vm2041, %v4544, %v4558
      %v4560 = vsel %vm1674, %v4553, %v4554
      %v4561 = vsel %vm2041, %v4546, %v4560
      %v4562 = vsel %vm1674, %v4554, %v4555
      %v4563 = vsel %vm2041, %v4548, %v4562
      %4569 = vst [vmem:[#allocation4 + $0x6c] sm:$0xcc] %v4557
      %4570 = vst [vmem:[#allocation4 + $0x74] sm:$0xcc] %v4559
      %4571 = vst [vmem:[#allocation4 + $0x7c] sm:$0xcc] %v4561
      %4572 = vst [vmem:[#allocation4 + $0x84] sm:$0xcc] %v4563
      %4573 = vst.msk [vmem:[#allocation4 + $0x8c] sm:$0xc] %vm1751, %v4550
      %v4574 = vld [vmem:[#allocation3 + $0x2] sm:$0xff]
      %v4575 = vld [vmem:[#allocation3 + $0xa] sm:$0xff]
      %v4576 = vld [vmem:[#allocation3 + $0x12] sm:$0x3]
      %4578 = vst [vmem:[#allocation1] ss:$2 sm:$0xff] %v4574
      %s4580 = scalar_lea.vmem [#allocation1], 16
      %4581 = vst [vmem:[%s4580] ss:$2 sm:$0xff] %v4575
      %s4583 = scalar_lea.vmem [#allocation1], 32
      %4584 = vst [vmem:[%s4583] ss:$2 sm:$0xff] %v4576
      %v4585 = vld.sshfl [vmem:[#allocation1] sm:$0xff pattern:$0x75643120]
      %v4587 = vld.sshfl [vmem:[#allocation1 + $0x8] sm:$0xff pattern:$0x75643120]
      %v4589 = vld.sshfl [vmem:[#allocation1 + $0x10] sm:$0xff pattern:$0x75643120]
      %v4591 = vld.sshfl [vmem:[#allocation1 + $0x18] sm:$0xff pattern:$0x75643120]
      %v4593 = vld.sshfl [vmem:[#allocation1 + $0x20] sm:$0xff pattern:$0x75643120]
      %4595 = vrot.lane.b32.xlu0 %v4585, 93
      %v4596 = vpop.permute.xlu0 %4595
      %4597 = vrot.lane.b32.xlu0 %v4587, 93
      %v4598 = vpop.permute.xlu0 %4597
      %4599 = vrot.lane.b32.xlu0 %v4589, 93
      %v4600 = vpop.permute.xlu0 %4599
      %4601 = vrot.lane.b32.xlu0 %v4591, 93
      %v4602 = vpop.permute.xlu0 %4601
      %4603 = vrot.lane.b32.xlu0 %v4593, 93
      %v4604 = vpop.permute.xlu0 %4603
      %v4605 = vrot.slane %v4596, 4
      %v4606 = vrot.slane %v4598, 4
      %v4607 = vrot.slane %v4600, 4
      %v4608 = vrot.slane %v4602, 4
      %v4609 = vrot.slane %v4604, 4
      %v4610 = vsel %vm1674, %v4605, %v4606
      %v4611 = vsel %vm2096, %v4596, %v4610
      %v4612 = vsel %vm1674, %v4606, %v4607
      %v4613 = vsel %vm2096, %v4598, %v4612
      %v4614 = vsel %vm1674, %v4607, %v4608
      %v4615 = vsel %vm2096, %v4600, %v4614
      %v4616 = vsel %vm1674, %v4608, %v4609
      %v4617 = vsel %vm2096, %v4602, %v4616
      %4623 = vst [vmem:[#allocation4 + $0x90] sm:$0x33] %v4611
      %4624 = vst [vmem:[#allocation4 + $0x98] sm:$0x33] %v4613
      %4625 = vst [vmem:[#allocation4 + $0xa0] sm:$0x33] %v4615
      %4626 = vst [vmem:[#allocation4 + $0xa8] sm:$0x33] %v4617
      %4627 = vst.msk [vmem:[#allocation4 + $0xb0] sm:$0x3] %vm1633, %v4604
      %v4628 = vld [vmem:[#allocation4] sm:$0xff]
      %v4629 = vld [vmem:[#allocation4 + $0x8] sm:$0xff]
      %v4630 = vld [vmem:[#allocation4 + $0x10] sm:$0xff]
      %v4631 = vld [vmem:[#allocation4 + $0x18] sm:$0xff]
      %v4632 = vld [vmem:[#allocation4 + $0x20] sm:$0xf]
      %v4633 = vld [vmem:[#allocation4 + $0x24] sm:$0xff]
      %v4634 = vld [vmem:[#allocation4 + $0x2c] sm:$0xff]
      %v4635 = vld [vmem:[#allocation4 + $0x34] sm:$0xff]
      %v4636 = vld [vmem:[#allocation4 + $0x3c] sm:$0xff]
      %v4637 = vld [vmem:[#allocation4 + $0x44] sm:$0xf]
      %v4638 = vld [vmem:[#allocation4 + $0x48] sm:$0xff]
      %v4639 = vld [vmem:[#allocation4 + $0x50] sm:$0xff]
      %v4640 = vld [vmem:[#allocation4 + $0x58] sm:$0xff]
      %v4641 = vld [vmem:[#allocation4 + $0x60] sm:$0xff]
      %v4642 = vld [vmem:[#allocation4 + $0x68] sm:$0xf]
      %v4643 = vld [vmem:[#allocation4 + $0x6c] sm:$0xff]
      %v4644 = vld [vmem:[#allocation4 + $0x74] sm:$0xff]
      %v4645 = vld [vmem:[#allocation4 + $0x7c] sm:$0xff]
      %v4646 = vld [vmem:[#allocation4 + $0x84] sm:$0xff]
      %v4647 = vld [vmem:[#allocation4 + $0x8c] sm:$0xf]
      %v4648 = vld [vmem:[#allocation4 + $0x90] sm:$0x33]
      %v4649 = vld [vmem:[#allocation4 + $0x98] sm:$0x33]
      %v4650 = vld [vmem:[#allocation4 + $0xa0] sm:$0x33]
      %v4651 = vld [vmem:[#allocation4 + $0xa8] sm:$0x33]
      %v4652 = vld [vmem:[#allocation4 + $0xb0] sm:$0x3]
      %v4678 = vunpack.c.l.b16 %v4628
      %v4679 = vunpack.c.h.b16 %v4628
      %v4680 = vunpack.c.l.b16 %v4629
      %v4681 = vunpack.c.h.b16 %v4629
      %v4682 = vunpack.c.l.b16 %v4630
      %v4683 = vunpack.c.h.b16 %v4630
      %v4684 = vunpack.c.l.b16 %v4631
      %v4685 = vunpack.c.h.b16 %v4631
      %v4686 = vunpack.c.l.b16 %v4632
      %v4687 = vunpack.c.l.b16 %v4633
      %v4688 = vunpack.c.h.b16 %v4633
      %v4689 = vunpack.c.l.b16 %v4634
      %v4690 = vunpack.c.h.b16 %v4634
      %v4691 = vunpack.c.l.b16 %v4635
      %v4692 = vunpack.c.h.b16 %v4635
      %v4693 = vunpack.c.l.b16 %v4636
      %v4694 = vunpack.c.h.b16 %v4636
      %v4695 = vunpack.c.l.b16 %v4637
      %v4696 = vunpack.c.l.b16 %v4638
      %v4697 = vunpack.c.h.b16 %v4638
      %v4698 = vunpack.c.l.b16 %v4639
      %v4699 = vunpack.c.h.b16 %v4639
      %v4700 = vunpack.c.l.b16 %v4640
      %v4701 = vunpack.c.h.b16 %v4640
      %v4702 = vunpack.c.l.b16 %v4641
      %v4703 = vunpack.c.h.b16 %v4641
      %v4704 = vunpack.c.l.b16 %v4642
      %v4705 = vunpack.c.l.b16 %v4643
      %v4706 = vunpack.c.h.b16 %v4643
      %v4707 = vunpack.c.l.b16 %v4644
      %v4708 = vunpack.c.h.b16 %v4644
      %v4709 = vunpack.c.l.b16 %v4645
      %v4710 = vunpack.c.h.b16 %v4645
      %v4711 = vunpack.c.l.b16 %v4646
      %v4712 = vunpack.c.h.b16 %v4646
      %v4713 = vunpack.c.l.b16 %v4647
      %v4714 = vunpack.c.l.b16 %v4648
      %v4715 = vunpack.c.h.b16 %v4648
      %v4716 = vunpack.c.l.b16 %v4649
      %v4717 = vunpack.c.h.b16 %v4649
      %v4718 = vunpack.c.l.b16 %v4650
      %v4719 = vunpack.c.h.b16 %v4650
      %v4720 = vunpack.c.l.b16 %v4651
      %v4721 = vunpack.c.h.b16 %v4651
      %v4722 = vunpack.c.l.b16 %v4652
      %v4723 = vpack.c.b16 %v4687, %v4678
      %v4724 = vpack.c.b16 %v4688, %v4679
      %v4725 = vpack.c.b16 %v4689, %v4680
      %v4726 = vpack.c.b16 %v4690, %v4681
      %v4727 = vpack.c.b16 %v4691, %v4682
      %v4728 = vpack.c.b16 %v4692, %v4683
      %v4729 = vpack.c.b16 %v4693, %v4684
      %v4730 = vpack.c.b16 %v4694, %v4685
      %v4731 = vpack.c.b16 %v4695, %v4686
      %v4732 = vpack.c.b16 %v4705, %v4696
      %v4733 = vpack.c.b16 %v4706, %v4697
      %v4734 = vpack.c.b16 %v4707, %v4698
      %v4735 = vpack.c.b16 %v4708, %v4699
      %v4736 = vpack.c.b16 %v4709, %v4700
      %v4737 = vpack.c.b16 %v4710, %v4701
      %v4738 = vpack.c.b16 %v4711, %v4702
      %v4739 = vpack.c.b16 %v4712, %v4703
      %v4740 = vpack.c.b16 %v4713, %v4704
      %v4741 = vpack.c.b16 %v4714, %v4714
      %v4742 = vpack.c.b16 %v4715, %v4715
      %v4743 = vpack.c.b16 %v4716, %v4716
      %v4744 = vpack.c.b16 %v4717, %v4717
      %v4745 = vpack.c.b16 %v4718, %v4718
      %v4746 = vpack.c.b16 %v4719, %v4719
      %v4747 = vpack.c.b16 %v4720, %v4720
      %v4748 = vpack.c.b16 %v4721, %v4721
      %v4749 = vpack.c.b16 %v4722, %v4722
      %v4769 = vsel %vm2254, %v4159, 0
      %v4772 = vsel %vm446, %v4741, 0
      %v4775 = vsel %vm446, %v4742, 0
      %v4778 = vsel %vm446, %v4743, 0
      %v4781 = vsel %vm446, %v4744, 0
      %v4784 = vsel %vm446, %v4745, 0
      %v4787 = vsel %vm446, %v4746, 0
      %v4790 = vsel %vm446, %v4747, 0
      %v4793 = vsel %vm446, %v4748, 0
      %v4796 = vsel %vm446, %v4749, 0
      %4798 = vmatpush.bf16.msra.mxu0 0
      %4799 = vmatpush.bf16.msra.mxu0 0
      %4800 = vmatpush.bf16.msra.mxu0 0
      %4801 = vmatpush.bf16.msra.mxu0 0
      %4802 = vmatpush.bf16.msra.mxu0 0
      %4803 = vmatpush.bf16.msra.mxu0 %v4772
      %4804 = vmatpush.bf16.msra.mxu0 %v4732
      %4805 = vmatpush.bf16.msra.mxu0 %v4723
      %4806 = vmatmul.bf16.gmra.mxu0 %v4769
      %v4807 = vpop.f32.mrf.mxu0
      %v4808 = vadd.f32 0.0, %v4807
      %v4809 = vpop.f32.mrf.mxu0
      %4810 = vdwg.mxu0
      %4811 = vmatpush.bf16.msra.mxu0 0
      %4812 = vmatpush.bf16.msra.mxu0 0
      %4813 = vmatpush.bf16.msra.mxu0 0
      %4814 = vmatpush.bf16.msra.mxu0 0
      %4815 = vmatpush.bf16.msra.mxu0 0
      %4816 = vmatpush.bf16.msra.mxu0 %v4775
      %4817 = vmatpush.bf16.msra.mxu0 %v4733
      %4818 = vmatpush.bf16.msra.mxu0 %v4724
      %4819 = vmatmul.bf16.gmra.mxu0 %v4769
      %v4820 = vpop.f32.mrf.mxu0
      %v4821 = vadd.f32 0.0, %v4820
      %v4822 = vpop.f32.mrf.mxu0
      %4823 = vdwg.mxu0
      %4824 = vmatpush.bf16.msra.mxu0 0
      %4825 = vmatpush.bf16.msra.mxu0 0
      %4826 = vmatpush.bf16.msra.mxu0 0
      %4827 = vmatpush.bf16.msra.mxu0 0
      %4828 = vmatpush.bf16.msra.mxu0 0
      %4829 = vmatpush.bf16.msra.mxu0 %v4778
      %4830 = vmatpush.bf16.msra.mxu0 %v4734
      %4831 = vmatpush.bf16.msra.mxu0 %v4725
      %4832 = vmatmul.bf16.gmra.mxu0 %v4769
      %v4833 = vpop.f32.mrf.mxu0
      %v4834 = vadd.f32 0.0, %v4833
      %v4835 = vpop.f32.mrf.mxu0
      %4836 = vdwg.mxu0
      %4837 = vmatpush.bf16.msra.mxu0 0
      %4838 = vmatpush.bf16.msra.mxu0 0
      %4839 = vmatpush.bf16.msra.mxu0 0
      %4840 = vmatpush.bf16.msra.mxu0 0
      %4841 = vmatpush.bf16.msra.mxu0 0
      %4842 = vmatpush.bf16.msra.mxu0 %v4781
      %4843 = vmatpush.bf16.msra.mxu0 %v4735
      %4844 = vmatpush.bf16.msra.mxu0 %v4726
      %4845 = vmatmul.bf16.gmra.mxu0 %v4769
      %v4846 = vpop.f32.mrf.mxu0
      %v4847 = vadd.f32 0.0, %v4846
      %v4848 = vpop.f32.mrf.mxu0
      %4849 = vdwg.mxu0
      %4850 = vmatpush.bf16.msra.mxu0 0
      %4851 = vmatpush.bf16.msra.mxu0 0
      %4852 = vmatpush.bf16.msra.mxu0 0
      %4853 = vmatpush.bf16.msra.mxu0 0
      %4854 = vmatpush.bf16.msra.mxu0 0
      %4855 = vmatpush.bf16.msra.mxu0 %v4784
      %4856 = vmatpush.bf16.msra.mxu0 %v4736
      %4857 = vmatpush.bf16.msra.mxu0 %v4727
      %4858 = vmatmul.bf16.gmra.mxu0 %v4769
      %v4859 = vpop.f32.mrf.mxu0
      %v4860 = vadd.f32 0.0, %v4859
      %v4861 = vpop.f32.mrf.mxu0
      %4862 = vdwg.mxu0
      %4863 = vmatpush.bf16.msra.mxu0 0
      %4864 = vmatpush.bf16.msra.mxu0 0
      %4865 = vmatpush.bf16.msra.mxu0 0
      %4866 = vmatpush.bf16.msra.mxu0 0
      %4867 = vmatpush.bf16.msra.mxu0 0
      %4868 = vmatpush.bf16.msra.mxu0 %v4787
      %4869 = vmatpush.bf16.msra.mxu0 %v4737
      %4870 = vmatpush.bf16.msra.mxu0 %v4728
      %4871 = vmatmul.bf16.gmra.mxu0 %v4769
      %v4872 = vpop.f32.mrf.mxu0
      %v4873 = vadd.f32 0.0, %v4872
      %v4874 = vpop.f32.mrf.mxu0
      %4875 = vdwg.mxu0
      %4876 = vmatpush.bf16.msra.mxu0 0
      %4877 = vmatpush.bf16.msra.mxu0 0
      %4878 = vmatpush.bf16.msra.mxu0 0
      %4879 = vmatpush.bf16.msra.mxu0 0
      %4880 = vmatpush.bf16.msra.mxu0 0
      %4881 = vmatpush.bf16.msra.mxu0 %v4790
      %4882 = vmatpush.bf16.msra.mxu0 %v4738
      %4883 = vmatpush.bf16.msra.mxu0 %v4729
      %4884 = vmatmul.bf16.gmra.mxu0 %v4769
      %v4885 = vpop.f32.mrf.mxu0
      %v4886 = vadd.f32 0.0, %v4885
      %v4887 = vpop.f32.mrf.mxu0
      %4888 = vdwg.mxu0
      %4889 = vmatpush.bf16.msra.mxu0 0
      %4890 = vmatpush.bf16.msra.mxu0 0
      %4891 = vmatpush.bf16.msra.mxu0 0
      %4892 = vmatpush.bf16.msra.mxu0 0
      %4893 = vmatpush.bf16.msra.mxu0 0
      %4894 = vmatpush.bf16.msra.mxu0 %v4793
      %4895 = vmatpush.bf16.msra.mxu0 %v4739
      %4896 = vmatpush.bf16.msra.mxu0 %v4730
      %4897 = vmatmul.bf16.gmra.mxu0 %v4769
      %v4898 = vpop.f32.mrf.mxu0
      %v4899 = vadd.f32 0.0, %v4898
      %v4900 = vpop.f32.mrf.mxu0
      %4901 = vdwg.mxu0
      %4902 = vmatpush.bf16.msra.mxu0 0
      %4903 = vmatpush.bf16.msra.mxu0 0
      %4904 = vmatpush.bf16.msra.mxu0 0
      %4905 = vmatpush.bf16.msra.mxu0 0
      %4906 = vmatpush.bf16.msra.mxu0 0
      %4907 = vmatpush.bf16.msra.mxu0 %v4796
      %4908 = vmatpush.bf16.msra.mxu0 %v4740
      %4909 = vmatpush.bf16.msra.mxu0 %v4731
      %4910 = vmatmul.bf16.gmra.mxu0 %v4769
      %v4911 = vpop.f32.mrf.mxu0
      %v4912 = vadd.f32 0.0, %v4911
      %v4913 = vpop.f32.mrf.mxu0
      %4914 = vdwg.mxu0
      %4916 = vset.pattern.permute.xlu0 0
      %4917 = vperm.xlu0 %4916, %v4160
      %v4918 = vpop.permute.xlu0 %4917
      %v4920 = vmul.f32 %v4808, %v4918
      %v4921 = vmul.f32 %v4821, %v4918
      %v4922 = vmul.f32 %v4834, %v4918
      %v4923 = vmul.f32 %v4847, %v4918
      %v4924 = vmul.f32 %v4860, %v4918
      %v4925 = vmul.f32 %v4873, %v4918
      %v4926 = vmul.f32 %v4886, %v4918
      %v4927 = vmul.f32 %v4899, %v4918
      %v4928 = vmul.f32 %v4912, %v4918
      %4930 = vset.pattern.permute.xlu0 0
      %4931 = vperm.xlu0 %4930, %v4161
      %v4932 = vpop.permute.xlu0 %4931
      %v4934 = vadd.f32 %v4920, %v4932
      %v4935 = vadd.f32 %v4921, %v4932
      %v4936 = vadd.f32 %v4922, %v4932
      %v4937 = vadd.f32 %v4923, %v4932
      %v4938 = vadd.f32 %v4924, %v4932
      %v4939 = vadd.f32 %v4925, %v4932
      %v4940 = vadd.f32 %v4926, %v4932
      %v4941 = vadd.f32 %v4927, %v4932
      %v4942 = vadd.f32 %v4928, %v4932
      %v4943 = vmax.f32 %v4934, 0.0
      %v4944 = vmax.f32 %v4935, 0.0
      %v4945 = vmax.f32 %v4936, 0.0
      %v4946 = vmax.f32 %v4937, 0.0
      %v4947 = vmax.f32 %v4938, 0.0
      %v4948 = vmax.f32 %v4939, 0.0
      %v4949 = vmax.f32 %v4940, 0.0
      %v4950 = vmax.f32 %v4941, 0.0
      %v4951 = vmax.f32 %v4942, 0.0
      %4952 = vst [vmem:[%s440] sm:$0xff] %v4943
      %4953 = vst [vmem:[%s440 + $0x8] sm:$0xff] %v4944
      %4954 = vst [vmem:[%s440 + $0x10] sm:$0xff] %v4945
      %4955 = vst [vmem:[%s440 + $0x18] sm:$0xff] %v4946
      %4956 = vst [vmem:[%s440 + $0x20] sm:$0xff] %v4947
      %4957 = vst [vmem:[%s440 + $0x28] sm:$0xff] %v4948
      %4958 = vst [vmem:[%s440 + $0x30] sm:$0xff] %v4949
      %4959 = vst [vmem:[%s440 + $0x38] sm:$0xff] %v4950
      %vm4960 = vcmask 523264
      %4961 = vst.msk [vmem:[%s440 + $0x40] sm:$0xff] %vm4960, %v4951
      %p4962 = scmp.lt.s32.totalorder %s24, 1
      %s4963 = scalar_select %p4962, %s24, 1
      %s4964 = smul.addr %s4963, 9
      %s4965 = smul.addr %s4964, 8
      %s4966 = scalar_lea.vmem %s13, %s4965
      // Predicated region
      $region73: #{upsample_block_fused.1} parent=71 // pred_check
        %p4967 = pneg %p320
      $region74: #{upsample_block_fused.1} parent=71 // pred_check_branch
        %4969 = sbr.rel (%p4967) target = $region76
      $region75: #{upsample_block_fused.1} parent=71 // pred_region
        _
      $region76: #{upsample_block_fused.1} parent=71 // pred_fallthru
        _
    $region72: #{upsample_block_fused.1} parent=5 // pred_fallthru
      _
    %p4970 = scmp.le.s32.totalorder 2, %s19
    // Predicated region
    $region77: #{upsample_block_fused.1} parent=5 // pred_check
      %p4971 = pneg %p4970
    $region78: #{upsample_block_fused.1} parent=5 // pred_check_branch
      %4973 = sbr.rel (%p4971) target = $region80
    $region79: #{upsample_block_fused.1} parent=5 // pred_region
      %s4974 = ssub.s32 %s19, 2
      // Predicated region
      $region81: #{upsample_block_fused.1} parent=79 // pred_check
        %p4975 = pneg %p326
      $region82: #{upsample_block_fused.1} parent=79 // pred_check_branch
        %4977 = sbr.rel (%p4975) target = $region84
      $region83: #{upsample_block_fused.1} parent=79 // pred_region
        %p4978 = scmp.lt.s32.totalorder %s25, 1
        %s4979 = scalar_select %p4978, %s25, 1
        %s4980 = smul.addr %s4979, 9
        %s4981 = smul.addr %s4980, 8
        %s4982 = scalar_lea.vmem %s13, %s4981
      $region84: #{upsample_block_fused.1} parent=79 // pred_fallthru
        _
    $region80: #{upsample_block_fused.1} parent=5 // pred_fallthru
      _
  $region6: #{upsample_block_fused.1} parent=0 // loop_footer
    %s23 = sadd.s32 1, %s19
  $region7: #{upsample_block_fused.1} parent=0 // loop_footer_branch
    %18 = sbr.rel target = $region3
  $region8: #{upsample_block_fused.1} parent=0 // loop_exit
    _

</llo_original>
